<compile_context>
chip_gen: v7x
topology: tpu7x:2x2x1
jax: 0.10.0
libtpu: 0.0.40
codegen_flags: <defaults>
</compile_context>

<pallas_src>
import numpy as np
import jax
import jax.numpy as jnp
from jax.experimental import pallas as pl
from jax.experimental.pallas import tpu as pltpu


def _residual_block_kernel(x_ref, s1_ref, b1_ref, w1_ref, s2_ref, b2_ref,
                           w2_ref, cb2_ref, o_ref, a_ref, c_ref):
    # x_ref   : VMEM (1, H, W, C)    input slab for this batch element (NHWC)
    # s1/b1   : VMEM (1, C)          folded BN1 scale / bias
    # w1_ref  : VMEM (9, C, C)       3x3 conv weights, tap-major, [ci, co] per tap
    # s2/b2   : VMEM (1, C)          folded BN2 scale / bias (conv1 bias folded in)
    # w2_ref  : VMEM (C, C)          1x1 conv weight, [ci, co]
    # cb2_ref : VMEM (1, C)          conv2 bias
    # o_ref   : VMEM (1, H, W, C)    output slab
    # a_ref   : VMEM (H+2, W, C)     H-padded post-BN1/ReLU activations (rows 0, H+1 = 0)
    # c_ref   : VMEM (H, W+2, C)     W-padded conv1 accumulator (cols 0, W+1 unused)
    _, H, W, C = x_ref.shape
    N = H * W

    x = x_ref[0]                                                    # [H, W, C]

    # BN1 (eval, folded) + ReLU — per-channel scale/bias broadcast along lanes.
    s1 = s1_ref[...].reshape(1, 1, C)
    b1 = b1_ref[...].reshape(1, 1, C)
    # Zero only the two halo rows (scratch persists across grid iterations and
    # each core must see a clean border); interior rows are fully overwritten.
    a_ref[0, :, :] = jnp.zeros((W, C), jnp.float32)
    a_ref[H + 1, :, :] = jnp.zeros((W, C), jnp.float32)
    a_ref[1:H + 1, :, :] = jnp.maximum(x * s1 + b1, 0.0)

    # 3x3 conv, taps grouped by kw:
    #   G_kw[h, w] = sum_kh a_pad[h + kh, w] @ W1[kh, kw]
    # Leading-dim slices a_ref[kh:kh+H] are tile-aligned (no relayout); the
    # reshape to [N, C] is layout-free for W % 8 == 0, so the MXU streams the
    # slab directly.
    def group(kw):
        acc = jnp.zeros((N, C), jnp.float32)
        for kh in range(3):
            patch = a_ref[kh:kh + H, :, :].reshape(N, C)
            acc = acc + jnp.dot(patch, w1_ref[kh * 3 + kw],
                                preferred_element_type=jnp.float32)
        return acc.reshape(H, W, C)

    # Recombine the kw groups with their horizontal shifts via the W-padded
    # accumulator:  conv1[h, w] = G0[h, w-1] + G1[h, w] + G2[h, w+1]
    # (zero outside [0, W)).  Padded column index p = w + 1; G_kw lands at
    # window [2-kw : 2-kw+W].  The center write covers every read column, so
    # no pre-zeroing of the accumulator is needed.
    c_ref[:, 1:W + 1, :] = group(1)          # kw = 1 (dw =  0)
    c_ref[:, 2:W + 2, :] += group(0)         # kw = 0 (dw = -1)
    c_ref[:, 0:W, :] += group(2)             # kw = 2 (dw = +1)
    conv1 = c_ref[:, 1:W + 1, :].reshape(N, C)

    # BN2 (+ folded conv1 bias) + ReLU, lane-dense 2-D form.
    h2 = jnp.maximum(conv1 * s2_ref[...] + b2_ref[...], 0.0)        # [N, C]

    # 1x1 conv + bias, then residual add at the store (no extra temporaries).
    y = jnp.dot(h2, w2_ref[...], preferred_element_type=jnp.float32) + cb2_ref[...]
    o_ref[0] = (y.reshape(H, W, C) + x).astype(o_ref.dtype)


def residual_block_forward(x_nchw, params, eps=1e-5):
    """Eval-mode ResidualBlock forward. x_nchw: [B, C, H, W] (PyTorch layout)."""
    B, C, H, W = x_nchw.shape
    # NHWC so channels sit on the 128-lane axis (lane-dense compute & stores).
    x = jnp.transpose(x_nchw, (0, 2, 3, 1)).astype(jnp.float32)     # [B, H, W, C]

    # Fold BN1/BN2 (eval mode) into per-channel scale/bias; fold conv1 bias into BN2 bias.
    s1 = params["gamma1"] / jnp.sqrt(params["var1"] + eps)
    b1 = params["beta1"] - params["mean1"] * s1
    s2 = params["gamma2"] / jnp.sqrt(params["var2"] + eps)
    b2 = params["beta2"] + (params["bconv1"] - params["mean2"]) * s2

    # PyTorch conv weights are OIHW; kernel wants [tap, ci, co] / [ci, co].
    w1 = jnp.transpose(params["wconv1"], (2, 3, 1, 0)).reshape(9, C, C)
    w2 = jnp.transpose(params["wconv2"][:, :, 0, 0], (1, 0))
    cb2 = params["bconv2"]

    row = lambda v: v.reshape(1, C).astype(jnp.float32)
    const2 = lambda b: (0, 0)

    out = pl.pallas_call(
        _residual_block_kernel,
        out_shape=jax.ShapeDtypeStruct((B, H, W, C), jnp.float32),
        grid_spec=pltpu.PrefetchScalarGridSpec(
            num_scalar_prefetch=0,
            grid=(B,),
            in_specs=[
                pl.BlockSpec((1, H, W, C), lambda b: (b, 0, 0, 0)),   # x
                pl.BlockSpec((1, C), const2),                          # s1
                pl.BlockSpec((1, C), const2),                          # b1
                pl.BlockSpec((9, C, C), lambda b: (0, 0, 0)),          # w1 (3x3)
                pl.BlockSpec((1, C), const2),                          # s2
                pl.BlockSpec((1, C), const2),                          # b2
                pl.BlockSpec((C, C), const2),                          # w2 (1x1)
                pl.BlockSpec((1, C), const2),                          # conv2 bias
            ],
            out_specs=pl.BlockSpec((1, H, W, C), lambda b: (b, 0, 0, 0)),
            scratch_shapes=[
                pltpu.VMEM((H + 2, W, C), jnp.float32),   # H-padded activations
                pltpu.VMEM((H, W + 2, C), jnp.float32),   # W-padded conv1 accumulator
            ],
        ),
        compiler_params=pltpu.CompilerParams(
            dimension_semantics=("parallel",)),
    )(x, row(s1), row(b1), w1.astype(jnp.float32),
      row(s2), row(b2), w2.astype(jnp.float32), row(cb2))

    return jnp.transpose(out, (0, 3, 1, 2))                          # back to NCHW


class ResidualBlockJAX:
    """Mirrors the PyTorch ResidualBlock's forward (eval-mode BatchNorm)."""

    def __init__(self, dim, params):
        self.dim = dim
        self.params = params

    def __call__(self, x_nchw):
        return residual_block_forward(x_nchw, self.params)


def _reference(x, p, eps=1e-5):
    """Pure-JAX NCHW reference matching PyTorch eval-mode semantics."""
    def bn(h, g, b, m, v):
        inv = g / jnp.sqrt(v + eps)
        return (h - m[None, :, None, None]) * inv[None, :, None, None] \
               + b[None, :, None, None]

    h = jax.nn.relu(bn(x, p["gamma1"], p["beta1"], p["mean1"], p["var1"]))
    h = jax.lax.conv_general_dilated(
        h, p["wconv1"], (1, 1), ((1, 1), (1, 1)),
        dimension_numbers=("NCHW", "OIHW", "NCHW"))
    h = h + p["bconv1"][None, :, None, None]
    h = jax.nn.relu(bn(h, p["gamma2"], p["beta2"], p["mean2"], p["var2"]))
    h = jax.lax.conv_general_dilated(
        h, p["wconv2"], (1, 1), ((0, 0), (0, 0)),
        dimension_numbers=("NCHW", "OIHW", "NCHW"))
    h = h + p["bconv2"][None, :, None, None]
    return h + x


if __name__ == "__main__":
    key = jax.random.PRNGKey(0)
    B, C, H, W = 2, 128, 16, 16          # dim=128 keeps the channel axis lane-dense
    ks = jax.random.split(key, 13)

    x = jax.random.normal(ks[0], (B, C, H, W), dtype=jnp.float32)
    params = dict(
        gamma1=1.0 + 0.1 * jax.random.normal(ks[1], (C,), jnp.float32),
        beta1=0.1 * jax.random.normal(ks[2], (C,), jnp.float32),
        mean1=0.1 * jax.random.normal(ks[3], (C,), jnp.float32),
        var1=1.0 + 0.5 * jax.random.uniform(ks[4], (C,), jnp.float32),
        wconv1=0.05 * jax.random.normal(ks[5], (C, C, 3, 3), jnp.float32),
        bconv1=0.05 * jax.random.normal(ks[6], (C,), jnp.float32),
        gamma2=1.0 + 0.1 * jax.random.normal(ks[7], (C,), jnp.float32),
        beta2=0.1 * jax.random.normal(ks[8], (C,), jnp.float32),
        mean2=0.1 * jax.random.normal(ks[9], (C,), jnp.float32),
        var2=1.0 + 0.5 * jax.random.uniform(ks[10], (C,), jnp.float32),
        wconv2=0.05 * jax.random.normal(ks[11], (C, C, 1, 1), jnp.float32),
        bconv2=0.05 * jax.random.normal(ks[12], (C,), jnp.float32),
    )

    block = ResidualBlockJAX(C, params)
    out = block(x)
    out = jax.block_until_ready(out)

    ref = _reference(x, params)
    assert out.shape == x.shape, (out.shape, x.shape)
    np.testing.assert_allclose(np.asarray(out), np.asarray(ref),
                               rtol=1e-4, atol=1e-4)

    print("KERNEL_OK")
</pallas_src>

<mosaic_0001>
module attributes {stable_mosaic.version = 11 : i64} {
  func.func @_residual_block_kernel(%arg0: i32, %arg1: memref<1x16x16x128xf32, #tpu.memory_space<vmem>>, %arg2: memref<1x128xf32, #tpu.memory_space<vmem>>, %arg3: memref<1x128xf32, #tpu.memory_space<vmem>>, %arg4: memref<9x128x128xf32, #tpu.memory_space<vmem>>, %arg5: memref<1x128xf32, #tpu.memory_space<vmem>>, %arg6: memref<1x128xf32, #tpu.memory_space<vmem>>, %arg7: memref<128x128xf32, #tpu.memory_space<vmem>>, %arg8: memref<1x128xf32, #tpu.memory_space<vmem>>, %arg9: memref<1x16x16x128xf32, #tpu.memory_space<vmem>>, %arg10: memref<18x16x128xf32, #tpu.memory_space<vmem>>, %arg11: memref<16x18x128xf32, #tpu.memory_space<vmem>>) attributes {dimension_semantics = [#tpu.dimension_semantics<parallel>], iteration_bounds = array<i64: 2>, scalar_prefetch = 0 : i64, scratch_operands = 2 : i64, tpu.core_type = #tpu.core_type<tc>, window_params = [{transform_indices = @transform_0, window_bounds = array<i64: 1, 16, 16, 128>}, {pipeline_mode = #tpu.pipeline_mode<synchronous>, transform_indices = @transform_1, window_bounds = array<i64: 1, 128>}, {pipeline_mode = #tpu.pipeline_mode<synchronous>, transform_indices = @transform_2, window_bounds = array<i64: 1, 128>}, {pipeline_mode = #tpu.pipeline_mode<synchronous>, transform_indices = @transform_3, window_bounds = array<i64: 9, 128, 128>}, {pipeline_mode = #tpu.pipeline_mode<synchronous>, transform_indices = @transform_4, window_bounds = array<i64: 1, 128>}, {pipeline_mode = #tpu.pipeline_mode<synchronous>, transform_indices = @transform_5, window_bounds = array<i64: 1, 128>}, {pipeline_mode = #tpu.pipeline_mode<synchronous>, transform_indices = @transform_6, window_bounds = array<i64: 128, 128>}, {pipeline_mode = #tpu.pipeline_mode<synchronous>, transform_indices = @transform_7, window_bounds = array<i64: 1, 128>}, {transform_indices = @transform_8, window_bounds = array<i64: 1, 16, 16, 128>}]} {
    %c0 = arith.constant 0 : index
    %c0_0 = arith.constant 0 : index
    %c0_1 = arith.constant 0 : index
    %c0_2 = arith.constant 0 : index
    %0 = vector.load %arg1[%c0, %c0_0, %c0_1, %c0_2] : memref<1x16x16x128xf32, #tpu.memory_space<vmem>>, vector<1x16x16x128xf32>
    %1 = vector.shape_cast %0 : vector<1x16x16x128xf32> to vector<16x16x128xf32>
    %c0_3 = arith.constant 0 : index
    %c0_4 = arith.constant 0 : index
    %2 = vector.load %arg2[%c0_3, %c0_4] : memref<1x128xf32, #tpu.memory_space<vmem>>, vector<1x128xf32>
    %3 = vector.shape_cast %2 : vector<1x128xf32> to vector<1x1x128xf32>
    %c0_5 = arith.constant 0 : index
    %c0_6 = arith.constant 0 : index
    %4 = vector.load %arg3[%c0_5, %c0_6] : memref<1x128xf32, #tpu.memory_space<vmem>>, vector<1x128xf32>
    %5 = vector.shape_cast %4 : vector<1x128xf32> to vector<1x1x128xf32>
    %cst = arith.constant 0.000000e+00 : f32
    %6 = vector.broadcast %cst : f32 to vector<16x128xf32>
    %c0_7 = arith.constant 0 : index
    %c0_8 = arith.constant 0 : index
    %c0_9 = arith.constant 0 : index
    %7 = vector.load %arg10[%c0_7, %c0_8, %c0_9] : memref<18x16x128xf32, #tpu.memory_space<vmem>>, vector<1x16x128xf32>
    %8 = vector.shape_cast %7 : vector<1x16x128xf32> to vector<16x128xf32>
    %9 = vector.shape_cast %6 : vector<16x128xf32> to vector<1x16x128xf32>
    tpu.vector_store %arg10[%c0_7, %c0_8, %c0_9], %9 {strides = array<i32>} : memref<18x16x128xf32, #tpu.memory_space<vmem>>, vector<1x16x128xf32>,
    %cst_10 = arith.constant 0.000000e+00 : f32
    %10 = vector.broadcast %cst_10 : f32 to vector<16x128xf32>
    %c17 = arith.constant 17 : index
    %c0_11 = arith.constant 0 : index
    %c0_12 = arith.constant 0 : index
    %11 = vector.load %arg10[%c17, %c0_11, %c0_12] : memref<18x16x128xf32, #tpu.memory_space<vmem>>, vector<1x16x128xf32>
    %12 = vector.shape_cast %11 : vector<1x16x128xf32> to vector<16x128xf32>
    %13 = vector.shape_cast %10 : vector<16x128xf32> to vector<1x16x128xf32>
    tpu.vector_store %arg10[%c17, %c0_11, %c0_12], %13 {strides = array<i32>} : memref<18x16x128xf32, #tpu.memory_space<vmem>>, vector<1x16x128xf32>,
    %14 = vector.broadcast %3 : vector<1x1x128xf32> to vector<16x16x128xf32>
    %15 = arith.mulf %1, %14 : vector<16x16x128xf32>
    %16 = vector.broadcast %5 : vector<1x1x128xf32> to vector<16x16x128xf32>
    %17 = arith.addf %15, %16 : vector<16x16x128xf32>
    %cst_13 = arith.constant 0.000000e+00 : f32
    %18 = vector.broadcast %cst_13 : f32 to vector<16x16x128xf32>
    %19 = arith.maximumf %17, %18 : vector<16x16x128xf32>
    %c1 = arith.constant 1 : index
    %c0_14 = arith.constant 0 : index
    %c0_15 = arith.constant 0 : index
    %20 = vector.load %arg10[%c1, %c0_14, %c0_15] : memref<18x16x128xf32, #tpu.memory_space<vmem>>, vector<16x16x128xf32>
    tpu.vector_store %arg10[%c1, %c0_14, %c0_15], %19 {strides = array<i32>} : memref<18x16x128xf32, #tpu.memory_space<vmem>>, vector<16x16x128xf32>,
    %cst_16 = arith.constant 0.000000e+00 : f32
    %21 = vector.broadcast %cst_16 : f32 to vector<256x128xf32>
    %c0_17 = arith.constant 0 : index
    %c0_18 = arith.constant 0 : index
    %c0_19 = arith.constant 0 : index
    %22 = vector.load %arg10[%c0_17, %c0_18, %c0_19] : memref<18x16x128xf32, #tpu.memory_space<vmem>>, vector<16x16x128xf32>
    %23 = vector.shape_cast %22 : vector<16x16x128xf32> to vector<256x128xf32>
    %c1_20 = arith.constant 1 : index
    %c0_21 = arith.constant 0 : index
    %c0_22 = arith.constant 0 : index
    %24 = vector.load %arg4[%c1_20, %c0_21, %c0_22] : memref<9x128x128xf32, #tpu.memory_space<vmem>>, vector<1x128x128xf32>
    %25 = vector.shape_cast %24 : vector<1x128x128xf32> to vector<128x128xf32>
    %cst_23 = arith.constant dense<0.000000e+00> : vector<256x128xf32>
    %26 = tpu.matmul %23, %25, %cst_23 {dimension_numbers = #tpu.dot_dimension_numbers<[1], [0], [0], [1], [0, 0, 1, 1], [], []>} : vector<256x128xf32>, vector<128x128xf32>, vector<256x128xf32> -> vector<256x128xf32>
    %27 = arith.addf %21, %26 : vector<256x128xf32>
    %c1_24 = arith.constant 1 : index
    %c0_25 = arith.constant 0 : index
    %c0_26 = arith.constant 0 : index
    %28 = vector.load %arg10[%c1_24, %c0_25, %c0_26] : memref<18x16x128xf32, #tpu.memory_space<vmem>>, vector<16x16x128xf32>
    %29 = vector.shape_cast %28 : vector<16x16x128xf32> to vector<256x128xf32>
    %c4 = arith.constant 4 : index
    %c0_27 = arith.constant 0 : index
    %c0_28 = arith.constant 0 : index
    %30 = vector.load %arg4[%c4, %c0_27, %c0_28] : memref<9x128x128xf32, #tpu.memory_space<vmem>>, vector<1x128x128xf32>
    %31 = vector.shape_cast %30 : vector<1x128x128xf32> to vector<128x128xf32>
    %cst_29 = arith.constant dense<0.000000e+00> : vector<256x128xf32>
    %32 = tpu.matmul %29, %31, %cst_29 {dimension_numbers = #tpu.dot_dimension_numbers<[1], [0], [0], [1], [0, 0, 1, 1], [], []>} : vector<256x128xf32>, vector<128x128xf32>, vector<256x128xf32> -> vector<256x128xf32>
    %33 = arith.addf %27, %32 : vector<256x128xf32>
    %c2 = arith.constant 2 : index
    %c0_30 = arith.constant 0 : index
    %c0_31 = arith.constant 0 : index
    %34 = vector.load %arg10[%c2, %c0_30, %c0_31] : memref<18x16x128xf32, #tpu.memory_space<vmem>>, vector<16x16x128xf32>
    %35 = vector.shape_cast %34 : vector<16x16x128xf32> to vector<256x128xf32>
    %c7 = arith.constant 7 : index
    %c0_32 = arith.constant 0 : index
    %c0_33 = arith.constant 0 : index
    %36 = vector.load %arg4[%c7, %c0_32, %c0_33] : memref<9x128x128xf32, #tpu.memory_space<vmem>>, vector<1x128x128xf32>
    %37 = vector.shape_cast %36 : vector<1x128x128xf32> to vector<128x128xf32>
    %cst_34 = arith.constant dense<0.000000e+00> : vector<256x128xf32>
    %38 = tpu.matmul %35, %37, %cst_34 {dimension_numbers = #tpu.dot_dimension_numbers<[1], [0], [0], [1], [0, 0, 1, 1], [], []>} : vector<256x128xf32>, vector<128x128xf32>, vector<256x128xf32> -> vector<256x128xf32>
    %39 = arith.addf %33, %38 : vector<256x128xf32>
    %40 = vector.shape_cast %39 : vector<256x128xf32> to vector<16x16x128xf32>
    %c0_35 = arith.constant 0 : index
    %c1_36 = arith.constant 1 : index
    %c0_37 = arith.constant 0 : index
    %41 = vector.load %arg11[%c0_35, %c1_36, %c0_37] : memref<16x18x128xf32, #tpu.memory_space<vmem>>, vector<16x16x128xf32>
    tpu.vector_store %arg11[%c0_35, %c1_36, %c0_37], %40 {strides = array<i32>} : memref<16x18x128xf32, #tpu.memory_space<vmem>>, vector<16x16x128xf32>,
    %c0_38 = arith.constant 0 : index
    %c2_39 = arith.constant 2 : index
    %c0_40 = arith.constant 0 : index
    %42 = vector.load %arg11[%c0_38, %c2_39, %c0_40] : memref<16x18x128xf32, #tpu.memory_space<vmem>>, vector<16x16x128xf32>
    %cst_41 = arith.constant 0.000000e+00 : f32
    %43 = vector.broadcast %cst_41 : f32 to vector<256x128xf32>
    %c0_42 = arith.constant 0 : index
    %c0_43 = arith.constant 0 : index
    %c0_44 = arith.constant 0 : index
    %44 = vector.load %arg10[%c0_42, %c0_43, %c0_44] : memref<18x16x128xf32, #tpu.memory_space<vmem>>, vector<16x16x128xf32>
    %45 = vector.shape_cast %44 : vector<16x16x128xf32> to vector<256x128xf32>
    %c0_45 = arith.constant 0 : index
    %c0_46 = arith.constant 0 : index
    %c0_47 = arith.constant 0 : index
    %46 = vector.load %arg4[%c0_45, %c0_46, %c0_47] : memref<9x128x128xf32, #tpu.memory_space<vmem>>, vector<1x128x128xf32>
    %47 = vector.shape_cast %46 : vector<1x128x128xf32> to vector<128x128xf32>
    %cst_48 = arith.constant dense<0.000000e+00> : vector<256x128xf32>
    %48 = tpu.matmul %45, %47, %cst_48 {dimension_numbers = #tpu.dot_dimension_numbers<[1], [0], [0], [1], [0, 0, 1, 1], [], []>} : vector<256x128xf32>, vector<128x128xf32>, vector<256x128xf32> -> vector<256x128xf32>
    %49 = arith.addf %43, %48 : vector<256x128xf32>
    %c1_49 = arith.constant 1 : index
    %c0_50 = arith.constant 0 : index
    %c0_51 = arith.constant 0 : index
    %50 = vector.load %arg10[%c1_49, %c0_50, %c0_51] : memref<18x16x128xf32, #tpu.memory_space<vmem>>, vector<16x16x128xf32>
    %51 = vector.shape_cast %50 : vector<16x16x128xf32> to vector<256x128xf32>
    %c3 = arith.constant 3 : index
    %c0_52 = arith.constant 0 : index
    %c0_53 = arith.constant 0 : index
    %52 = vector.load %arg4[%c3, %c0_52, %c0_53] : memref<9x128x128xf32, #tpu.memory_space<vmem>>, vector<1x128x128xf32>
    %53 = vector.shape_cast %52 : vector<1x128x128xf32> to vector<128x128xf32>
    %cst_54 = arith.constant dense<0.000000e+00> : vector<256x128xf32>
    %54 = tpu.matmul %51, %53, %cst_54 {dimension_numbers = #tpu.dot_dimension_numbers<[1], [0], [0], [1], [0, 0, 1, 1], [], []>} : vector<256x128xf32>, vector<128x128xf32>, vector<256x128xf32> -> vector<256x128xf32>
    %55 = arith.addf %49, %54 : vector<256x128xf32>
    %c2_55 = arith.constant 2 : index
    %c0_56 = arith.constant 0 : index
    %c0_57 = arith.constant 0 : index
    %56 = vector.load %arg10[%c2_55, %c0_56, %c0_57] : memref<18x16x128xf32, #tpu.memory_space<vmem>>, vector<16x16x128xf32>
    %57 = vector.shape_cast %56 : vector<16x16x128xf32> to vector<256x128xf32>
    %c6 = arith.constant 6 : index
    %c0_58 = arith.constant 0 : index
    %c0_59 = arith.constant 0 : index
    %58 = vector.load %arg4[%c6, %c0_58, %c0_59] : memref<9x128x128xf32, #tpu.memory_space<vmem>>, vector<1x128x128xf32>
    %59 = vector.shape_cast %58 : vector<1x128x128xf32> to vector<128x128xf32>
    %cst_60 = arith.constant dense<0.000000e+00> : vector<256x128xf32>
    %60 = tpu.matmul %57, %59, %cst_60 {dimension_numbers = #tpu.dot_dimension_numbers<[1], [0], [0], [1], [0, 0, 1, 1], [], []>} : vector<256x128xf32>, vector<128x128xf32>, vector<256x128xf32> -> vector<256x128xf32>
    %61 = arith.addf %55, %60 : vector<256x128xf32>
    %62 = vector.shape_cast %61 : vector<256x128xf32> to vector<16x16x128xf32>
    %63 = arith.addf %42, %62 : vector<16x16x128xf32>
    %c0_61 = arith.constant 0 : index
    %c2_62 = arith.constant 2 : index
    %c0_63 = arith.constant 0 : index
    %64 = vector.load %arg11[%c0_61, %c2_62, %c0_63] : memref<16x18x128xf32, #tpu.memory_space<vmem>>, vector<16x16x128xf32>
    tpu.vector_store %arg11[%c0_61, %c2_62, %c0_63], %63 {strides = array<i32>} : memref<16x18x128xf32, #tpu.memory_space<vmem>>, vector<16x16x128xf32>,
    %c0_64 = arith.constant 0 : index
    %c0_65 = arith.constant 0 : index
    %c0_66 = arith.constant 0 : index
    %65 = vector.load %arg11[%c0_64, %c0_65, %c0_66] : memref<16x18x128xf32, #tpu.memory_space<vmem>>, vector<16x16x128xf32>
    %cst_67 = arith.constant 0.000000e+00 : f32
    %66 = vector.broadcast %cst_67 : f32 to vector<256x128xf32>
    %c0_68 = arith.constant 0 : index
    %c0_69 = arith.constant 0 : index
    %c0_70 = arith.constant 0 : index
    %67 = vector.load %arg10[%c0_68, %c0_69, %c0_70] : memref<18x16x128xf32, #tpu.memory_space<vmem>>, vector<16x16x128xf32>
    %68 = vector.shape_cast %67 : vector<16x16x128xf32> to vector<256x128xf32>
    %c2_71 = arith.constant 2 : index
    %c0_72 = arith.constant 0 : index
    %c0_73 = arith.constant 0 : index
    %69 = vector.load %arg4[%c2_71, %c0_72, %c0_73] : memref<9x128x128xf32, #tpu.memory_space<vmem>>, vector<1x128x128xf32>
    %70 = vector.shape_cast %69 : vector<1x128x128xf32> to vector<128x128xf32>
    %cst_74 = arith.constant dense<0.000000e+00> : vector<256x128xf32>
    %71 = tpu.matmul %68, %70, %cst_74 {dimension_numbers = #tpu.dot_dimension_numbers<[1], [0], [0], [1], [0, 0, 1, 1], [], []>} : vector<256x128xf32>, vector<128x128xf32>, vector<256x128xf32> -> vector<256x128xf32>
    %72 = arith.addf %66, %71 : vector<256x128xf32>
    %c1_75 = arith.constant 1 : index
    %c0_76 = arith.constant 0 : index
    %c0_77 = arith.constant 0 : index
    %73 = vector.load %arg10[%c1_75, %c0_76, %c0_77] : memref<18x16x128xf32, #tpu.memory_space<vmem>>, vector<16x16x128xf32>
    %74 = vector.shape_cast %73 : vector<16x16x128xf32> to vector<256x128xf32>
    %c5 = arith.constant 5 : index
    %c0_78 = arith.constant 0 : index
    %c0_79 = arith.constant 0 : index
    %75 = vector.load %arg4[%c5, %c0_78, %c0_79] : memref<9x128x128xf32, #tpu.memory_space<vmem>>, vector<1x128x128xf32>
    %76 = vector.shape_cast %75 : vector<1x128x128xf32> to vector<128x128xf32>
    %cst_80 = arith.constant dense<0.000000e+00> : vector<256x128xf32>
    %77 = tpu.matmul %74, %76, %cst_80 {dimension_numbers = #tpu.dot_dimension_numbers<[1], [0], [0], [1], [0, 0, 1, 1], [], []>} : vector<256x128xf32>, vector<128x128xf32>, vector<256x128xf32> -> vector<256x128xf32>
    %78 = arith.addf %72, %77 : vector<256x128xf32>
    %c2_81 = arith.constant 2 : index
    %c0_82 = arith.constant 0 : index
    %c0_83 = arith.constant 0 : index
    %79 = vector.load %arg10[%c2_81, %c0_82, %c0_83] : memref<18x16x128xf32, #tpu.memory_space<vmem>>, vector<16x16x128xf32>
    %80 = vector.shape_cast %79 : vector<16x16x128xf32> to vector<256x128xf32>
    %c8 = arith.constant 8 : index
    %c0_84 = arith.constant 0 : index
    %c0_85 = arith.constant 0 : index
    %81 = vector.load %arg4[%c8, %c0_84, %c0_85] : memref<9x128x128xf32, #tpu.memory_space<vmem>>, vector<1x128x128xf32>
    %82 = vector.shape_cast %81 : vector<1x128x128xf32> to vector<128x128xf32>
    %cst_86 = arith.constant dense<0.000000e+00> : vector<256x128xf32>
    %83 = tpu.matmul %80, %82, %cst_86 {dimension_numbers = #tpu.dot_dimension_numbers<[1], [0], [0], [1], [0, 0, 1, 1], [], []>} : vector<256x128xf32>, vector<128x128xf32>, vector<256x128xf32> -> vector<256x128xf32>
    %84 = arith.addf %78, %83 : vector<256x128xf32>
    %85 = vector.shape_cast %84 : vector<256x128xf32> to vector<16x16x128xf32>
    %86 = arith.addf %65, %85 : vector<16x16x128xf32>
    %c0_87 = arith.constant 0 : index
    %c0_88 = arith.constant 0 : index
    %c0_89 = arith.constant 0 : index
    %87 = vector.load %arg11[%c0_87, %c0_88, %c0_89] : memref<16x18x128xf32, #tpu.memory_space<vmem>>, vector<16x16x128xf32>
    tpu.vector_store %arg11[%c0_87, %c0_88, %c0_89], %86 {strides = array<i32>} : memref<16x18x128xf32, #tpu.memory_space<vmem>>, vector<16x16x128xf32>,
    %c0_90 = arith.constant 0 : index
    %c1_91 = arith.constant 1 : index
    %c0_92 = arith.constant 0 : index
    %88 = vector.load %arg11[%c0_90, %c1_91, %c0_92] : memref<16x18x128xf32, #tpu.memory_space<vmem>>, vector<16x16x128xf32>
    %89 = vector.shape_cast %88 : vector<16x16x128xf32> to vector<256x128xf32>
    %c0_93 = arith.constant 0 : index
    %c0_94 = arith.constant 0 : index
    %90 = vector.load %arg5[%c0_93, %c0_94] : memref<1x128xf32, #tpu.memory_space<vmem>>, vector<1x128xf32>
    %91 = vector.broadcast %90 : vector<1x128xf32> to vector<256x128xf32>
    %92 = arith.mulf %89, %91 : vector<256x128xf32>
    %c0_95 = arith.constant 0 : index
    %c0_96 = arith.constant 0 : index
    %93 = vector.load %arg6[%c0_95, %c0_96] : memref<1x128xf32, #tpu.memory_space<vmem>>, vector<1x128xf32>
    %94 = vector.broadcast %93 : vector<1x128xf32> to vector<256x128xf32>
    %95 = arith.addf %92, %94 : vector<256x128xf32>
    %cst_97 = arith.constant 0.000000e+00 : f32
    %96 = vector.broadcast %cst_97 : f32 to vector<256x128xf32>
    %97 = arith.maximumf %95, %96 : vector<256x128xf32>
    %c0_98 = arith.constant 0 : index
    %c0_99 = arith.constant 0 : index
    %98 = vector.load %arg7[%c0_98, %c0_99] : memref<128x128xf32, #tpu.memory_space<vmem>>, vector<128x128xf32>
    %cst_100 = arith.constant dense<0.000000e+00> : vector<256x128xf32>
    %99 = tpu.matmul %97, %98, %cst_100 {dimension_numbers = #tpu.dot_dimension_numbers<[1], [0], [0], [1], [0, 0, 1, 1], [], []>} : vector<256x128xf32>, vector<128x128xf32>, vector<256x128xf32> -> vector<256x128xf32>
    %c0_101 = arith.constant 0 : index
    %c0_102 = arith.constant 0 : index
    %100 = vector.load %arg8[%c0_101, %c0_102] : memref<1x128xf32, #tpu.memory_space<vmem>>, vector<1x128xf32>
    %101 = vector.broadcast %100 : vector<1x128xf32> to vector<256x128xf32>
    %102 = arith.addf %99, %101 : vector<256x128xf32>
    %103 = vector.shape_cast %102 : vector<256x128xf32> to vector<16x16x128xf32>
    %104 = arith.addf %103, %1 : vector<16x16x128xf32>
    %c0_103 = arith.constant 0 : index
    %c0_104 = arith.constant 0 : index
    %c0_105 = arith.constant 0 : index
    %c0_106 = arith.constant 0 : index
    %105 = vector.load %arg9[%c0_103, %c0_104, %c0_105, %c0_106] : memref<1x16x16x128xf32, #tpu.memory_space<vmem>>, vector<1x16x16x128xf32>
    %106 = vector.shape_cast %105 : vector<1x16x16x128xf32> to vector<16x16x128xf32>
    %107 = vector.shape_cast %104 : vector<16x16x128xf32> to vector<1x16x16x128xf32>
    tpu.vector_store %arg9[%c0_103, %c0_104, %c0_105, %c0_106], %107 {strides = array<i32>} : memref<1x16x16x128xf32, #tpu.memory_space<vmem>>, vector<1x16x16x128xf32>,
    return
  }
  func.func @transform_0(%arg0: i32) -> (i32, i32, i32, i32) {
    %c0_i32 = arith.constant 0 : i32
    %c0_i32_0 = arith.constant 0 : i32
    %c0_i32_1 = arith.constant 0 : i32
    %c0_i32_2 = arith.constant 0 : i32
    return %arg0, %c0_i32, %c0_i32_0, %c0_i32_1 : i32, i32, i32, i32
  }
  func.func @transform_1(%arg0: i32) -> (i32, i32) {
    %c0_i32 = arith.constant 0 : i32
    %c0_i32_0 = arith.constant 0 : i32
    %c0_i32_1 = arith.constant 0 : i32
    return %c0_i32, %c0_i32_0 : i32, i32
  }
  func.func @transform_2(%arg0: i32) -> (i32, i32) {
    %c0_i32 = arith.constant 0 : i32
    %c0_i32_0 = arith.constant 0 : i32
    %c0_i32_1 = arith.constant 0 : i32
    return %c0_i32, %c0_i32_0 : i32, i32
  }
  func.func @transform_3(%arg0: i32) -> (i32, i32, i32) {
    %c0_i32 = arith.constant 0 : i32
    %c0_i32_0 = arith.constant 0 : i32
    %c0_i32_1 = arith.constant 0 : i32
    %c0_i32_2 = arith.constant 0 : i32
    return %c0_i32, %c0_i32_0, %c0_i32_1 : i32, i32, i32
  }
  func.func @transform_4(%arg0: i32) -> (i32, i32) {
    %c0_i32 = arith.constant 0 : i32
    %c0_i32_0 = arith.constant 0 : i32
    %c0_i32_1 = arith.constant 0 : i32
    return %c0_i32, %c0_i32_0 : i32, i32
  }
  func.func @transform_5(%arg0: i32) -> (i32, i32) {
    %c0_i32 = arith.constant 0 : i32
    %c0_i32_0 = arith.constant 0 : i32
    %c0_i32_1 = arith.constant 0 : i32
    return %c0_i32, %c0_i32_0 : i32, i32
  }
  func.func @transform_6(%arg0: i32) -> (i32, i32) {
    %c0_i32 = arith.constant 0 : i32
    %c0_i32_0 = arith.constant 0 : i32
    %c0_i32_1 = arith.constant 0 : i32
    return %c0_i32, %c0_i32_0 : i32, i32
  }
  func.func @transform_7(%arg0: i32) -> (i32, i32) {
    %c0_i32 = arith.constant 0 : i32
    %c0_i32_0 = arith.constant 0 : i32
    %c0_i32_1 = arith.constant 0 : i32
    return %c0_i32, %c0_i32_0 : i32, i32
  }
  func.func @transform_8(%arg0: i32) -> (i32, i32, i32, i32) {
    %c0_i32 = arith.constant 0 : i32
    %c0_i32_0 = arith.constant 0 : i32
    %c0_i32_1 = arith.constant 0 : i32
    %c0_i32_2 = arith.constant 0 : i32
    return %arg0, %c0_i32, %c0_i32_0, %c0_i32_1 : i32, i32, i32, i32
  }
}

</mosaic_0001>

<llo_original>
// kernel: tpu_custom_call.1
$region0: #{tpu_custom_call.1}
  #allocation0 [shape = 'u32[]', space=smem, size = 0x4, offset = 0x4, fixed_abs, tag = 'smem constant byte address 0x4 - core index']
  #allocation1 [shape = 'u32[144,128]{1,0:T(1,128)}', space=vmem, size = 0x12000, scoped, tag = 'internal scratch']
  #allocation2 [shape = 'f32[18,16,128]{2,1,0:T(8,128)}', space=vmem, size = 0x24000, scoped, tag = 'scratch operand']
  #allocation3 [shape = 'f32[16,18,128]{2,1,0:T(8,128)}', space=vmem, size = 0x30000, scoped, tag = 'scratch operand']
  %s0 = inlined_call_operand.hbm [shape: f32[2,16,16,128], index: 0, kind: input, shape index: {}]
  %s1 = inlined_call_operand.vmem [shape: f32[1,128], index: 1, kind: input, shape index: {}]
  %s2 = inlined_call_operand.vmem [shape: f32[1,128], index: 2, kind: input, shape index: {}]
  %s3 = inlined_call_operand.hbm [shape: f32[9,128,128], index: 3, kind: input, shape index: {}]
  %s4 = inlined_call_operand.vmem [shape: f32[1,128], index: 4, kind: input, shape index: {}]
  %s5 = inlined_call_operand.vmem [shape: f32[1,128], index: 5, kind: input, shape index: {}]
  %s6 = inlined_call_operand.hbm [shape: f32[128,128], index: 6, kind: input, shape index: {}]
  %s7 = inlined_call_operand.vmem [shape: f32[1,128], index: 7, kind: input, shape index: {}]
  %s8 = inlined_call_operand.hbm [shape: f32[2,16,16,128], index: 8, kind: output, shape index: {}]
  %s9 = sld [smem:[#allocation0]]
  $region77: #{tpu_custom_call.1} parent=0
    _
  %s11 = ssub.s32 1, %s9
  %s12 = scalar_select 0, %s11, %s9
  $region1: #{tpu_custom_call.1} parent=0
    #allocation4 [shape = 'u8[262144]{0}', space=vmem, size = 0x40000, scoped, tag = 'input window, operand 0']
    #allocation5 [shape = 's32[2]{0}', space=sflag, size = 0x8, scoped, tag = 'scoped memory for tpu_custom_call.1']
    #allocation6 [shape = 's32[2]{0}', space=sflag, size = 0x8, scoped, tag = 'scoped memory for tpu_custom_call.1']
    #allocation7 [shape = 'u8[589824]{0}', space=vmem, size = 0x90000, scoped, tag = 'input window, operand 3, single buffered']
    #allocation8 [shape = 's32[1]{0}', space=sflag, size = 0x4, scoped, tag = 'scoped memory for tpu_custom_call.1']
    #allocation9 [shape = 'u8[65536]{0}', space=vmem, size = 0x10000, scoped, tag = 'input window, operand 6, single buffered']
    #allocation10 [shape = 'u8[262144]{0}', space=vmem, size = 0x40000, scoped, tag = 'output window, operand 0']
    %13 = vsyncpa [#allocation5], 0
    %s14 = scalar_lea.sflag [#allocation5], 1
    %15 = vsyncpa %s14, 0
    %16 = vsyncpa [#allocation8], 0
    %17 = vsyncpa [#allocation6], 0
    %s18 = scalar_lea.sflag [#allocation6], 1
    %19 = vsyncpa %s18, 0
    loop: start=0, step=1, limit=4
    $region2: #{tpu_custom_call.1} parent=1 // loop_pre_header
      _
    $region3: #{tpu_custom_call.1} parent=1 // loop_header
      %s21 = sphi 0, %s25
      %p22 = scmp.ge.s32.totalorder %s21, 4
      %s31 = sphi 0, %s33
      %s34 = sphi 0, %s31
      %s35 = sphi 0, %s34
      %s51 = sphi 0, %s35
      %s55 = sphi 0, %s55
      %s57 = sphi 0, %s55
      %s58 = sphi 0, %s57
      %s72 = sphi 0, %s58
      %s76 = sphi 0, %s76
      %s78 = sphi 0, %s76
      %s79 = sphi 0, %s78
      %s93 = sphi 0, %s79
      %s97 = sphi 0, %s97
      %s99 = sphi 0, %s97
      %s100 = sphi 0, %s99
      %s114 = sphi 0, %s100
      %s118 = sphi 0, %s118
      %s120 = sphi 0, %s118
      %s121 = sphi 0, %s120
      %s135 = sphi 0, %s121
      %s139 = sphi 0, %s139
      %s141 = sphi 0, %s139
      %s142 = sphi 0, %s141
      %s156 = sphi 0, %s142
      %s160 = sphi 0, %s160
      %s162 = sphi 0, %s160
      %s163 = sphi 0, %s162
      %s177 = sphi 0, %s163
      %s181 = sphi 0, %s181
      %s183 = sphi 0, %s181
      %s184 = sphi 0, %s183
      %s198 = sphi 0, %s184
      %s204 = sphi 0, %s206
      %s207 = sphi 0, %s204
      %s208 = sphi 0, %s207
      %s224 = sphi 0, %s208
    $region4: #{tpu_custom_call.1} parent=1 // loop_header_branch
      %24 = sbr.rel (%p22) target = $region8
    $region5: #{tpu_custom_call.1} parent=1 // loop_body
      %s26 = ssub.s32 %s21, 1
      %s27 = ssub.s32 %s21, 2
      %s28 = sadd.s32 %s21, 1
      %s29 = ssub.s32 %s21, %s28
      %p30 = scmp.eq.s32.totalorder %s29, 0
      %s32 = sadd.s32 %s31, 1
      %s33 = scalar_select %p30, %s31, %s32
      %p36 = pneg %p30
      %p37 = scmp.eq.s32.totalorder %s21, 1
      %p38 = por %p36, %p37
      %p39 = scmp.ne.s32.totalorder %s31, %s34
      %p40 = scmp.eq.s32.totalorder %s21, 0
      %p41 = por %p39, %p40
      %p42 = scmp.ne.s32.totalorder %s31, %s34
      %p43 = scmp.eq.s32.totalorder %s26, 1
      %p44 = por %p42, %p43
      %p45 = scmp.ne.s32.totalorder %s34, %s35
      %p46 = scmp.eq.s32.totalorder %s26, 0
      %p47 = por %p45, %p46
      %p48 = scmp.ne.s32.totalorder %s34, %s35
      %p49 = scmp.eq.s32.totalorder %s27, 1
      %p50 = por %p48, %p49
      %p52 = scmp.ne.s32.totalorder %s35, %s51
      %p53 = scmp.eq.s32.totalorder %s27, 0
      %p54 = por %p52, %p53
      %s56 = sadd.s32 %s55, 1
      %p59 = scmp.eq.s32.totalorder %s21, 1
      %p60 = scmp.ne.s32.totalorder %s55, %s57
      %p61 = scmp.eq.s32.totalorder %s21, 0
      %p62 = por %p60, %p61
      %p63 = scmp.ne.s32.totalorder %s55, %s57
      %p64 = scmp.eq.s32.totalorder %s26, 1
      %p65 = por %p63, %p64
      %p66 = scmp.ne.s32.totalorder %s57, %s58
      %p67 = scmp.eq.s32.totalorder %s26, 0
      %p68 = por %p66, %p67
      %p69 = scmp.ne.s32.totalorder %s57, %s58
      %p70 = scmp.eq.s32.totalorder %s27, 1
      %p71 = por %p69, %p70
      %p73 = scmp.ne.s32.totalorder %s58, %s72
      %p74 = scmp.eq.s32.totalorder %s27, 0
      %p75 = por %p73, %p74
      %s77 = sadd.s32 %s76, 1
      %p80 = scmp.eq.s32.totalorder %s21, 1
      %p81 = scmp.ne.s32.totalorder %s76, %s78
      %p82 = scmp.eq.s32.totalorder %s21, 0
      %p83 = por %p81, %p82
      %p84 = scmp.ne.s32.totalorder %s76, %s78
      %p85 = scmp.eq.s32.totalorder %s26, 1
      %p86 = por %p84, %p85
      %p87 = scmp.ne.s32.totalorder %s78, %s79
      %p88 = scmp.eq.s32.totalorder %s26, 0
      %p89 = por %p87, %p88
      %p90 = scmp.ne.s32.totalorder %s78, %s79
      %p91 = scmp.eq.s32.totalorder %s27, 1
      %p92 = por %p90, %p91
      %p94 = scmp.ne.s32.totalorder %s79, %s93
      %p95 = scmp.eq.s32.totalorder %s27, 0
      %p96 = por %p94, %p95
      %s98 = sadd.s32 %s97, 1
      %p101 = scmp.eq.s32.totalorder %s21, 1
      %p102 = scmp.ne.s32.totalorder %s97, %s99
      %p103 = scmp.eq.s32.totalorder %s21, 0
      %p104 = por %p102, %p103
      %p105 = scmp.ne.s32.totalorder %s97, %s99
      %p106 = scmp.eq.s32.totalorder %s26, 1
      %p107 = por %p105, %p106
      %p108 = scmp.ne.s32.totalorder %s99, %s100
      %p109 = scmp.eq.s32.totalorder %s26, 0
      %p110 = por %p108, %p109
      %p111 = scmp.ne.s32.totalorder %s99, %s100
      %p112 = scmp.eq.s32.totalorder %s27, 1
      %p113 = por %p111, %p112
      %p115 = scmp.ne.s32.totalorder %s100, %s114
      %p116 = scmp.eq.s32.totalorder %s27, 0
      %p117 = por %p115, %p116
      %s119 = sadd.s32 %s118, 1
      %p122 = scmp.eq.s32.totalorder %s21, 1
      %p123 = scmp.ne.s32.totalorder %s118, %s120
      %p124 = scmp.eq.s32.totalorder %s21, 0
      %p125 = por %p123, %p124
      %p126 = scmp.ne.s32.totalorder %s118, %s120
      %p127 = scmp.eq.s32.totalorder %s26, 1
      %p128 = por %p126, %p127
      %p129 = scmp.ne.s32.totalorder %s120, %s121
      %p130 = scmp.eq.s32.totalorder %s26, 0
      %p131 = por %p129, %p130
      %p132 = scmp.ne.s32.totalorder %s120, %s121
      %p133 = scmp.eq.s32.totalorder %s27, 1
      %p134 = por %p132, %p133
      %p136 = scmp.ne.s32.totalorder %s121, %s135
      %p137 = scmp.eq.s32.totalorder %s27, 0
      %p138 = por %p136, %p137
      %s140 = sadd.s32 %s139, 1
      %p143 = scmp.eq.s32.totalorder %s21, 1
      %p144 = scmp.ne.s32.totalorder %s139, %s141
      %p145 = scmp.eq.s32.totalorder %s21, 0
      %p146 = por %p144, %p145
      %p147 = scmp.ne.s32.totalorder %s139, %s141
      %p148 = scmp.eq.s32.totalorder %s26, 1
      %p149 = por %p147, %p148
      %p150 = scmp.ne.s32.totalorder %s141, %s142
      %p151 = scmp.eq.s32.totalorder %s26, 0
      %p152 = por %p150, %p151
      %p153 = scmp.ne.s32.totalorder %s141, %s142
      %p154 = scmp.eq.s32.totalorder %s27, 1
      %p155 = por %p153, %p154
      %p157 = scmp.ne.s32.totalorder %s142, %s156
      %p158 = scmp.eq.s32.totalorder %s27, 0
      %p159 = por %p157, %p158
      %s161 = sadd.s32 %s160, 1
      %p164 = scmp.eq.s32.totalorder %s21, 1
      %p165 = scmp.ne.s32.totalorder %s160, %s162
      %p166 = scmp.eq.s32.totalorder %s21, 0
      %p167 = por %p165, %p166
      %p168 = scmp.ne.s32.totalorder %s160, %s162
      %p169 = scmp.eq.s32.totalorder %s26, 1
      %p170 = por %p168, %p169
      %p171 = scmp.ne.s32.totalorder %s162, %s163
      %p172 = scmp.eq.s32.totalorder %s26, 0
      %p173 = por %p171, %p172
      %p174 = scmp.ne.s32.totalorder %s162, %s163
      %p175 = scmp.eq.s32.totalorder %s27, 1
      %p176 = por %p174, %p175
      %p178 = scmp.ne.s32.totalorder %s163, %s177
      %p179 = scmp.eq.s32.totalorder %s27, 0
      %p180 = por %p178, %p179
      %s182 = sadd.s32 %s181, 1
      %p185 = scmp.eq.s32.totalorder %s21, 1
      %p186 = scmp.ne.s32.totalorder %s181, %s183
      %p187 = scmp.eq.s32.totalorder %s21, 0
      %p188 = por %p186, %p187
      %p189 = scmp.ne.s32.totalorder %s181, %s183
      %p190 = scmp.eq.s32.totalorder %s26, 1
      %p191 = por %p189, %p190
      %p192 = scmp.ne.s32.totalorder %s183, %s184
      %p193 = scmp.eq.s32.totalorder %s26, 0
      %p194 = por %p192, %p193
      %p195 = scmp.ne.s32.totalorder %s183, %s184
      %p196 = scmp.eq.s32.totalorder %s27, 1
      %p197 = por %p195, %p196
      %p199 = scmp.ne.s32.totalorder %s184, %s198
      %p200 = scmp.eq.s32.totalorder %s27, 0
      %p201 = por %p199, %p200
      %s202 = ssub.s32 %s21, %s28
      %p203 = scmp.eq.s32.totalorder %s202, 0
      %s205 = sadd.s32 %s204, 1
      %s206 = scalar_select %p203, %s204, %s205
      %p209 = pneg %p203
      %p210 = scmp.eq.s32.totalorder %s21, 1
      %p211 = por %p209, %p210
      %p212 = scmp.ne.s32.totalorder %s204, %s207
      %p213 = scmp.eq.s32.totalorder %s21, 0
      %p214 = por %p212, %p213
      %p215 = scmp.ne.s32.totalorder %s204, %s207
      %p216 = scmp.eq.s32.totalorder %s26, 1
      %p217 = por %p215, %p216
      %p218 = scmp.ne.s32.totalorder %s207, %s208
      %p219 = scmp.eq.s32.totalorder %s26, 0
      %p220 = por %p218, %p219
      %p221 = scmp.ne.s32.totalorder %s207, %s208
      %p222 = scmp.eq.s32.totalorder %s27, 1
      %p223 = por %p221, %p222
      %p225 = scmp.ne.s32.totalorder %s208, %s224
      %p226 = scmp.eq.s32.totalorder %s27, 0
      %p227 = por %p225, %p226
      %p228 = scmp.le.s32.totalorder 1, %s21
      %p229 = scmp.lt.s32.totalorder %s21, 3
      %p230 = pnand %p228, %p229
      %p231 = pneg %p230
      // Predicated region
      $region9: #{tpu_custom_call.1} parent=5 // pred_check
        _
      $region10: #{tpu_custom_call.1} parent=5 // pred_check_branch
        %233 = sbr.rel (%p230) target = $region12
      $region11: #{tpu_custom_call.1} parent=5 // pred_region
        %s234 = ssub.s32 %s21, 1
        // Predicated region
        $region13: #{tpu_custom_call.1} parent=11 // pred_check
          %p235 = pneg %p68
        $region14: #{tpu_custom_call.1} parent=11 // pred_check_branch
          %237 = sbr.rel (%p235) target = $region16
        $region15: #{tpu_custom_call.1} parent=11 // pred_region
          _
        $region16: #{tpu_custom_call.1} parent=11 // pred_fallthru
          _
        // Predicated region
        $region17: #{tpu_custom_call.1} parent=11 // pred_check
          %p238 = pneg %p89
        $region18: #{tpu_custom_call.1} parent=11 // pred_check_branch
          %240 = sbr.rel (%p238) target = $region20
        $region19: #{tpu_custom_call.1} parent=11 // pred_region
          _
        $region20: #{tpu_custom_call.1} parent=11 // pred_fallthru
          _
        // Predicated region
        $region21: #{tpu_custom_call.1} parent=11 // pred_check
          %p241 = pneg %p110
        $region22: #{tpu_custom_call.1} parent=11 // pred_check_branch
          %243 = sbr.rel (%p241) target = $region24
        $region23: #{tpu_custom_call.1} parent=11 // pred_region
          %s245 = ssub.s32 18432, 18432
          %246 = vsyncadd [#allocation8], %s245
          %s247 = sshll.u32 [#allocation7], 4
          %s248 = int_to_ptr.vmem [resolvable:$true] %s247
          %253 = dma.hbm_to_vmem [thread:$0]  %s3, 18432, %s248, [#allocation8], 128, 128, 8
        $region24: #{tpu_custom_call.1} parent=11 // pred_fallthru
          _
        // Predicated region
        $region25: #{tpu_custom_call.1} parent=11 // pred_check
          %p254 = pneg %p131
        $region26: #{tpu_custom_call.1} parent=11 // pred_check_branch
          %256 = sbr.rel (%p254) target = $region28
        $region27: #{tpu_custom_call.1} parent=11 // pred_region
          _
        $region28: #{tpu_custom_call.1} parent=11 // pred_fallthru
          _
        // Predicated region
        $region29: #{tpu_custom_call.1} parent=11 // pred_check
          %p257 = pneg %p152
        $region30: #{tpu_custom_call.1} parent=11 // pred_check_branch
          %259 = sbr.rel (%p257) target = $region32
        $region31: #{tpu_custom_call.1} parent=11 // pred_region
          _
        $region32: #{tpu_custom_call.1} parent=11 // pred_fallthru
          _
        // Predicated region
        $region33: #{tpu_custom_call.1} parent=11 // pred_check
          %p260 = pneg %p173
        $region34: #{tpu_custom_call.1} parent=11 // pred_check_branch
          %262 = sbr.rel (%p260) target = $region36
        $region35: #{tpu_custom_call.1} parent=11 // pred_region
          %s264 = ssub.s32 2048, 2048
          %265 = vsyncadd [#allocation8], %s264
          %s266 = sshll.u32 [#allocation9], 4
          %s267 = int_to_ptr.vmem [resolvable:$true] %s266
          %272 = dma.hbm_to_vmem [thread:$0]  %s6, 2048, %s267, [#allocation8], 128, 128, 8
        $region36: #{tpu_custom_call.1} parent=11 // pred_fallthru
          _
        // Predicated region
        $region37: #{tpu_custom_call.1} parent=11 // pred_check
          %p273 = pneg %p194
        $region38: #{tpu_custom_call.1} parent=11 // pred_check_branch
          %275 = sbr.rel (%p273) target = $region40
        $region39: #{tpu_custom_call.1} parent=11 // pred_region
          _
        $region40: #{tpu_custom_call.1} parent=11 // pred_fallthru
          _
      $region12: #{tpu_custom_call.1} parent=5 // pred_fallthru
        _
      %p276 = scmp.lt.s32.totalorder %s21, 2
      // Predicated region
      $region41: #{tpu_custom_call.1} parent=5 // pred_check
        %p277 = pneg %p276
      $region42: #{tpu_custom_call.1} parent=5 // pred_check_branch
        %279 = sbr.rel (%p277) target = $region44
      $region43: #{tpu_custom_call.1} parent=5 // pred_region
        // Predicated region
        $region45: #{tpu_custom_call.1} parent=43 // pred_check
          %p280 = pneg %p41
        $region46: #{tpu_custom_call.1} parent=43 // pred_check_branch
          %282 = sbr.rel (%p280) target = $region48
        $region47: #{tpu_custom_call.1} parent=43 // pred_region
          %s283 = sand.u32 %s31, 1
          %s284 = scalar_lea.sflag [#allocation5], %s283
          %s285 = sand.u32 %s31, 1
          %s286 = smul.addr %s285, 256
          %s287 = scalar_lea.vmem [#allocation4], %s286
          %s289 = ssub.s32 4096, 4096
          %290 = vsyncadd %s284, %s289
          %s291 = smul.addr %s21, 32
          %s292 = smul.addr %s291, 128
          %s293 = scalar_lea.hbm %s0, %s292
          %s294 = sshll.u32 %s287, 4
          %s295 = int_to_ptr.vmem [resolvable:$true] %s294
          %300 = dma.hbm_to_vmem [thread:$0]  %s293, 4096, %s295, %s284, 128, 128, 8
        $region48: #{tpu_custom_call.1} parent=43 // pred_fallthru
          _
      $region44: #{tpu_custom_call.1} parent=5 // pred_fallthru
        _
      %p301 = scmp.le.s32.totalorder 1, %s21
      %p302 = scmp.lt.s32.totalorder %s21, 3
      %p303 = pnand %p301, %p302
      %p304 = pneg %p303
      // Predicated region
      $region49: #{tpu_custom_call.1} parent=5 // pred_check
        _
      $region50: #{tpu_custom_call.1} parent=5 // pred_check_branch
        %306 = sbr.rel (%p303) target = $region52
      $region51: #{tpu_custom_call.1} parent=5 // pred_region
        %s307 = ssub.s32 %s21, 1
        %s308 = sand.u32 %s34, 1
        %s309 = scalar_lea.sflag [#allocation5], %s308
        %s310 = sand.u32 %s34, 1
        %s311 = smul.addr %s310, 256
        %s312 = scalar_lea.vmem [#allocation4], %s311
        // Predicated region
        $region53: #{tpu_custom_call.1} parent=51 // pred_check
          %p313 = pneg %p47
        $region54: #{tpu_custom_call.1} parent=51 // pred_check_branch
          %315 = sbr.rel (%p313) target = $region56
        $region55: #{tpu_custom_call.1} parent=51 // pred_region
          %316 = dma.done %s309, 4096
        $region56: #{tpu_custom_call.1} parent=51 // pred_fallthru
          _
        // Predicated region
        $region57: #{tpu_custom_call.1} parent=51 // pred_check
          %p317 = pneg %p110
        $region58: #{tpu_custom_call.1} parent=51 // pred_check_branch
          %319 = sbr.rel (%p317) target = $region60
        $region59: #{tpu_custom_call.1} parent=51 // pred_region
          %320 = dma.done [#allocation8], 18432
        $region60: #{tpu_custom_call.1} parent=51 // pred_fallthru
          _
        // Predicated region
        $region61: #{tpu_custom_call.1} parent=51 // pred_check
          %p321 = pneg %p173
        $region62: #{tpu_custom_call.1} parent=51 // pred_check_branch
          %323 = sbr.rel (%p321) target = $region64
        $region63: #{tpu_custom_call.1} parent=51 // pred_region
          %324 = dma.done [#allocation8], 2048
        $region64: #{tpu_custom_call.1} parent=51 // pred_fallthru
          _
        %s325 = sand.u32 %s34, 1
        %s326 = scalar_lea.sflag [#allocation5], %s325
        %s327 = sand.u32 %s34, 1
        %s328 = smul.addr %s327, 256
        %s329 = scalar_lea.vmem [#allocation4], %s328
        %p330 = pneg %p47
        %p331 = pneg %p44
        %p332 = pneg %p68
        %p333 = pneg %p65
        %p334 = pneg %p89
        %p335 = pneg %p86
        %p336 = pneg %p110
        %p337 = pneg %p107
        %p338 = pneg %p131
        %p339 = pneg %p128
        %p340 = pneg %p152
        %p341 = pneg %p149
        %p342 = pneg %p173
        %p343 = pneg %p170
        %p344 = pneg %p194
        %p345 = pneg %p191
        %p346 = pneg %p220
        %p347 = pneg %p217
        %s348 = sand.u32 %s207, 1
        %s349 = scalar_lea.sflag [#allocation6], %s348
        %s350 = sand.u32 %s207, 1
        %s351 = smul.addr %s350, 256
        %s352 = scalar_lea.vmem [#allocation10], %s351
        %v353 = vld [vmem:[%s312] sm:$0xff]
        %v354 = vld [vmem:[%s312 + $0x8] sm:$0xff]
        %v355 = vld [vmem:[%s312 + $0x10] sm:$0xff]
        %v356 = vld [vmem:[%s312 + $0x18] sm:$0xff]
        %v357 = vld [vmem:[%s312 + $0x20] sm:$0xff]
        %v358 = vld [vmem:[%s312 + $0x28] sm:$0xff]
        %v359 = vld [vmem:[%s312 + $0x30] sm:$0xff]
        %v360 = vld [vmem:[%s312 + $0x38] sm:$0xff]
        %v361 = vld [vmem:[%s312 + $0x40] sm:$0xff]
        %v362 = vld [vmem:[%s312 + $0x48] sm:$0xff]
        %v363 = vld [vmem:[%s312 + $0x50] sm:$0xff]
        %v364 = vld [vmem:[%s312 + $0x58] sm:$0xff]
        %v365 = vld [vmem:[%s312 + $0x60] sm:$0xff]
        %v366 = vld [vmem:[%s312 + $0x68] sm:$0xff]
        %v367 = vld [vmem:[%s312 + $0x70] sm:$0xff]
        %v368 = vld [vmem:[%s312 + $0x78] sm:$0xff]
        %v369 = vld [vmem:[%s312 + $0x80] sm:$0xff]
        %v370 = vld [vmem:[%s312 + $0x88] sm:$0xff]
        %v371 = vld [vmem:[%s312 + $0x90] sm:$0xff]
        %v372 = vld [vmem:[%s312 + $0x98] sm:$0xff]
        %v373 = vld [vmem:[%s312 + $0xa0] sm:$0xff]
        %v374 = vld [vmem:[%s312 + $0xa8] sm:$0xff]
        %v375 = vld [vmem:[%s312 + $0xb0] sm:$0xff]
        %v376 = vld [vmem:[%s312 + $0xb8] sm:$0xff]
        %v377 = vld [vmem:[%s312 + $0xc0] sm:$0xff]
        %v378 = vld [vmem:[%s312 + $0xc8] sm:$0xff]
        %v379 = vld [vmem:[%s312 + $0xd0] sm:$0xff]
        %v380 = vld [vmem:[%s312 + $0xd8] sm:$0xff]
        %v381 = vld [vmem:[%s312 + $0xe0] sm:$0xff]
        %v382 = vld [vmem:[%s312 + $0xe8] sm:$0xff]
        %v383 = vld [vmem:[%s312 + $0xf0] sm:$0xff]
        %v384 = vld [vmem:[%s312 + $0xf8] sm:$0xff]
        %v385 = vld [vmem:[%s1] sm:$0x1]
        %v386 = vld [vmem:[%s2] sm:$0x1]
        %387 = vst [vmem:[#allocation2] sm:$0xff] 0.0
        %388 = vst [vmem:[#allocation2 + $0x8] sm:$0xff] 0.0
        %s389 = scalar_lea.vmem [#allocation2], 272
        %390 = vst [vmem:[%s389] sm:$0xff] 0.0
        %391 = vst [vmem:[%s389 + $0x8] sm:$0xff] 0.0
        %v393 = vlaneseq
        %v394 = vshrl.u32 %v393, 7
        %v395 = vsub.s32 0, %v394
        %v396 = vrot.slane %v385, %v395
        %v398 = vmul.f32 %v353, %v396
        %v399 = vmul.f32 %v354, %v396
        %v400 = vmul.f32 %v355, %v396
        %v401 = vmul.f32 %v356, %v396
        %v402 = vmul.f32 %v357, %v396
        %v403 = vmul.f32 %v358, %v396
        %v404 = vmul.f32 %v359, %v396
        %v405 = vmul.f32 %v360, %v396
        %v406 = vmul.f32 %v361, %v396
        %v407 = vmul.f32 %v362, %v396
        %v408 = vmul.f32 %v363, %v396
        %v409 = vmul.f32 %v364, %v396
        %v410 = vmul.f32 %v365, %v396
        %v411 = vmul.f32 %v366, %v396
        %v412 = vmul.f32 %v367, %v396
        %v413 = vmul.f32 %v368, %v396
        %v414 = vmul.f32 %v369, %v396
        %v415 = vmul.f32 %v370, %v396
        %v416 = vmul.f32 %v371, %v396
        %v417 = vmul.f32 %v372, %v396
        %v418 = vmul.f32 %v373, %v396
        %v419 = vmul.f32 %v374, %v396
        %v420 = vmul.f32 %v375, %v396
        %v421 = vmul.f32 %v376, %v396
        %v422 = vmul.f32 %v377, %v396
        %v423 = vmul.f32 %v378, %v396
        %v424 = vmul.f32 %v379, %v396
        %v425 = vmul.f32 %v380, %v396
        %v426 = vmul.f32 %v381, %v396
        %v427 = vmul.f32 %v382, %v396
        %v428 = vmul.f32 %v383, %v396
        %v429 = vmul.f32 %v384, %v396
        %v431 = vlaneseq
        %v432 = vshrl.u32 %v431, 7
        %v433 = vsub.s32 0, %v432
        %v434 = vrot.slane %v386, %v433
        %v436 = vadd.f32 %v398, %v434
        %v437 = vadd.f32 %v399, %v434
        %v438 = vadd.f32 %v400, %v434
        %v439 = vadd.f32 %v401, %v434
        %v440 = vadd.f32 %v402, %v434
        %v441 = vadd.f32 %v403, %v434
        %v442 = vadd.f32 %v404, %v434
        %v443 = vadd.f32 %v405, %v434
        %v444 = vadd.f32 %v406, %v434
        %v445 = vadd.f32 %v407, %v434
        %v446 = vadd.f32 %v408, %v434
        %v447 = vadd.f32 %v409, %v434
        %v448 = vadd.f32 %v410, %v434
        %v449 = vadd.f32 %v411, %v434
        %v450 = vadd.f32 %v412, %v434
        %v451 = vadd.f32 %v413, %v434
        %v452 = vadd.f32 %v414, %v434
        %v453 = vadd.f32 %v415, %v434
        %v454 = vadd.f32 %v416, %v434
        %v455 = vadd.f32 %v417, %v434
        %v456 = vadd.f32 %v418, %v434
        %v457 = vadd.f32 %v419, %v434
        %v458 = vadd.f32 %v420, %v434
        %v459 = vadd.f32 %v421, %v434
        %v460 = vadd.f32 %v422, %v434
        %v461 = vadd.f32 %v423, %v434
        %v462 = vadd.f32 %v424, %v434
        %v463 = vadd.f32 %v425, %v434
        %v464 = vadd.f32 %v426, %v434
        %v465 = vadd.f32 %v427, %v434
        %v466 = vadd.f32 %v428, %v434
        %v467 = vadd.f32 %v429, %v434
        %v468 = vmax.f32 %v436, 0.0
        %v469 = vmax.f32 %v437, 0.0
        %v470 = vmax.f32 %v438, 0.0
        %v471 = vmax.f32 %v439, 0.0
        %v472 = vmax.f32 %v440, 0.0
        %v473 = vmax.f32 %v441, 0.0
        %v474 = vmax.f32 %v442, 0.0
        %v475 = vmax.f32 %v443, 0.0
        %v476 = vmax.f32 %v444, 0.0
        %v477 = vmax.f32 %v445, 0.0
        %v478 = vmax.f32 %v446, 0.0
        %v479 = vmax.f32 %v447, 0.0
        %v480 = vmax.f32 %v448, 0.0
        %v481 = vmax.f32 %v449, 0.0
        %v482 = vmax.f32 %v450, 0.0
        %v483 = vmax.f32 %v451, 0.0
        %v484 = vmax.f32 %v452, 0.0
        %v485 = vmax.f32 %v453, 0.0
        %v486 = vmax.f32 %v454, 0.0
        %v487 = vmax.f32 %v455, 0.0
        %v488 = vmax.f32 %v456, 0.0
        %v489 = vmax.f32 %v457, 0.0
        %v490 = vmax.f32 %v458, 0.0
        %v491 = vmax.f32 %v459, 0.0
        %v492 = vmax.f32 %v460, 0.0
        %v493 = vmax.f32 %v461, 0.0
        %v494 = vmax.f32 %v462, 0.0
        %v495 = vmax.f32 %v463, 0.0
        %v496 = vmax.f32 %v464, 0.0
        %v497 = vmax.f32 %v465, 0.0
        %v498 = vmax.f32 %v466, 0.0
        %v499 = vmax.f32 %v467, 0.0
        %s500 = scalar_lea.vmem [#allocation2], 16
        %501 = vst [vmem:[%s500] sm:$0xff] %v468
        %502 = vst [vmem:[%s500 + $0x8] sm:$0xff] %v469
        %503 = vst [vmem:[%s500 + $0x10] sm:$0xff] %v470
        %504 = vst [vmem:[%s500 + $0x18] sm:$0xff] %v471
        %505 = vst [vmem:[%s500 + $0x20] sm:$0xff] %v472
        %506 = vst [vmem:[%s500 + $0x28] sm:$0xff] %v473
        %507 = vst [vmem:[%s500 + $0x30] sm:$0xff] %v474
        %508 = vst [vmem:[%s500 + $0x38] sm:$0xff] %v475
        %509 = vst [vmem:[%s500 + $0x40] sm:$0xff] %v476
        %510 = vst [vmem:[%s500 + $0x48] sm:$0xff] %v477
        %511 = vst [vmem:[%s500 + $0x50] sm:$0xff] %v478
        %512 = vst [vmem:[%s500 + $0x58] sm:$0xff] %v479
        %513 = vst [vmem:[%s500 + $0x60] sm:$0xff] %v480
        %514 = vst [vmem:[%s500 + $0x68] sm:$0xff] %v481
        %515 = vst [vmem:[%s500 + $0x70] sm:$0xff] %v482
        %516 = vst [vmem:[%s500 + $0x78] sm:$0xff] %v483
        %517 = vst [vmem:[%s500 + $0x80] sm:$0xff] %v484
        %518 = vst [vmem:[%s500 + $0x88] sm:$0xff] %v485
        %519 = vst [vmem:[%s500 + $0x90] sm:$0xff] %v486
        %520 = vst [vmem:[%s500 + $0x98] sm:$0xff] %v487
        %521 = vst [vmem:[%s500 + $0xa0] sm:$0xff] %v488
        %522 = vst [vmem:[%s500 + $0xa8] sm:$0xff] %v489
        %523 = vst [vmem:[%s500 + $0xb0] sm:$0xff] %v490
        %524 = vst [vmem:[%s500 + $0xb8] sm:$0xff] %v491
        %525 = vst [vmem:[%s500 + $0xc0] sm:$0xff] %v492
        %526 = vst [vmem:[%s500 + $0xc8] sm:$0xff] %v493
        %527 = vst [vmem:[%s500 + $0xd0] sm:$0xff] %v494
        %528 = vst [vmem:[%s500 + $0xd8] sm:$0xff] %v495
        %529 = vst [vmem:[%s500 + $0xe0] sm:$0xff] %v496
        %530 = vst [vmem:[%s500 + $0xe8] sm:$0xff] %v497
        %531 = vst [vmem:[%s500 + $0xf0] sm:$0xff] %v498
        %532 = vst [vmem:[%s500 + $0xf8] sm:$0xff] %v499
        %v533 = vld [vmem:[#allocation2] sm:$0xff]
        %v534 = vld [vmem:[#allocation2 + $0x8] sm:$0xff]
        %v535 = vld [vmem:[#allocation2 + $0x10] sm:$0xff]
        %v536 = vld [vmem:[#allocation2 + $0x18] sm:$0xff]
        %v537 = vld [vmem:[#allocation2 + $0x20] sm:$0xff]
        %v538 = vld [vmem:[#allocation2 + $0x28] sm:$0xff]
        %v539 = vld [vmem:[#allocation2 + $0x30] sm:$0xff]
        %v540 = vld [vmem:[#allocation2 + $0x38] sm:$0xff]
        %v541 = vld [vmem:[#allocation2 + $0x40] sm:$0xff]
        %v542 = vld [vmem:[#allocation2 + $0x48] sm:$0xff]
        %v543 = vld [vmem:[#allocation2 + $0x50] sm:$0xff]
        %v544 = vld [vmem:[#allocation2 + $0x58] sm:$0xff]
        %v545 = vld [vmem:[#allocation2 + $0x60] sm:$0xff]
        %v546 = vld [vmem:[#allocation2 + $0x68] sm:$0xff]
        %v547 = vld [vmem:[#allocation2 + $0x70] sm:$0xff]
        %v548 = vld [vmem:[#allocation2 + $0x78] sm:$0xff]
        %v549 = vld [vmem:[#allocation2 + $0x80] sm:$0xff]
        %v550 = vld [vmem:[#allocation2 + $0x88] sm:$0xff]
        %v551 = vld [vmem:[#allocation2 + $0x90] sm:$0xff]
        %v552 = vld [vmem:[#allocation2 + $0x98] sm:$0xff]
        %v553 = vld [vmem:[#allocation2 + $0xa0] sm:$0xff]
        %v554 = vld [vmem:[#allocation2 + $0xa8] sm:$0xff]
        %v555 = vld [vmem:[#allocation2 + $0xb0] sm:$0xff]
        %v556 = vld [vmem:[#allocation2 + $0xb8] sm:$0xff]
        %v557 = vld [vmem:[#allocation2 + $0xc0] sm:$0xff]
        %v558 = vld [vmem:[#allocation2 + $0xc8] sm:$0xff]
        %v559 = vld [vmem:[#allocation2 + $0xd0] sm:$0xff]
        %v560 = vld [vmem:[#allocation2 + $0xd8] sm:$0xff]
        %v561 = vld [vmem:[#allocation2 + $0xe0] sm:$0xff]
        %v562 = vld [vmem:[#allocation2 + $0xe8] sm:$0xff]
        %v563 = vld [vmem:[#allocation2 + $0xf0] sm:$0xff]
        %v564 = vld [vmem:[#allocation2 + $0xf8] sm:$0xff]
        %s565 = scalar_lea.vmem [#allocation7], 128
        %v566 = vld [vmem:[%s565] sm:$0xff]
        %v567 = vld [vmem:[%s565 + $0x8] sm:$0xff]
        %v568 = vld [vmem:[%s565 + $0x10] sm:$0xff]
        %v569 = vld [vmem:[%s565 + $0x18] sm:$0xff]
        %v570 = vld [vmem:[%s565 + $0x20] sm:$0xff]
        %v571 = vld [vmem:[%s565 + $0x28] sm:$0xff]
        %v572 = vld [vmem:[%s565 + $0x30] sm:$0xff]
        %v573 = vld [vmem:[%s565 + $0x38] sm:$0xff]
        %v574 = vld [vmem:[%s565 + $0x40] sm:$0xff]
        %v575 = vld [vmem:[%s565 + $0x48] sm:$0xff]
        %v576 = vld [vmem:[%s565 + $0x50] sm:$0xff]
        %v577 = vld [vmem:[%s565 + $0x58] sm:$0xff]
        %v578 = vld [vmem:[%s565 + $0x60] sm:$0xff]
        %v579 = vld [vmem:[%s565 + $0x68] sm:$0xff]
        %v580 = vld [vmem:[%s565 + $0x70] sm:$0xff]
        %v581 = vld [vmem:[%s565 + $0x78] sm:$0xff]
        %v582 = vld [vmem:[%s500] sm:$0xff]
        %v583 = vld [vmem:[%s500 + $0x8] sm:$0xff]
        %v584 = vld [vmem:[%s500 + $0x10] sm:$0xff]
        %v585 = vld [vmem:[%s500 + $0x18] sm:$0xff]
        %v586 = vld [vmem:[%s500 + $0x20] sm:$0xff]
        %v587 = vld [vmem:[%s500 + $0x28] sm:$0xff]
        %v588 = vld [vmem:[%s500 + $0x30] sm:$0xff]
        %v589 = vld [vmem:[%s500 + $0x38] sm:$0xff]
        %v590 = vld [vmem:[%s500 + $0x40] sm:$0xff]
        %v591 = vld [vmem:[%s500 + $0x48] sm:$0xff]
        %v592 = vld [vmem:[%s500 + $0x50] sm:$0xff]
        %v593 = vld [vmem:[%s500 + $0x58] sm:$0xff]
        %v594 = vld [vmem:[%s500 + $0x60] sm:$0xff]
        %v595 = vld [vmem:[%s500 + $0x68] sm:$0xff]
        %v596 = vld [vmem:[%s500 + $0x70] sm:$0xff]
        %v597 = vld [vmem:[%s500 + $0x78] sm:$0xff]
        %v598 = vld [vmem:[%s500 + $0x80] sm:$0xff]
        %v599 = vld [vmem:[%s500 + $0x88] sm:$0xff]
        %v600 = vld [vmem:[%s500 + $0x90] sm:$0xff]
        %v601 = vld [vmem:[%s500 + $0x98] sm:$0xff]
        %v602 = vld [vmem:[%s500 + $0xa0] sm:$0xff]
        %v603 = vld [vmem:[%s500 + $0xa8] sm:$0xff]
        %v604 = vld [vmem:[%s500 + $0xb0] sm:$0xff]
        %v605 = vld [vmem:[%s500 + $0xb8] sm:$0xff]
        %v606 = vld [vmem:[%s500 + $0xc0] sm:$0xff]
        %v607 = vld [vmem:[%s500 + $0xc8] sm:$0xff]
        %v608 = vld [vmem:[%s500 + $0xd0] sm:$0xff]
        %v609 = vld [vmem:[%s500 + $0xd8] sm:$0xff]
        %v610 = vld [vmem:[%s500 + $0xe0] sm:$0xff]
        %v611 = vld [vmem:[%s500 + $0xe8] sm:$0xff]
        %v612 = vld [vmem:[%s500 + $0xf0] sm:$0xff]
        %v613 = vld [vmem:[%s500 + $0xf8] sm:$0xff]
        %s614 = scalar_lea.vmem [#allocation7], 512
        %v615 = vld [vmem:[%s614] sm:$0xff]
        %v616 = vld [vmem:[%s614 + $0x8] sm:$0xff]
        %v617 = vld [vmem:[%s614 + $0x10] sm:$0xff]
        %v618 = vld [vmem:[%s614 + $0x18] sm:$0xff]
        %v619 = vld [vmem:[%s614 + $0x20] sm:$0xff]
        %v620 = vld [vmem:[%s614 + $0x28] sm:$0xff]
        %v621 = vld [vmem:[%s614 + $0x30] sm:$0xff]
        %v622 = vld [vmem:[%s614 + $0x38] sm:$0xff]
        %v623 = vld [vmem:[%s614 + $0x40] sm:$0xff]
        %v624 = vld [vmem:[%s614 + $0x48] sm:$0xff]
        %v625 = vld [vmem:[%s614 + $0x50] sm:$0xff]
        %v626 = vld [vmem:[%s614 + $0x58] sm:$0xff]
        %v627 = vld [vmem:[%s614 + $0x60] sm:$0xff]
        %v628 = vld [vmem:[%s614 + $0x68] sm:$0xff]
        %v629 = vld [vmem:[%s614 + $0x70] sm:$0xff]
        %v630 = vld [vmem:[%s614 + $0x78] sm:$0xff]
        %631 = vmatprep.subr.mxu0 0.0
        %632 = vmatpush1.msra.mxu0 %v615
        %633 = vmatprep.subr.mxu0 0.0
        %634 = vmatpush1.msra.mxu0 %v616
        %635 = vmatprep.subr.mxu0 0.0
        %636 = vmatpush1.msra.mxu0 %v617
        %637 = vmatprep.subr.mxu0 0.0
        %638 = vmatpush1.msra.mxu0 %v618
        %639 = vmatprep.subr.mxu0 0.0
        %640 = vmatpush1.msra.mxu0 %v619
        %641 = vmatprep.subr.mxu0 0.0
        %642 = vmatpush1.msra.mxu0 %v620
        %643 = vmatprep.subr.mxu0 0.0
        %644 = vmatpush1.msra.mxu0 %v621
        %645 = vmatprep.subr.mxu0 0.0
        %646 = vmatpush1.msra.mxu0 %v622
        %647 = vmatprep.subr.mxu0 0.0
        %648 = vmatpush1.msra.mxu0 %v623
        %649 = vmatprep.subr.mxu0 0.0
        %650 = vmatpush1.msra.mxu0 %v624
        %651 = vmatprep.subr.mxu0 0.0
        %652 = vmatpush1.msra.mxu0 %v625
        %653 = vmatprep.subr.mxu0 0.0
        %654 = vmatpush1.msra.mxu0 %v626
        %655 = vmatprep.subr.mxu0 0.0
        %656 = vmatpush1.msra.mxu0 %v627
        %657 = vmatprep.subr.mxu0 0.0
        %658 = vmatpush1.msra.mxu0 %v628
        %659 = vmatprep.subr.mxu0 0.0
        %660 = vmatpush1.msra.mxu0 %v629
        %661 = vmatprep.subr.mxu0 0.0
        %662 = vmatpush1.msra.mxu0 %v630
        %663 = vmatprep.subr.mxu0 0.0
        %664 = vmatpush1.msra.mxu0 0.0
        %665 = vmatprep.subr.mxu0 0.0
        %666 = vmatpush1.msra.mxu0 0.0
        %667 = vmatprep.subr.mxu0 0.0
        %668 = vmatpush1.msra.mxu0 0.0
        %669 = vmatprep.subr.mxu0 0.0
        %670 = vmatpush1.msra.mxu0 0.0
        %671 = vmatprep.subr.mxu0 0.0
        %672 = vmatpush1.msra.mxu0 0.0
        %673 = vmatprep.subr.mxu0 0.0
        %674 = vmatpush1.msra.mxu0 0.0
        %675 = vmatprep.subr.mxu0 0.0
        %676 = vmatpush1.msra.mxu0 0.0
        %677 = vmatprep.subr.mxu0 0.0
        %678 = vmatpush1.msra.mxu0 0.0
        %679 = vmatprep.subr.mxu0 0.0
        %680 = vmatpush1.msra.mxu0 0.0
        %681 = vmatprep.subr.mxu0 0.0
        %682 = vmatpush1.msra.mxu0 0.0
        %683 = vmatprep.subr.mxu0 0.0
        %684 = vmatpush1.msra.mxu0 0.0
        %685 = vmatprep.subr.mxu0 0.0
        %686 = vmatpush1.msra.mxu0 0.0
        %687 = vmatprep.subr.mxu0 0.0
        %688 = vmatpush1.msra.mxu0 0.0
        %689 = vmatprep.subr.mxu0 0.0
        %690 = vmatpush1.msra.mxu0 0.0
        %691 = vmatprep.subr.mxu0 0.0
        %692 = vmatpush1.msra.mxu0 0.0
        %693 = vmatprep.subr.mxu0 0.0
        %694 = vmatpush1.msra.mxu0 0.0
        %695 = vmatprep.mubr.f32.mxu0 0.0
        %696 = vmatmul.mubr.f32.gmra.mrb[0].mxu0 %v582
        %v697 = vpop.f32.mrb[0].mxu0
        %v698 = vadd.f32 0.0, %v697
        %v699 = vpop.f32.mrb[0].mxu0
        %700 = vmatprep.mubr.f32.mxu0 0.0
        %701 = vmatmul.mubr.f32.gmra.mrb[0].mxu0 %v583
        %v702 = vpop.f32.mrb[0].mxu0
        %v703 = vadd.f32 0.0, %v702
        %v704 = vpop.f32.mrb[0].mxu0
        %705 = vmatprep.mubr.f32.mxu0 0.0
        %706 = vmatmul.mubr.f32.gmra.mrb[0].mxu0 %v584
        %v707 = vpop.f32.mrb[0].mxu0
        %v708 = vadd.f32 0.0, %v707
        %v709 = vpop.f32.mrb[0].mxu0
        %710 = vmatprep.mubr.f32.mxu0 0.0
        %711 = vmatmul.mubr.f32.gmra.mrb[0].mxu0 %v585
        %v712 = vpop.f32.mrb[0].mxu0
        %v713 = vadd.f32 0.0, %v712
        %v714 = vpop.f32.mrb[0].mxu0
        %715 = vmatprep.mubr.f32.mxu0 0.0
        %716 = vmatmul.mubr.f32.gmra.mrb[0].mxu0 %v586
        %v717 = vpop.f32.mrb[0].mxu0
        %v718 = vadd.f32 0.0, %v717
        %v719 = vpop.f32.mrb[0].mxu0
        %720 = vmatprep.mubr.f32.mxu0 0.0
        %721 = vmatmul.mubr.f32.gmra.mrb[0].mxu0 %v587
        %v722 = vpop.f32.mrb[0].mxu0
        %v723 = vadd.f32 0.0, %v722
        %v724 = vpop.f32.mrb[0].mxu0
        %725 = vmatprep.mubr.f32.mxu0 0.0
        %726 = vmatmul.mubr.f32.gmra.mrb[0].mxu0 %v588
        %v727 = vpop.f32.mrb[0].mxu0
        %v728 = vadd.f32 0.0, %v727
        %v729 = vpop.f32.mrb[0].mxu0
        %730 = vmatprep.mubr.f32.mxu0 0.0
        %731 = vmatmul.mubr.f32.gmra.mrb[0].mxu0 %v589
        %v732 = vpop.f32.mrb[0].mxu0
        %v733 = vadd.f32 0.0, %v732
        %v734 = vpop.f32.mrb[0].mxu0
        %735 = vmatprep.mubr.f32.mxu0 0.0
        %736 = vmatmul.mubr.f32.gmra.mrb[0].mxu0 %v590
        %v737 = vpop.f32.mrb[0].mxu0
        %v738 = vadd.f32 0.0, %v737
        %v739 = vpop.f32.mrb[0].mxu0
        %740 = vmatprep.mubr.f32.mxu0 0.0
        %741 = vmatmul.mubr.f32.gmra.mrb[0].mxu0 %v591
        %v742 = vpop.f32.mrb[0].mxu0
        %v743 = vadd.f32 0.0, %v742
        %v744 = vpop.f32.mrb[0].mxu0
        %745 = vmatprep.mubr.f32.mxu0 0.0
        %746 = vmatmul.mubr.f32.gmra.mrb[0].mxu0 %v592
        %v747 = vpop.f32.mrb[0].mxu0
        %v748 = vadd.f32 0.0, %v747
        %v749 = vpop.f32.mrb[0].mxu0
        %750 = vmatprep.mubr.f32.mxu0 0.0
        %751 = vmatmul.mubr.f32.gmra.mrb[0].mxu0 %v593
        %v752 = vpop.f32.mrb[0].mxu0
        %v753 = vadd.f32 0.0, %v752
        %v754 = vpop.f32.mrb[0].mxu0
        %755 = vmatprep.mubr.f32.mxu0 0.0
        %756 = vmatmul.mubr.f32.gmra.mrb[0].mxu0 %v594
        %v757 = vpop.f32.mrb[0].mxu0
        %v758 = vadd.f32 0.0, %v757
        %v759 = vpop.f32.mrb[0].mxu0
        %760 = vmatprep.mubr.f32.mxu0 0.0
        %761 = vmatmul.mubr.f32.gmra.mrb[0].mxu0 %v595
        %v762 = vpop.f32.mrb[0].mxu0
        %v763 = vadd.f32 0.0, %v762
        %v764 = vpop.f32.mrb[0].mxu0
        %765 = vmatprep.mubr.f32.mxu0 0.0
        %766 = vmatmul.mubr.f32.gmra.mrb[0].mxu0 %v596
        %v767 = vpop.f32.mrb[0].mxu0
        %v768 = vadd.f32 0.0, %v767
        %v769 = vpop.f32.mrb[0].mxu0
        %770 = vmatprep.mubr.f32.mxu0 0.0
        %771 = vmatmul.mubr.f32.gmra.mrb[0].mxu0 %v597
        %v772 = vpop.f32.mrb[0].mxu0
        %v773 = vadd.f32 0.0, %v772
        %v774 = vpop.f32.mrb[0].mxu0
        %775 = vmatprep.mubr.f32.mxu0 0.0
        %776 = vmatmul.mubr.f32.gmra.mrb[0].mxu0 %v598
        %v777 = vpop.f32.mrb[0].mxu0
        %v778 = vadd.f32 0.0, %v777
        %v779 = vpop.f32.mrb[0].mxu0
        %780 = vmatprep.mubr.f32.mxu0 0.0
        %781 = vmatmul.mubr.f32.gmra.mrb[0].mxu0 %v599
        %v782 = vpop.f32.mrb[0].mxu0
        %v783 = vadd.f32 0.0, %v782
        %v784 = vpop.f32.mrb[0].mxu0
        %785 = vmatprep.mubr.f32.mxu0 0.0
        %786 = vmatmul.mubr.f32.gmra.mrb[0].mxu0 %v600
        %v787 = vpop.f32.mrb[0].mxu0
        %v788 = vadd.f32 0.0, %v787
        %v789 = vpop.f32.mrb[0].mxu0
        %790 = vmatprep.mubr.f32.mxu0 0.0
        %791 = vmatmul.mubr.f32.gmra.mrb[0].mxu0 %v601
        %v792 = vpop.f32.mrb[0].mxu0
        %v793 = vadd.f32 0.0, %v792
        %v794 = vpop.f32.mrb[0].mxu0
        %795 = vmatprep.mubr.f32.mxu0 0.0
        %796 = vmatmul.mubr.f32.gmra.mrb[0].mxu0 %v602
        %v797 = vpop.f32.mrb[0].mxu0
        %v798 = vadd.f32 0.0, %v797
        %v799 = vpop.f32.mrb[0].mxu0
        %800 = vmatprep.mubr.f32.mxu0 0.0
        %801 = vmatmul.mubr.f32.gmra.mrb[0].mxu0 %v603
        %v802 = vpop.f32.mrb[0].mxu0
        %v803 = vadd.f32 0.0, %v802
        %v804 = vpop.f32.mrb[0].mxu0
        %805 = vmatprep.mubr.f32.mxu0 0.0
        %806 = vmatmul.mubr.f32.gmra.mrb[0].mxu0 %v604
        %v807 = vpop.f32.mrb[0].mxu0
        %v808 = vadd.f32 0.0, %v807
        %v809 = vpop.f32.mrb[0].mxu0
        %810 = vmatprep.mubr.f32.mxu0 0.0
        %811 = vmatmul.mubr.f32.gmra.mrb[0].mxu0 %v605
        %v812 = vpop.f32.mrb[0].mxu0
        %v813 = vadd.f32 0.0, %v812
        %v814 = vpop.f32.mrb[0].mxu0
        %815 = vmatprep.mubr.f32.mxu0 0.0
        %816 = vmatmul.mubr.f32.gmra.mrb[0].mxu0 %v606
        %v817 = vpop.f32.mrb[0].mxu0
        %v818 = vadd.f32 0.0, %v817
        %v819 = vpop.f32.mrb[0].mxu0
        %820 = vmatprep.mubr.f32.mxu0 0.0
        %821 = vmatmul.mubr.f32.gmra.mrb[0].mxu0 %v607
        %v822 = vpop.f32.mrb[0].mxu0
        %v823 = vadd.f32 0.0, %v822
        %v824 = vpop.f32.mrb[0].mxu0
        %825 = vmatprep.mubr.f32.mxu0 0.0
        %826 = vmatmul.mubr.f32.gmra.mrb[0].mxu0 %v608
        %v827 = vpop.f32.mrb[0].mxu0
        %v828 = vadd.f32 0.0, %v827
        %v829 = vpop.f32.mrb[0].mxu0
        %830 = vmatprep.mubr.f32.mxu0 0.0
        %831 = vmatmul.mubr.f32.gmra.mrb[0].mxu0 %v609
        %v832 = vpop.f32.mrb[0].mxu0
        %v833 = vadd.f32 0.0, %v832
        %v834 = vpop.f32.mrb[0].mxu0
        %835 = vmatprep.mubr.f32.mxu0 0.0
        %836 = vmatmul.mubr.f32.gmra.mrb[0].mxu0 %v610
        %v837 = vpop.f32.mrb[0].mxu0
        %v838 = vadd.f32 0.0, %v837
        %v839 = vpop.f32.mrb[0].mxu0
        %840 = vmatprep.mubr.f32.mxu0 0.0
        %841 = vmatmul.mubr.f32.gmra.mrb[0].mxu0 %v611
        %v842 = vpop.f32.mrb[0].mxu0
        %v843 = vadd.f32 0.0, %v842
        %v844 = vpop.f32.mrb[0].mxu0
        %845 = vmatprep.mubr.f32.mxu0 0.0
        %846 = vmatmul.mubr.f32.gmra.mrb[0].mxu0 %v612
        %v847 = vpop.f32.mrb[0].mxu0
        %v848 = vadd.f32 0.0, %v847
        %v849 = vpop.f32.mrb[0].mxu0
        %850 = vmatprep.mubr.f32.mxu0 0.0
        %851 = vmatmul.mubr.f32.gmra.mrb[0].mxu0 %v613
        %v852 = vpop.f32.mrb[0].mxu0
        %v853 = vadd.f32 0.0, %v852
        %v854 = vpop.f32.mrb[0].mxu0
        %855 = vdwg.mxu0
        %856 = vmatprep.subr.mxu0 0.0
        %857 = vmatpush1.msra.mxu0 %v566
        %858 = vmatprep.subr.mxu0 0.0
        %859 = vmatpush1.msra.mxu0 %v567
        %860 = vmatprep.subr.mxu0 0.0
        %861 = vmatpush1.msra.mxu0 %v568
        %862 = vmatprep.subr.mxu0 0.0
        %863 = vmatpush1.msra.mxu0 %v569
        %864 = vmatprep.subr.mxu0 0.0
        %865 = vmatpush1.msra.mxu0 %v570
        %866 = vmatprep.subr.mxu0 0.0
        %867 = vmatpush1.msra.mxu0 %v571
        %868 = vmatprep.subr.mxu0 0.0
        %869 = vmatpush1.msra.mxu0 %v572
        %870 = vmatprep.subr.mxu0 0.0
        %871 = vmatpush1.msra.mxu0 %v573
        %872 = vmatprep.subr.mxu0 0.0
        %873 = vmatpush1.msra.mxu0 %v574
        %874 = vmatprep.subr.mxu0 0.0
        %875 = vmatpush1.msra.mxu0 %v575
        %876 = vmatprep.subr.mxu0 0.0
        %877 = vmatpush1.msra.mxu0 %v576
        %878 = vmatprep.subr.mxu0 0.0
        %879 = vmatpush1.msra.mxu0 %v577
        %880 = vmatprep.subr.mxu0 0.0
        %881 = vmatpush1.msra.mxu0 %v578
        %882 = vmatprep.subr.mxu0 0.0
        %883 = vmatpush1.msra.mxu0 %v579
        %884 = vmatprep.subr.mxu0 0.0
        %885 = vmatpush1.msra.mxu0 %v580
        %886 = vmatprep.subr.mxu0 0.0
        %887 = vmatpush1.msra.mxu0 %v581
        %888 = vmatprep.subr.mxu0 0.0
        %889 = vmatpush1.msra.mxu0 0.0
        %890 = vmatprep.subr.mxu0 0.0
        %891 = vmatpush1.msra.mxu0 0.0
        %892 = vmatprep.subr.mxu0 0.0
        %893 = vmatpush1.msra.mxu0 0.0
        %894 = vmatprep.subr.mxu0 0.0
        %895 = vmatpush1.msra.mxu0 0.0
        %896 = vmatprep.subr.mxu0 0.0
        %897 = vmatpush1.msra.mxu0 0.0
        %898 = vmatprep.subr.mxu0 0.0
        %899 = vmatpush1.msra.mxu0 0.0
        %900 = vmatprep.subr.mxu0 0.0
        %901 = vmatpush1.msra.mxu0 0.0
        %902 = vmatprep.subr.mxu0 0.0
        %903 = vmatpush1.msra.mxu0 0.0
        %904 = vmatprep.subr.mxu0 0.0
        %905 = vmatpush1.msra.mxu0 0.0
        %906 = vmatprep.subr.mxu0 0.0
        %907 = vmatpush1.msra.mxu0 0.0
        %908 = vmatprep.subr.mxu0 0.0
        %909 = vmatpush1.msra.mxu0 0.0
        %910 = vmatprep.subr.mxu0 0.0
        %911 = vmatpush1.msra.mxu0 0.0
        %912 = vmatprep.subr.mxu0 0.0
        %913 = vmatpush1.msra.mxu0 0.0
        %914 = vmatprep.subr.mxu0 0.0
        %915 = vmatpush1.msra.mxu0 0.0
        %916 = vmatprep.subr.mxu0 0.0
        %917 = vmatpush1.msra.mxu0 0.0
        %918 = vmatprep.subr.mxu0 0.0
        %919 = vmatpush1.msra.mxu0 0.0
        %920 = vmatprep.mubr.f32.mxu0 0.0
        %921 = vmatmul.mubr.f32.gmra.mrb[0].mxu0 %v533
        %v922 = vpop.f32.mrb[0].mxu0
        %v923 = vadd.f32 %v698, %v922
        %v924 = vpop.f32.mrb[0].mxu0
        %925 = vmatprep.mubr.f32.mxu0 0.0
        %926 = vmatmul.mubr.f32.gmra.mrb[0].mxu0 %v534
        %v927 = vpop.f32.mrb[0].mxu0
        %v928 = vadd.f32 %v703, %v927
        %v929 = vpop.f32.mrb[0].mxu0
        %930 = vmatprep.mubr.f32.mxu0 0.0
        %931 = vmatmul.mubr.f32.gmra.mrb[0].mxu0 %v535
        %v932 = vpop.f32.mrb[0].mxu0
        %v933 = vadd.f32 %v708, %v932
        %v934 = vpop.f32.mrb[0].mxu0
        %935 = vmatprep.mubr.f32.mxu0 0.0
        %936 = vmatmul.mubr.f32.gmra.mrb[0].mxu0 %v536
        %v937 = vpop.f32.mrb[0].mxu0
        %v938 = vadd.f32 %v713, %v937
        %v939 = vpop.f32.mrb[0].mxu0
        %940 = vmatprep.mubr.f32.mxu0 0.0
        %941 = vmatmul.mubr.f32.gmra.mrb[0].mxu0 %v537
        %v942 = vpop.f32.mrb[0].mxu0
        %v943 = vadd.f32 %v718, %v942
        %v944 = vpop.f32.mrb[0].mxu0
        %945 = vmatprep.mubr.f32.mxu0 0.0
        %946 = vmatmul.mubr.f32.gmra.mrb[0].mxu0 %v538
        %v947 = vpop.f32.mrb[0].mxu0
        %v948 = vadd.f32 %v723, %v947
        %v949 = vpop.f32.mrb[0].mxu0
        %950 = vmatprep.mubr.f32.mxu0 0.0
        %951 = vmatmul.mubr.f32.gmra.mrb[0].mxu0 %v539
        %v952 = vpop.f32.mrb[0].mxu0
        %v953 = vadd.f32 %v728, %v952
        %v954 = vpop.f32.mrb[0].mxu0
        %955 = vmatprep.mubr.f32.mxu0 0.0
        %956 = vmatmul.mubr.f32.gmra.mrb[0].mxu0 %v540
        %v957 = vpop.f32.mrb[0].mxu0
        %v958 = vadd.f32 %v733, %v957
        %v959 = vpop.f32.mrb[0].mxu0
        %960 = vmatprep.mubr.f32.mxu0 0.0
        %961 = vmatmul.mubr.f32.gmra.mrb[0].mxu0 %v541
        %v962 = vpop.f32.mrb[0].mxu0
        %v963 = vadd.f32 %v738, %v962
        %v964 = vpop.f32.mrb[0].mxu0
        %965 = vmatprep.mubr.f32.mxu0 0.0
        %966 = vmatmul.mubr.f32.gmra.mrb[0].mxu0 %v542
        %v967 = vpop.f32.mrb[0].mxu0
        %v968 = vadd.f32 %v743, %v967
        %v969 = vpop.f32.mrb[0].mxu0
        %970 = vmatprep.mubr.f32.mxu0 0.0
        %971 = vmatmul.mubr.f32.gmra.mrb[0].mxu0 %v543
        %v972 = vpop.f32.mrb[0].mxu0
        %v973 = vadd.f32 %v748, %v972
        %v974 = vpop.f32.mrb[0].mxu0
        %975 = vmatprep.mubr.f32.mxu0 0.0
        %976 = vmatmul.mubr.f32.gmra.mrb[0].mxu0 %v544
        %v977 = vpop.f32.mrb[0].mxu0
        %v978 = vadd.f32 %v753, %v977
        %v979 = vpop.f32.mrb[0].mxu0
        %980 = vmatprep.mubr.f32.mxu0 0.0
        %981 = vmatmul.mubr.f32.gmra.mrb[0].mxu0 %v545
        %v982 = vpop.f32.mrb[0].mxu0
        %v983 = vadd.f32 %v758, %v982
        %v984 = vpop.f32.mrb[0].mxu0
        %985 = vmatprep.mubr.f32.mxu0 0.0
        %986 = vmatmul.mubr.f32.gmra.mrb[0].mxu0 %v546
        %v987 = vpop.f32.mrb[0].mxu0
        %v988 = vadd.f32 %v763, %v987
        %v989 = vpop.f32.mrb[0].mxu0
        %990 = vmatprep.mubr.f32.mxu0 0.0
        %991 = vmatmul.mubr.f32.gmra.mrb[0].mxu0 %v547
        %v992 = vpop.f32.mrb[0].mxu0
        %v993 = vadd.f32 %v768, %v992
        %v994 = vpop.f32.mrb[0].mxu0
        %995 = vmatprep.mubr.f32.mxu0 0.0
        %996 = vmatmul.mubr.f32.gmra.mrb[0].mxu0 %v548
        %v997 = vpop.f32.mrb[0].mxu0
        %v998 = vadd.f32 %v773, %v997
        %v999 = vpop.f32.mrb[0].mxu0
        %1000 = vmatprep.mubr.f32.mxu0 0.0
        %1001 = vmatmul.mubr.f32.gmra.mrb[0].mxu0 %v549
        %v1002 = vpop.f32.mrb[0].mxu0
        %v1003 = vadd.f32 %v778, %v1002
        %v1004 = vpop.f32.mrb[0].mxu0
        %1005 = vmatprep.mubr.f32.mxu0 0.0
        %1006 = vmatmul.mubr.f32.gmra.mrb[0].mxu0 %v550
        %v1007 = vpop.f32.mrb[0].mxu0
        %v1008 = vadd.f32 %v783, %v1007
        %v1009 = vpop.f32.mrb[0].mxu0
        %1010 = vmatprep.mubr.f32.mxu0 0.0
        %1011 = vmatmul.mubr.f32.gmra.mrb[0].mxu0 %v551
        %v1012 = vpop.f32.mrb[0].mxu0
        %v1013 = vadd.f32 %v788, %v1012
        %v1014 = vpop.f32.mrb[0].mxu0
        %1015 = vmatprep.mubr.f32.mxu0 0.0
        %1016 = vmatmul.mubr.f32.gmra.mrb[0].mxu0 %v552
        %v1017 = vpop.f32.mrb[0].mxu0
        %v1018 = vadd.f32 %v793, %v1017
        %v1019 = vpop.f32.mrb[0].mxu0
        %1020 = vmatprep.mubr.f32.mxu0 0.0
        %1021 = vmatmul.mubr.f32.gmra.mrb[0].mxu0 %v553
        %v1022 = vpop.f32.mrb[0].mxu0
        %v1023 = vadd.f32 %v798, %v1022
        %v1024 = vpop.f32.mrb[0].mxu0
        %1025 = vmatprep.mubr.f32.mxu0 0.0
        %1026 = vmatmul.mubr.f32.gmra.mrb[0].mxu0 %v554
        %v1027 = vpop.f32.mrb[0].mxu0
        %v1028 = vadd.f32 %v803, %v1027
        %v1029 = vpop.f32.mrb[0].mxu0
        %1030 = vmatprep.mubr.f32.mxu0 0.0
        %1031 = vmatmul.mubr.f32.gmra.mrb[0].mxu0 %v555
        %v1032 = vpop.f32.mrb[0].mxu0
        %v1033 = vadd.f32 %v808, %v1032
        %v1034 = vpop.f32.mrb[0].mxu0
        %1035 = vmatprep.mubr.f32.mxu0 0.0
        %1036 = vmatmul.mubr.f32.gmra.mrb[0].mxu0 %v556
        %v1037 = vpop.f32.mrb[0].mxu0
        %v1038 = vadd.f32 %v813, %v1037
        %v1039 = vpop.f32.mrb[0].mxu0
        %1040 = vmatprep.mubr.f32.mxu0 0.0
        %1041 = vmatmul.mubr.f32.gmra.mrb[0].mxu0 %v557
        %v1042 = vpop.f32.mrb[0].mxu0
        %v1043 = vadd.f32 %v818, %v1042
        %v1044 = vpop.f32.mrb[0].mxu0
        %1045 = vmatprep.mubr.f32.mxu0 0.0
        %1046 = vmatmul.mubr.f32.gmra.mrb[0].mxu0 %v558
        %v1047 = vpop.f32.mrb[0].mxu0
        %v1048 = vadd.f32 %v823, %v1047
        %v1049 = vpop.f32.mrb[0].mxu0
        %1050 = vmatprep.mubr.f32.mxu0 0.0
        %1051 = vmatmul.mubr.f32.gmra.mrb[0].mxu0 %v559
        %v1052 = vpop.f32.mrb[0].mxu0
        %v1053 = vadd.f32 %v828, %v1052
        %v1054 = vpop.f32.mrb[0].mxu0
        %1055 = vmatprep.mubr.f32.mxu0 0.0
        %1056 = vmatmul.mubr.f32.gmra.mrb[0].mxu0 %v560
        %v1057 = vpop.f32.mrb[0].mxu0
        %v1058 = vadd.f32 %v833, %v1057
        %v1059 = vpop.f32.mrb[0].mxu0
        %1060 = vmatprep.mubr.f32.mxu0 0.0
        %1061 = vmatmul.mubr.f32.gmra.mrb[0].mxu0 %v561
        %v1062 = vpop.f32.mrb[0].mxu0
        %v1063 = vadd.f32 %v838, %v1062
        %v1064 = vpop.f32.mrb[0].mxu0
        %1065 = vmatprep.mubr.f32.mxu0 0.0
        %1066 = vmatmul.mubr.f32.gmra.mrb[0].mxu0 %v562
        %v1067 = vpop.f32.mrb[0].mxu0
        %v1068 = vadd.f32 %v843, %v1067
        %v1069 = vpop.f32.mrb[0].mxu0
        %1070 = vmatprep.mubr.f32.mxu0 0.0
        %1071 = vmatmul.mubr.f32.gmra.mrb[0].mxu0 %v563
        %v1072 = vpop.f32.mrb[0].mxu0
        %v1073 = vadd.f32 %v848, %v1072
        %v1074 = vpop.f32.mrb[0].mxu0
        %1075 = vmatprep.mubr.f32.mxu0 0.0
        %1076 = vmatmul.mubr.f32.gmra.mrb[0].mxu0 %v564
        %v1077 = vpop.f32.mrb[0].mxu0
        %v1078 = vadd.f32 %v853, %v1077
        %v1079 = vpop.f32.mrb[0].mxu0
        %1080 = vdwg.mxu0
        %s1081 = scalar_lea.vmem [#allocation2], 32
        %v1082 = vld [vmem:[%s1081] sm:$0xff]
        %v1083 = vld [vmem:[%s1081 + $0x8] sm:$0xff]
        %v1084 = vld [vmem:[%s1081 + $0x10] sm:$0xff]
        %v1085 = vld [vmem:[%s1081 + $0x18] sm:$0xff]
        %v1086 = vld [vmem:[%s1081 + $0x20] sm:$0xff]
        %v1087 = vld [vmem:[%s1081 + $0x28] sm:$0xff]
        %v1088 = vld [vmem:[%s1081 + $0x30] sm:$0xff]
        %v1089 = vld [vmem:[%s1081 + $0x38] sm:$0xff]
        %v1090 = vld [vmem:[%s1081 + $0x40] sm:$0xff]
        %v1091 = vld [vmem:[%s1081 + $0x48] sm:$0xff]
        %v1092 = vld [vmem:[%s1081 + $0x50] sm:$0xff]
        %v1093 = vld [vmem:[%s1081 + $0x58] sm:$0xff]
        %v1094 = vld [vmem:[%s1081 + $0x60] sm:$0xff]
        %v1095 = vld [vmem:[%s1081 + $0x68] sm:$0xff]
        %v1096 = vld [vmem:[%s1081 + $0x70] sm:$0xff]
        %v1097 = vld [vmem:[%s1081 + $0x78] sm:$0xff]
        %v1098 = vld [vmem:[%s1081 + $0x80] sm:$0xff]
        %v1099 = vld [vmem:[%s1081 + $0x88] sm:$0xff]
        %v1100 = vld [vmem:[%s1081 + $0x90] sm:$0xff]
        %v1101 = vld [vmem:[%s1081 + $0x98] sm:$0xff]
        %v1102 = vld [vmem:[%s1081 + $0xa0] sm:$0xff]
        %v1103 = vld [vmem:[%s1081 + $0xa8] sm:$0xff]
        %v1104 = vld [vmem:[%s1081 + $0xb0] sm:$0xff]
        %v1105 = vld [vmem:[%s1081 + $0xb8] sm:$0xff]
        %v1106 = vld [vmem:[%s1081 + $0xc0] sm:$0xff]
        %v1107 = vld [vmem:[%s1081 + $0xc8] sm:$0xff]
        %v1108 = vld [vmem:[%s1081 + $0xd0] sm:$0xff]
        %v1109 = vld [vmem:[%s1081 + $0xd8] sm:$0xff]
        %v1110 = vld [vmem:[%s1081 + $0xe0] sm:$0xff]
        %v1111 = vld [vmem:[%s1081 + $0xe8] sm:$0xff]
        %v1112 = vld [vmem:[%s1081 + $0xf0] sm:$0xff]
        %v1113 = vld [vmem:[%s1081 + $0xf8] sm:$0xff]
        %s1114 = scalar_lea.vmem [#allocation7], 896
        %v1115 = vld [vmem:[%s1114] sm:$0xff]
        %v1116 = vld [vmem:[%s1114 + $0x8] sm:$0xff]
        %v1117 = vld [vmem:[%s1114 + $0x10] sm:$0xff]
        %v1118 = vld [vmem:[%s1114 + $0x18] sm:$0xff]
        %v1119 = vld [vmem:[%s1114 + $0x20] sm:$0xff]
        %v1120 = vld [vmem:[%s1114 + $0x28] sm:$0xff]
        %v1121 = vld [vmem:[%s1114 + $0x30] sm:$0xff]
        %v1122 = vld [vmem:[%s1114 + $0x38] sm:$0xff]
        %v1123 = vld [vmem:[%s1114 + $0x40] sm:$0xff]
        %v1124 = vld [vmem:[%s1114 + $0x48] sm:$0xff]
        %v1125 = vld [vmem:[%s1114 + $0x50] sm:$0xff]
        %v1126 = vld [vmem:[%s1114 + $0x58] sm:$0xff]
        %v1127 = vld [vmem:[%s1114 + $0x60] sm:$0xff]
        %v1128 = vld [vmem:[%s1114 + $0x68] sm:$0xff]
        %v1129 = vld [vmem:[%s1114 + $0x70] sm:$0xff]
        %v1130 = vld [vmem:[%s1114 + $0x78] sm:$0xff]
        %1131 = vmatprep.subr.mxu0 0.0
        %1132 = vmatpush1.msra.mxu0 %v1115
        %1133 = vmatprep.subr.mxu0 0.0
        %1134 = vmatpush1.msra.mxu0 %v1116
        %1135 = vmatprep.subr.mxu0 0.0
        %1136 = vmatpush1.msra.mxu0 %v1117
        %1137 = vmatprep.subr.mxu0 0.0
        %1138 = vmatpush1.msra.mxu0 %v1118
        %1139 = vmatprep.subr.mxu0 0.0
        %1140 = vmatpush1.msra.mxu0 %v1119
        %1141 = vmatprep.subr.mxu0 0.0
        %1142 = vmatpush1.msra.mxu0 %v1120
        %1143 = vmatprep.subr.mxu0 0.0
        %1144 = vmatpush1.msra.mxu0 %v1121
        %1145 = vmatprep.subr.mxu0 0.0
        %1146 = vmatpush1.msra.mxu0 %v1122
        %1147 = vmatprep.subr.mxu0 0.0
        %1148 = vmatpush1.msra.mxu0 %v1123
        %1149 = vmatprep.subr.mxu0 0.0
        %1150 = vmatpush1.msra.mxu0 %v1124
        %1151 = vmatprep.subr.mxu0 0.0
        %1152 = vmatpush1.msra.mxu0 %v1125
        %1153 = vmatprep.subr.mxu0 0.0
        %1154 = vmatpush1.msra.mxu0 %v1126
        %1155 = vmatprep.subr.mxu0 0.0
        %1156 = vmatpush1.msra.mxu0 %v1127
        %1157 = vmatprep.subr.mxu0 0.0
        %1158 = vmatpush1.msra.mxu0 %v1128
        %1159 = vmatprep.subr.mxu0 0.0
        %1160 = vmatpush1.msra.mxu0 %v1129
        %1161 = vmatprep.subr.mxu0 0.0
        %1162 = vmatpush1.msra.mxu0 %v1130
        %1163 = vmatprep.subr.mxu0 0.0
        %1164 = vmatpush1.msra.mxu0 0.0
        %1165 = vmatprep.subr.mxu0 0.0
        %1166 = vmatpush1.msra.mxu0 0.0
        %1167 = vmatprep.subr.mxu0 0.0
        %1168 = vmatpush1.msra.mxu0 0.0
        %1169 = vmatprep.subr.mxu0 0.0
        %1170 = vmatpush1.msra.mxu0 0.0
        %1171 = vmatprep.subr.mxu0 0.0
        %1172 = vmatpush1.msra.mxu0 0.0
        %1173 = vmatprep.subr.mxu0 0.0
        %1174 = vmatpush1.msra.mxu0 0.0
        %1175 = vmatprep.subr.mxu0 0.0
        %1176 = vmatpush1.msra.mxu0 0.0
        %1177 = vmatprep.subr.mxu0 0.0
        %1178 = vmatpush1.msra.mxu0 0.0
        %1179 = vmatprep.subr.mxu0 0.0
        %1180 = vmatpush1.msra.mxu0 0.0
        %1181 = vmatprep.subr.mxu0 0.0
        %1182 = vmatpush1.msra.mxu0 0.0
        %1183 = vmatprep.subr.mxu0 0.0
        %1184 = vmatpush1.msra.mxu0 0.0
        %1185 = vmatprep.subr.mxu0 0.0
        %1186 = vmatpush1.msra.mxu0 0.0
        %1187 = vmatprep.subr.mxu0 0.0
        %1188 = vmatpush1.msra.mxu0 0.0
        %1189 = vmatprep.subr.mxu0 0.0
        %1190 = vmatpush1.msra.mxu0 0.0
        %1191 = vmatprep.subr.mxu0 0.0
        %1192 = vmatpush1.msra.mxu0 0.0
        %1193 = vmatprep.subr.mxu0 0.0
        %1194 = vmatpush1.msra.mxu0 0.0
        %1195 = vmatprep.mubr.f32.mxu0 0.0
        %1196 = vmatmul.mubr.f32.gmra.mrb[0].mxu0 %v1082
        %v1197 = vpop.f32.mrb[0].mxu0
        %v1198 = vadd.f32 0.0, %v1197
        %v1199 = vpop.f32.mrb[0].mxu0
        %1200 = vmatprep.mubr.f32.mxu0 0.0
        %1201 = vmatmul.mubr.f32.gmra.mrb[0].mxu0 %v1083
        %v1202 = vpop.f32.mrb[0].mxu0
        %v1203 = vadd.f32 0.0, %v1202
        %v1204 = vpop.f32.mrb[0].mxu0
        %1205 = vmatprep.mubr.f32.mxu0 0.0
        %1206 = vmatmul.mubr.f32.gmra.mrb[0].mxu0 %v1084
        %v1207 = vpop.f32.mrb[0].mxu0
        %v1208 = vadd.f32 0.0, %v1207
        %v1209 = vpop.f32.mrb[0].mxu0
        %1210 = vmatprep.mubr.f32.mxu0 0.0
        %1211 = vmatmul.mubr.f32.gmra.mrb[0].mxu0 %v1085
        %v1212 = vpop.f32.mrb[0].mxu0
        %v1213 = vadd.f32 0.0, %v1212
        %v1214 = vpop.f32.mrb[0].mxu0
        %1215 = vmatprep.mubr.f32.mxu0 0.0
        %1216 = vmatmul.mubr.f32.gmra.mrb[0].mxu0 %v1086
        %v1217 = vpop.f32.mrb[0].mxu0
        %v1218 = vadd.f32 0.0, %v1217
        %v1219 = vpop.f32.mrb[0].mxu0
        %1220 = vmatprep.mubr.f32.mxu0 0.0
        %1221 = vmatmul.mubr.f32.gmra.mrb[0].mxu0 %v1087
        %v1222 = vpop.f32.mrb[0].mxu0
        %v1223 = vadd.f32 0.0, %v1222
        %v1224 = vpop.f32.mrb[0].mxu0
        %1225 = vmatprep.mubr.f32.mxu0 0.0
        %1226 = vmatmul.mubr.f32.gmra.mrb[0].mxu0 %v1088
        %v1227 = vpop.f32.mrb[0].mxu0
        %v1228 = vadd.f32 0.0, %v1227
        %v1229 = vpop.f32.mrb[0].mxu0
        %1230 = vmatprep.mubr.f32.mxu0 0.0
        %1231 = vmatmul.mubr.f32.gmra.mrb[0].mxu0 %v1089
        %v1232 = vpop.f32.mrb[0].mxu0
        %v1233 = vadd.f32 0.0, %v1232
        %v1234 = vpop.f32.mrb[0].mxu0
        %1235 = vmatprep.mubr.f32.mxu0 0.0
        %1236 = vmatmul.mubr.f32.gmra.mrb[0].mxu0 %v1090
        %v1237 = vpop.f32.mrb[0].mxu0
        %v1238 = vadd.f32 0.0, %v1237
        %v1239 = vpop.f32.mrb[0].mxu0
        %1240 = vmatprep.mubr.f32.mxu0 0.0
        %1241 = vmatmul.mubr.f32.gmra.mrb[0].mxu0 %v1091
        %v1242 = vpop.f32.mrb[0].mxu0
        %v1243 = vadd.f32 0.0, %v1242
        %v1244 = vpop.f32.mrb[0].mxu0
        %1245 = vmatprep.mubr.f32.mxu0 0.0
        %1246 = vmatmul.mubr.f32.gmra.mrb[0].mxu0 %v1092
        %v1247 = vpop.f32.mrb[0].mxu0
        %v1248 = vadd.f32 0.0, %v1247
        %v1249 = vpop.f32.mrb[0].mxu0
        %1250 = vmatprep.mubr.f32.mxu0 0.0
        %1251 = vmatmul.mubr.f32.gmra.mrb[0].mxu0 %v1093
        %v1252 = vpop.f32.mrb[0].mxu0
        %v1253 = vadd.f32 0.0, %v1252
        %v1254 = vpop.f32.mrb[0].mxu0
        %1255 = vmatprep.mubr.f32.mxu0 0.0
        %1256 = vmatmul.mubr.f32.gmra.mrb[0].mxu0 %v1094
        %v1257 = vpop.f32.mrb[0].mxu0
        %v1258 = vadd.f32 0.0, %v1257
        %v1259 = vpop.f32.mrb[0].mxu0
        %1260 = vmatprep.mubr.f32.mxu0 0.0
        %1261 = vmatmul.mubr.f32.gmra.mrb[0].mxu0 %v1095
        %v1262 = vpop.f32.mrb[0].mxu0
        %v1263 = vadd.f32 0.0, %v1262
        %v1264 = vpop.f32.mrb[0].mxu0
        %1265 = vmatprep.mubr.f32.mxu0 0.0
        %1266 = vmatmul.mubr.f32.gmra.mrb[0].mxu0 %v1096
        %v1267 = vpop.f32.mrb[0].mxu0
        %v1268 = vadd.f32 0.0, %v1267
        %v1269 = vpop.f32.mrb[0].mxu0
        %1270 = vmatprep.mubr.f32.mxu0 0.0
        %1271 = vmatmul.mubr.f32.gmra.mrb[0].mxu0 %v1097
        %v1272 = vpop.f32.mrb[0].mxu0
        %v1273 = vadd.f32 0.0, %v1272
        %v1274 = vpop.f32.mrb[0].mxu0
        %1275 = vmatprep.mubr.f32.mxu0 0.0
        %1276 = vmatmul.mubr.f32.gmra.mrb[0].mxu0 %v1098
        %v1277 = vpop.f32.mrb[0].mxu0
        %v1278 = vadd.f32 0.0, %v1277
        %v1279 = vpop.f32.mrb[0].mxu0
        %1280 = vmatprep.mubr.f32.mxu0 0.0
        %1281 = vmatmul.mubr.f32.gmra.mrb[0].mxu0 %v1099
        %v1282 = vpop.f32.mrb[0].mxu0
        %v1283 = vadd.f32 0.0, %v1282
        %v1284 = vpop.f32.mrb[0].mxu0
        %1285 = vmatprep.mubr.f32.mxu0 0.0
        %1286 = vmatmul.mubr.f32.gmra.mrb[0].mxu0 %v1100
        %v1287 = vpop.f32.mrb[0].mxu0
        %v1288 = vadd.f32 0.0, %v1287
        %v1289 = vpop.f32.mrb[0].mxu0
        %1290 = vmatprep.mubr.f32.mxu0 0.0
        %1291 = vmatmul.mubr.f32.gmra.mrb[0].mxu0 %v1101
        %v1292 = vpop.f32.mrb[0].mxu0
        %v1293 = vadd.f32 0.0, %v1292
        %v1294 = vpop.f32.mrb[0].mxu0
        %1295 = vmatprep.mubr.f32.mxu0 0.0
        %1296 = vmatmul.mubr.f32.gmra.mrb[0].mxu0 %v1102
        %v1297 = vpop.f32.mrb[0].mxu0
        %v1298 = vadd.f32 0.0, %v1297
        %v1299 = vpop.f32.mrb[0].mxu0
        %1300 = vmatprep.mubr.f32.mxu0 0.0
        %1301 = vmatmul.mubr.f32.gmra.mrb[0].mxu0 %v1103
        %v1302 = vpop.f32.mrb[0].mxu0
        %v1303 = vadd.f32 0.0, %v1302
        %v1304 = vpop.f32.mrb[0].mxu0
        %1305 = vmatprep.mubr.f32.mxu0 0.0
        %1306 = vmatmul.mubr.f32.gmra.mrb[0].mxu0 %v1104
        %v1307 = vpop.f32.mrb[0].mxu0
        %v1308 = vadd.f32 0.0, %v1307
        %v1309 = vpop.f32.mrb[0].mxu0
        %1310 = vmatprep.mubr.f32.mxu0 0.0
        %1311 = vmatmul.mubr.f32.gmra.mrb[0].mxu0 %v1105
        %v1312 = vpop.f32.mrb[0].mxu0
        %v1313 = vadd.f32 0.0, %v1312
        %v1314 = vpop.f32.mrb[0].mxu0
        %1315 = vmatprep.mubr.f32.mxu0 0.0
        %1316 = vmatmul.mubr.f32.gmra.mrb[0].mxu0 %v1106
        %v1317 = vpop.f32.mrb[0].mxu0
        %v1318 = vadd.f32 0.0, %v1317
        %v1319 = vpop.f32.mrb[0].mxu0
        %1320 = vmatprep.mubr.f32.mxu0 0.0
        %1321 = vmatmul.mubr.f32.gmra.mrb[0].mxu0 %v1107
        %v1322 = vpop.f32.mrb[0].mxu0
        %v1323 = vadd.f32 0.0, %v1322
        %v1324 = vpop.f32.mrb[0].mxu0
        %1325 = vmatprep.mubr.f32.mxu0 0.0
        %1326 = vmatmul.mubr.f32.gmra.mrb[0].mxu0 %v1108
        %v1327 = vpop.f32.mrb[0].mxu0
        %v1328 = vadd.f32 0.0, %v1327
        %v1329 = vpop.f32.mrb[0].mxu0
        %1330 = vmatprep.mubr.f32.mxu0 0.0
        %1331 = vmatmul.mubr.f32.gmra.mrb[0].mxu0 %v1109
        %v1332 = vpop.f32.mrb[0].mxu0
        %v1333 = vadd.f32 0.0, %v1332
        %v1334 = vpop.f32.mrb[0].mxu0
        %1335 = vmatprep.mubr.f32.mxu0 0.0
        %1336 = vmatmul.mubr.f32.gmra.mrb[0].mxu0 %v1110
        %v1337 = vpop.f32.mrb[0].mxu0
        %v1338 = vadd.f32 0.0, %v1337
        %v1339 = vpop.f32.mrb[0].mxu0
        %1340 = vmatprep.mubr.f32.mxu0 0.0
        %1341 = vmatmul.mubr.f32.gmra.mrb[0].mxu0 %v1111
        %v1342 = vpop.f32.mrb[0].mxu0
        %v1343 = vadd.f32 0.0, %v1342
        %v1344 = vpop.f32.mrb[0].mxu0
        %1345 = vmatprep.mubr.f32.mxu0 0.0
        %1346 = vmatmul.mubr.f32.gmra.mrb[0].mxu0 %v1112
        %v1347 = vpop.f32.mrb[0].mxu0
        %v1348 = vadd.f32 0.0, %v1347
        %v1349 = vpop.f32.mrb[0].mxu0
        %1350 = vmatprep.mubr.f32.mxu0 0.0
        %1351 = vmatmul.mubr.f32.gmra.mrb[0].mxu0 %v1113
        %v1352 = vpop.f32.mrb[0].mxu0
        %v1353 = vadd.f32 0.0, %v1352
        %v1354 = vpop.f32.mrb[0].mxu0
        %1355 = vdwg.mxu0
        %v1356 = vadd.f32 %v923, %v1198
        %v1357 = vadd.f32 %v928, %v1203
        %v1358 = vadd.f32 %v933, %v1208
        %v1359 = vadd.f32 %v938, %v1213
        %v1360 = vadd.f32 %v943, %v1218
        %v1361 = vadd.f32 %v948, %v1223
        %v1362 = vadd.f32 %v953, %v1228
        %v1363 = vadd.f32 %v958, %v1233
        %v1364 = vadd.f32 %v963, %v1238
        %v1365 = vadd.f32 %v968, %v1243
        %v1366 = vadd.f32 %v973, %v1248
        %v1367 = vadd.f32 %v978, %v1253
        %v1368 = vadd.f32 %v983, %v1258
        %v1369 = vadd.f32 %v988, %v1263
        %v1370 = vadd.f32 %v993, %v1268
        %v1371 = vadd.f32 %v998, %v1273
        %v1372 = vadd.f32 %v1003, %v1278
        %v1373 = vadd.f32 %v1008, %v1283
        %v1374 = vadd.f32 %v1013, %v1288
        %v1375 = vadd.f32 %v1018, %v1293
        %v1376 = vadd.f32 %v1023, %v1298
        %v1377 = vadd.f32 %v1028, %v1303
        %v1378 = vadd.f32 %v1033, %v1308
        %v1379 = vadd.f32 %v1038, %v1313
        %v1380 = vadd.f32 %v1043, %v1318
        %v1381 = vadd.f32 %v1048, %v1323
        %v1382 = vadd.f32 %v1053, %v1328
        %v1383 = vadd.f32 %v1058, %v1333
        %v1384 = vadd.f32 %v1063, %v1338
        %v1385 = vadd.f32 %v1068, %v1343
        %v1386 = vadd.f32 %v1073, %v1348
        %v1387 = vadd.f32 %v1078, %v1353
        %1388 = vst [vmem:[#allocation3 + $0x1] sm:$0xff] %v1356
        %1389 = vst [vmem:[#allocation3 + $0x9] sm:$0xff] %v1357
        %1390 = vst [vmem:[#allocation3 + $0x19] sm:$0xff] %v1358
        %1391 = vst [vmem:[#allocation3 + $0x21] sm:$0xff] %v1359
        %1392 = vst [vmem:[#allocation3 + $0x31] sm:$0xff] %v1360
        %1393 = vst [vmem:[#allocation3 + $0x39] sm:$0xff] %v1361
        %1394 = vst [vmem:[#allocation3 + $0x49] sm:$0xff] %v1362
        %1395 = vst [vmem:[#allocation3 + $0x51] sm:$0xff] %v1363
        %1396 = vst [vmem:[#allocation3 + $0x61] sm:$0xff] %v1364
        %1397 = vst [vmem:[#allocation3 + $0x69] sm:$0xff] %v1365
        %1398 = vst [vmem:[#allocation3 + $0x79] sm:$0xff] %v1366
        %1399 = vst [vmem:[#allocation3 + $0x81] sm:$0xff] %v1367
        %1400 = vst [vmem:[#allocation3 + $0x91] sm:$0xff] %v1368
        %1401 = vst [vmem:[#allocation3 + $0x99] sm:$0xff] %v1369
        %1402 = vst [vmem:[#allocation3 + $0xa9] sm:$0xff] %v1370
        %1403 = vst [vmem:[#allocation3 + $0xb1] sm:$0xff] %v1371
        %1404 = vst [vmem:[#allocation3 + $0xc1] sm:$0xff] %v1372
        %1405 = vst [vmem:[#allocation3 + $0xc9] sm:$0xff] %v1373
        %1406 = vst [vmem:[#allocation3 + $0xd9] sm:$0xff] %v1374
        %1407 = vst [vmem:[#allocation3 + $0xe1] sm:$0xff] %v1375
        %1408 = vst [vmem:[#allocation3 + $0xf1] sm:$0xff] %v1376
        %1409 = vst [vmem:[#allocation3 + $0xf9] sm:$0xff] %v1377
        %1410 = vst [vmem:[#allocation3 + $0x109] sm:$0xff] %v1378
        %1411 = vst [vmem:[#allocation3 + $0x111] sm:$0xff] %v1379
        %1412 = vst [vmem:[#allocation3 + $0x121] sm:$0xff] %v1380
        %1413 = vst [vmem:[#allocation3 + $0x129] sm:$0xff] %v1381
        %1414 = vst [vmem:[#allocation3 + $0x139] sm:$0xff] %v1382
        %1415 = vst [vmem:[#allocation3 + $0x141] sm:$0xff] %v1383
        %1416 = vst [vmem:[#allocation3 + $0x151] sm:$0xff] %v1384
        %1417 = vst [vmem:[#allocation3 + $0x159] sm:$0xff] %v1385
        %1418 = vst [vmem:[#allocation3 + $0x169] sm:$0xff] %v1386
        %1419 = vst [vmem:[#allocation3 + $0x171] sm:$0xff] %v1387
        %v1420 = vld [vmem:[#allocation3 + $0x2] sm:$0xff]
        %v1421 = vld [vmem:[#allocation3 + $0xa] sm:$0xff]
        %v1422 = vld [vmem:[#allocation3 + $0x1a] sm:$0xff]
        %v1423 = vld [vmem:[#allocation3 + $0x22] sm:$0xff]
        %v1424 = vld [vmem:[#allocation3 + $0x32] sm:$0xff]
        %v1425 = vld [vmem:[#allocation3 + $0x3a] sm:$0xff]
        %v1426 = vld [vmem:[#allocation3 + $0x4a] sm:$0xff]
        %v1427 = vld [vmem:[#allocation3 + $0x52] sm:$0xff]
        %v1428 = vld [vmem:[#allocation3 + $0x62] sm:$0xff]
        %v1429 = vld [vmem:[#allocation3 + $0x6a] sm:$0xff]
        %v1430 = vld [vmem:[#allocation3 + $0x7a] sm:$0xff]
        %v1431 = vld [vmem:[#allocation3 + $0x82] sm:$0xff]
        %v1432 = vld [vmem:[#allocation3 + $0x92] sm:$0xff]
        %v1433 = vld [vmem:[#allocation3 + $0x9a] sm:$0xff]
        %v1434 = vld [vmem:[#allocation3 + $0xaa] sm:$0xff]
        %v1435 = vld [vmem:[#allocation3 + $0xb2] sm:$0xff]
        %v1436 = vld [vmem:[#allocation3 + $0xc2] sm:$0xff]
        %v1437 = vld [vmem:[#allocation3 + $0xca] sm:$0xff]
        %v1438 = vld [vmem:[#allocation3 + $0xda] sm:$0xff]
        %v1439 = vld [vmem:[#allocation3 + $0xe2] sm:$0xff]
        %v1440 = vld [vmem:[#allocation3 + $0xf2] sm:$0xff]
        %v1441 = vld [vmem:[#allocation3 + $0xfa] sm:$0xff]
        %v1442 = vld [vmem:[#allocation3 + $0x10a] sm:$0xff]
        %v1443 = vld [vmem:[#allocation3 + $0x112] sm:$0xff]
        %v1444 = vld [vmem:[#allocation3 + $0x122] sm:$0xff]
        %v1445 = vld [vmem:[#allocation3 + $0x12a] sm:$0xff]
        %v1446 = vld [vmem:[#allocation3 + $0x13a] sm:$0xff]
        %v1447 = vld [vmem:[#allocation3 + $0x142] sm:$0xff]
        %v1448 = vld [vmem:[#allocation3 + $0x152] sm:$0xff]
        %v1449 = vld [vmem:[#allocation3 + $0x15a] sm:$0xff]
        %v1450 = vld [vmem:[#allocation3 + $0x16a] sm:$0xff]
        %v1451 = vld [vmem:[#allocation3 + $0x172] sm:$0xff]
        %v1452 = vld [vmem:[#allocation2] sm:$0xff]
        %v1453 = vld [vmem:[#allocation2 + $0x8] sm:$0xff]
        %v1454 = vld [vmem:[#allocation2 + $0x10] sm:$0xff]
        %v1455 = vld [vmem:[#allocation2 + $0x18] sm:$0xff]
        %v1456 = vld [vmem:[#allocation2 + $0x20] sm:$0xff]
        %v1457 = vld [vmem:[#allocation2 + $0x28] sm:$0xff]
        %v1458 = vld [vmem:[#allocation2 + $0x30] sm:$0xff]
        %v1459 = vld [vmem:[#allocation2 + $0x38] sm:$0xff]
        %v1460 = vld [vmem:[#allocation2 + $0x40] sm:$0xff]
        %v1461 = vld [vmem:[#allocation2 + $0x48] sm:$0xff]
        %v1462 = vld [vmem:[#allocation2 + $0x50] sm:$0xff]
        %v1463 = vld [vmem:[#allocation2 + $0x58] sm:$0xff]
        %v1464 = vld [vmem:[#allocation2 + $0x60] sm:$0xff]
        %v1465 = vld [vmem:[#allocation2 + $0x68] sm:$0xff]
        %v1466 = vld [vmem:[#allocation2 + $0x70] sm:$0xff]
        %v1467 = vld [vmem:[#allocation2 + $0x78] sm:$0xff]
        %v1468 = vld [vmem:[#allocation2 + $0x80] sm:$0xff]
        %v1469 = vld [vmem:[#allocation2 + $0x88] sm:$0xff]
        %v1470 = vld [vmem:[#allocation2 + $0x90] sm:$0xff]
        %v1471 = vld [vmem:[#allocation2 + $0x98] sm:$0xff]
        %v1472 = vld [vmem:[#allocation2 + $0xa0] sm:$0xff]
        %v1473 = vld [vmem:[#allocation2 + $0xa8] sm:$0xff]
        %v1474 = vld [vmem:[#allocation2 + $0xb0] sm:$0xff]
        %v1475 = vld [vmem:[#allocation2 + $0xb8] sm:$0xff]
        %v1476 = vld [vmem:[#allocation2 + $0xc0] sm:$0xff]
        %v1477 = vld [vmem:[#allocation2 + $0xc8] sm:$0xff]
        %v1478 = vld [vmem:[#allocation2 + $0xd0] sm:$0xff]
        %v1479 = vld [vmem:[#allocation2 + $0xd8] sm:$0xff]
        %v1480 = vld [vmem:[#allocation2 + $0xe0] sm:$0xff]
        %v1481 = vld [vmem:[#allocation2 + $0xe8] sm:$0xff]
        %v1482 = vld [vmem:[#allocation2 + $0xf0] sm:$0xff]
        %v1483 = vld [vmem:[#allocation2 + $0xf8] sm:$0xff]
        %v1484 = vld [vmem:[#allocation7] sm:$0xff]
        %v1485 = vld [vmem:[#allocation7 + $0x8] sm:$0xff]
        %v1486 = vld [vmem:[#allocation7 + $0x10] sm:$0xff]
        %v1487 = vld [vmem:[#allocation7 + $0x18] sm:$0xff]
        %v1488 = vld [vmem:[#allocation7 + $0x20] sm:$0xff]
        %v1489 = vld [vmem:[#allocation7 + $0x28] sm:$0xff]
        %v1490 = vld [vmem:[#allocation7 + $0x30] sm:$0xff]
        %v1491 = vld [vmem:[#allocation7 + $0x38] sm:$0xff]
        %v1492 = vld [vmem:[#allocation7 + $0x40] sm:$0xff]
        %v1493 = vld [vmem:[#allocation7 + $0x48] sm:$0xff]
        %v1494 = vld [vmem:[#allocation7 + $0x50] sm:$0xff]
        %v1495 = vld [vmem:[#allocation7 + $0x58] sm:$0xff]
        %v1496 = vld [vmem:[#allocation7 + $0x60] sm:$0xff]
        %v1497 = vld [vmem:[#allocation7 + $0x68] sm:$0xff]
        %v1498 = vld [vmem:[#allocation7 + $0x70] sm:$0xff]
        %v1499 = vld [vmem:[#allocation7 + $0x78] sm:$0xff]
        %v1500 = vld [vmem:[%s500] sm:$0xff]
        %v1501 = vld [vmem:[%s500 + $0x8] sm:$0xff]
        %v1502 = vld [vmem:[%s500 + $0x10] sm:$0xff]
        %v1503 = vld [vmem:[%s500 + $0x18] sm:$0xff]
        %v1504 = vld [vmem:[%s500 + $0x20] sm:$0xff]
        %v1505 = vld [vmem:[%s500 + $0x28] sm:$0xff]
        %v1506 = vld [vmem:[%s500 + $0x30] sm:$0xff]
        %v1507 = vld [vmem:[%s500 + $0x38] sm:$0xff]
        %v1508 = vld [vmem:[%s500 + $0x40] sm:$0xff]
        %v1509 = vld [vmem:[%s500 + $0x48] sm:$0xff]
        %v1510 = vld [vmem:[%s500 + $0x50] sm:$0xff]
        %v1511 = vld [vmem:[%s500 + $0x58] sm:$0xff]
        %v1512 = vld [vmem:[%s500 + $0x60] sm:$0xff]
        %v1513 = vld [vmem:[%s500 + $0x68] sm:$0xff]
        %v1514 = vld [vmem:[%s500 + $0x70] sm:$0xff]
        %v1515 = vld [vmem:[%s500 + $0x78] sm:$0xff]
        %v1516 = vld [vmem:[%s500 + $0x80] sm:$0xff]
        %v1517 = vld [vmem:[%s500 + $0x88] sm:$0xff]
        %v1518 = vld [vmem:[%s500 + $0x90] sm:$0xff]
        %v1519 = vld [vmem:[%s500 + $0x98] sm:$0xff]
        %v1520 = vld [vmem:[%s500 + $0xa0] sm:$0xff]
        %v1521 = vld [vmem:[%s500 + $0xa8] sm:$0xff]
        %v1522 = vld [vmem:[%s500 + $0xb0] sm:$0xff]
        %v1523 = vld [vmem:[%s500 + $0xb8] sm:$0xff]
        %v1524 = vld [vmem:[%s500 + $0xc0] sm:$0xff]
        %v1525 = vld [vmem:[%s500 + $0xc8] sm:$0xff]
        %v1526 = vld [vmem:[%s500 + $0xd0] sm:$0xff]
        %v1527 = vld [vmem:[%s500 + $0xd8] sm:$0xff]
        %v1528 = vld [vmem:[%s500 + $0xe0] sm:$0xff]
        %v1529 = vld [vmem:[%s500 + $0xe8] sm:$0xff]
        %v1530 = vld [vmem:[%s500 + $0xf0] sm:$0xff]
        %v1531 = vld [vmem:[%s500 + $0xf8] sm:$0xff]
        %s1532 = scalar_lea.vmem [#allocation7], 384
        %v1533 = vld [vmem:[%s1532] sm:$0xff]
        %v1534 = vld [vmem:[%s1532 + $0x8] sm:$0xff]
        %v1535 = vld [vmem:[%s1532 + $0x10] sm:$0xff]
        %v1536 = vld [vmem:[%s1532 + $0x18] sm:$0xff]
        %v1537 = vld [vmem:[%s1532 + $0x20] sm:$0xff]
        %v1538 = vld [vmem:[%s1532 + $0x28] sm:$0xff]
        %v1539 = vld [vmem:[%s1532 + $0x30] sm:$0xff]
        %v1540 = vld [vmem:[%s1532 + $0x38] sm:$0xff]
        %v1541 = vld [vmem:[%s1532 + $0x40] sm:$0xff]
        %v1542 = vld [vmem:[%s1532 + $0x48] sm:$0xff]
        %v1543 = vld [vmem:[%s1532 + $0x50] sm:$0xff]
        %v1544 = vld [vmem:[%s1532 + $0x58] sm:$0xff]
        %v1545 = vld [vmem:[%s1532 + $0x60] sm:$0xff]
        %v1546 = vld [vmem:[%s1532 + $0x68] sm:$0xff]
        %v1547 = vld [vmem:[%s1532 + $0x70] sm:$0xff]
        %v1548 = vld [vmem:[%s1532 + $0x78] sm:$0xff]
        %1549 = vmatprep.subr.mxu0 0.0
        %1550 = vmatpush1.msra.mxu0 %v1533
        %1551 = vmatprep.subr.mxu0 0.0
        %1552 = vmatpush1.msra.mxu0 %v1534
        %1553 = vmatprep.subr.mxu0 0.0
        %1554 = vmatpush1.msra.mxu0 %v1535
        %1555 = vmatprep.subr.mxu0 0.0
        %1556 = vmatpush1.msra.mxu0 %v1536
        %1557 = vmatprep.subr.mxu0 0.0
        %1558 = vmatpush1.msra.mxu0 %v1537
        %1559 = vmatprep.subr.mxu0 0.0
        %1560 = vmatpush1.msra.mxu0 %v1538
        %1561 = vmatprep.subr.mxu0 0.0
        %1562 = vmatpush1.msra.mxu0 %v1539
        %1563 = vmatprep.subr.mxu0 0.0
        %1564 = vmatpush1.msra.mxu0 %v1540
        %1565 = vmatprep.subr.mxu0 0.0
        %1566 = vmatpush1.msra.mxu0 %v1541
        %1567 = vmatprep.subr.mxu0 0.0
        %1568 = vmatpush1.msra.mxu0 %v1542
        %1569 = vmatprep.subr.mxu0 0.0
        %1570 = vmatpush1.msra.mxu0 %v1543
        %1571 = vmatprep.subr.mxu0 0.0
        %1572 = vmatpush1.msra.mxu0 %v1544
        %1573 = vmatprep.subr.mxu0 0.0
        %1574 = vmatpush1.msra.mxu0 %v1545
        %1575 = vmatprep.subr.mxu0 0.0
        %1576 = vmatpush1.msra.mxu0 %v1546
        %1577 = vmatprep.subr.mxu0 0.0
        %1578 = vmatpush1.msra.mxu0 %v1547
        %1579 = vmatprep.subr.mxu0 0.0
        %1580 = vmatpush1.msra.mxu0 %v1548
        %1581 = vmatprep.subr.mxu0 0.0
        %1582 = vmatpush1.msra.mxu0 0.0
        %1583 = vmatprep.subr.mxu0 0.0
        %1584 = vmatpush1.msra.mxu0 0.0
        %1585 = vmatprep.subr.mxu0 0.0
        %1586 = vmatpush1.msra.mxu0 0.0
        %1587 = vmatprep.subr.mxu0 0.0
        %1588 = vmatpush1.msra.mxu0 0.0
        %1589 = vmatprep.subr.mxu0 0.0
        %1590 = vmatpush1.msra.mxu0 0.0
        %1591 = vmatprep.subr.mxu0 0.0
        %1592 = vmatpush1.msra.mxu0 0.0
        %1593 = vmatprep.subr.mxu0 0.0
        %1594 = vmatpush1.msra.mxu0 0.0
        %1595 = vmatprep.subr.mxu0 0.0
        %1596 = vmatpush1.msra.mxu0 0.0
        %1597 = vmatprep.subr.mxu0 0.0
        %1598 = vmatpush1.msra.mxu0 0.0
        %1599 = vmatprep.subr.mxu0 0.0
        %1600 = vmatpush1.msra.mxu0 0.0
        %1601 = vmatprep.subr.mxu0 0.0
        %1602 = vmatpush1.msra.mxu0 0.0
        %1603 = vmatprep.subr.mxu0 0.0
        %1604 = vmatpush1.msra.mxu0 0.0
        %1605 = vmatprep.subr.mxu0 0.0
        %1606 = vmatpush1.msra.mxu0 0.0
        %1607 = vmatprep.subr.mxu0 0.0
        %1608 = vmatpush1.msra.mxu0 0.0
        %1609 = vmatprep.subr.mxu0 0.0
        %1610 = vmatpush1.msra.mxu0 0.0
        %1611 = vmatprep.subr.mxu0 0.0
        %1612 = vmatpush1.msra.mxu0 0.0
        %1613 = vmatprep.mubr.f32.mxu0 0.0
        %1614 = vmatmul.mubr.f32.gmra.mrb[0].mxu0 %v1500
        %v1615 = vpop.f32.mrb[0].mxu0
        %v1616 = vadd.f32 0.0, %v1615
        %v1617 = vpop.f32.mrb[0].mxu0
        %1618 = vmatprep.mubr.f32.mxu0 0.0
        %1619 = vmatmul.mubr.f32.gmra.mrb[0].mxu0 %v1501
        %v1620 = vpop.f32.mrb[0].mxu0
        %v1621 = vadd.f32 0.0, %v1620
        %v1622 = vpop.f32.mrb[0].mxu0
        %1623 = vmatprep.mubr.f32.mxu0 0.0
        %1624 = vmatmul.mubr.f32.gmra.mrb[0].mxu0 %v1502
        %v1625 = vpop.f32.mrb[0].mxu0
        %v1626 = vadd.f32 0.0, %v1625
        %v1627 = vpop.f32.mrb[0].mxu0
        %1628 = vmatprep.mubr.f32.mxu0 0.0
        %1629 = vmatmul.mubr.f32.gmra.mrb[0].mxu0 %v1503
        %v1630 = vpop.f32.mrb[0].mxu0
        %v1631 = vadd.f32 0.0, %v1630
        %v1632 = vpop.f32.mrb[0].mxu0
        %1633 = vmatprep.mubr.f32.mxu0 0.0
        %1634 = vmatmul.mubr.f32.gmra.mrb[0].mxu0 %v1504
        %v1635 = vpop.f32.mrb[0].mxu0
        %v1636 = vadd.f32 0.0, %v1635
        %v1637 = vpop.f32.mrb[0].mxu0
        %1638 = vmatprep.mubr.f32.mxu0 0.0
        %1639 = vmatmul.mubr.f32.gmra.mrb[0].mxu0 %v1505
        %v1640 = vpop.f32.mrb[0].mxu0
        %v1641 = vadd.f32 0.0, %v1640
        %v1642 = vpop.f32.mrb[0].mxu0
        %1643 = vmatprep.mubr.f32.mxu0 0.0
        %1644 = vmatmul.mubr.f32.gmra.mrb[0].mxu0 %v1506
        %v1645 = vpop.f32.mrb[0].mxu0
        %v1646 = vadd.f32 0.0, %v1645
        %v1647 = vpop.f32.mrb[0].mxu0
        %1648 = vmatprep.mubr.f32.mxu0 0.0
        %1649 = vmatmul.mubr.f32.gmra.mrb[0].mxu0 %v1507
        %v1650 = vpop.f32.mrb[0].mxu0
        %v1651 = vadd.f32 0.0, %v1650
        %v1652 = vpop.f32.mrb[0].mxu0
        %1653 = vmatprep.mubr.f32.mxu0 0.0
        %1654 = vmatmul.mubr.f32.gmra.mrb[0].mxu0 %v1508
        %v1655 = vpop.f32.mrb[0].mxu0
        %v1656 = vadd.f32 0.0, %v1655
        %v1657 = vpop.f32.mrb[0].mxu0
        %1658 = vmatprep.mubr.f32.mxu0 0.0
        %1659 = vmatmul.mubr.f32.gmra.mrb[0].mxu0 %v1509
        %v1660 = vpop.f32.mrb[0].mxu0
        %v1661 = vadd.f32 0.0, %v1660
        %v1662 = vpop.f32.mrb[0].mxu0
        %1663 = vmatprep.mubr.f32.mxu0 0.0
        %1664 = vmatmul.mubr.f32.gmra.mrb[0].mxu0 %v1510
        %v1665 = vpop.f32.mrb[0].mxu0
        %v1666 = vadd.f32 0.0, %v1665
        %v1667 = vpop.f32.mrb[0].mxu0
        %1668 = vmatprep.mubr.f32.mxu0 0.0
        %1669 = vmatmul.mubr.f32.gmra.mrb[0].mxu0 %v1511
        %v1670 = vpop.f32.mrb[0].mxu0
        %v1671 = vadd.f32 0.0, %v1670
        %v1672 = vpop.f32.mrb[0].mxu0
        %1673 = vmatprep.mubr.f32.mxu0 0.0
        %1674 = vmatmul.mubr.f32.gmra.mrb[0].mxu0 %v1512
        %v1675 = vpop.f32.mrb[0].mxu0
        %v1676 = vadd.f32 0.0, %v1675
        %v1677 = vpop.f32.mrb[0].mxu0
        %1678 = vmatprep.mubr.f32.mxu0 0.0
        %1679 = vmatmul.mubr.f32.gmra.mrb[0].mxu0 %v1513
        %v1680 = vpop.f32.mrb[0].mxu0
        %v1681 = vadd.f32 0.0, %v1680
        %v1682 = vpop.f32.mrb[0].mxu0
        %1683 = vmatprep.mubr.f32.mxu0 0.0
        %1684 = vmatmul.mubr.f32.gmra.mrb[0].mxu0 %v1514
        %v1685 = vpop.f32.mrb[0].mxu0
        %v1686 = vadd.f32 0.0, %v1685
        %v1687 = vpop.f32.mrb[0].mxu0
        %1688 = vmatprep.mubr.f32.mxu0 0.0
        %1689 = vmatmul.mubr.f32.gmra.mrb[0].mxu0 %v1515
        %v1690 = vpop.f32.mrb[0].mxu0
        %v1691 = vadd.f32 0.0, %v1690
        %v1692 = vpop.f32.mrb[0].mxu0
        %1693 = vmatprep.mubr.f32.mxu0 0.0
        %1694 = vmatmul.mubr.f32.gmra.mrb[0].mxu0 %v1516
        %v1695 = vpop.f32.mrb[0].mxu0
        %v1696 = vadd.f32 0.0, %v1695
        %v1697 = vpop.f32.mrb[0].mxu0
        %1698 = vmatprep.mubr.f32.mxu0 0.0
        %1699 = vmatmul.mubr.f32.gmra.mrb[0].mxu0 %v1517
        %v1700 = vpop.f32.mrb[0].mxu0
        %v1701 = vadd.f32 0.0, %v1700
        %v1702 = vpop.f32.mrb[0].mxu0
        %1703 = vmatprep.mubr.f32.mxu0 0.0
        %1704 = vmatmul.mubr.f32.gmra.mrb[0].mxu0 %v1518
        %v1705 = vpop.f32.mrb[0].mxu0
        %v1706 = vadd.f32 0.0, %v1705
        %v1707 = vpop.f32.mrb[0].mxu0
        %1708 = vmatprep.mubr.f32.mxu0 0.0
        %1709 = vmatmul.mubr.f32.gmra.mrb[0].mxu0 %v1519
        %v1710 = vpop.f32.mrb[0].mxu0
        %v1711 = vadd.f32 0.0, %v1710
        %v1712 = vpop.f32.mrb[0].mxu0
        %1713 = vmatprep.mubr.f32.mxu0 0.0
        %1714 = vmatmul.mubr.f32.gmra.mrb[0].mxu0 %v1520
        %v1715 = vpop.f32.mrb[0].mxu0
        %v1716 = vadd.f32 0.0, %v1715
        %v1717 = vpop.f32.mrb[0].mxu0
        %1718 = vmatprep.mubr.f32.mxu0 0.0
        %1719 = vmatmul.mubr.f32.gmra.mrb[0].mxu0 %v1521
        %v1720 = vpop.f32.mrb[0].mxu0
        %v1721 = vadd.f32 0.0, %v1720
        %v1722 = vpop.f32.mrb[0].mxu0
        %1723 = vmatprep.mubr.f32.mxu0 0.0
        %1724 = vmatmul.mubr.f32.gmra.mrb[0].mxu0 %v1522
        %v1725 = vpop.f32.mrb[0].mxu0
        %v1726 = vadd.f32 0.0, %v1725
        %v1727 = vpop.f32.mrb[0].mxu0
        %1728 = vmatprep.mubr.f32.mxu0 0.0
        %1729 = vmatmul.mubr.f32.gmra.mrb[0].mxu0 %v1523
        %v1730 = vpop.f32.mrb[0].mxu0
        %v1731 = vadd.f32 0.0, %v1730
        %v1732 = vpop.f32.mrb[0].mxu0
        %1733 = vmatprep.mubr.f32.mxu0 0.0
        %1734 = vmatmul.mubr.f32.gmra.mrb[0].mxu0 %v1524
        %v1735 = vpop.f32.mrb[0].mxu0
        %v1736 = vadd.f32 0.0, %v1735
        %v1737 = vpop.f32.mrb[0].mxu0
        %1738 = vmatprep.mubr.f32.mxu0 0.0
        %1739 = vmatmul.mubr.f32.gmra.mrb[0].mxu0 %v1525
        %v1740 = vpop.f32.mrb[0].mxu0
        %v1741 = vadd.f32 0.0, %v1740
        %v1742 = vpop.f32.mrb[0].mxu0
        %1743 = vmatprep.mubr.f32.mxu0 0.0
        %1744 = vmatmul.mubr.f32.gmra.mrb[0].mxu0 %v1526
        %v1745 = vpop.f32.mrb[0].mxu0
        %v1746 = vadd.f32 0.0, %v1745
        %v1747 = vpop.f32.mrb[0].mxu0
        %1748 = vmatprep.mubr.f32.mxu0 0.0
        %1749 = vmatmul.mubr.f32.gmra.mrb[0].mxu0 %v1527
        %v1750 = vpop.f32.mrb[0].mxu0
        %v1751 = vadd.f32 0.0, %v1750
        %v1752 = vpop.f32.mrb[0].mxu0
        %1753 = vmatprep.mubr.f32.mxu0 0.0
        %1754 = vmatmul.mubr.f32.gmra.mrb[0].mxu0 %v1528
        %v1755 = vpop.f32.mrb[0].mxu0
        %v1756 = vadd.f32 0.0, %v1755
        %v1757 = vpop.f32.mrb[0].mxu0
        %1758 = vmatprep.mubr.f32.mxu0 0.0
        %1759 = vmatmul.mubr.f32.gmra.mrb[0].mxu0 %v1529
        %v1760 = vpop.f32.mrb[0].mxu0
        %v1761 = vadd.f32 0.0, %v1760
        %v1762 = vpop.f32.mrb[0].mxu0
        %1763 = vmatprep.mubr.f32.mxu0 0.0
        %1764 = vmatmul.mubr.f32.gmra.mrb[0].mxu0 %v1530
        %v1765 = vpop.f32.mrb[0].mxu0
        %v1766 = vadd.f32 0.0, %v1765
        %v1767 = vpop.f32.mrb[0].mxu0
        %1768 = vmatprep.mubr.f32.mxu0 0.0
        %1769 = vmatmul.mubr.f32.gmra.mrb[0].mxu0 %v1531
        %v1770 = vpop.f32.mrb[0].mxu0
        %v1771 = vadd.f32 0.0, %v1770
        %v1772 = vpop.f32.mrb[0].mxu0
        %1773 = vdwg.mxu0
        %1774 = vmatprep.subr.mxu0 0.0
        %1775 = vmatpush1.msra.mxu0 %v1484
        %1776 = vmatprep.subr.mxu0 0.0
        %1777 = vmatpush1.msra.mxu0 %v1485
        %1778 = vmatprep.subr.mxu0 0.0
        %1779 = vmatpush1.msra.mxu0 %v1486
        %1780 = vmatprep.subr.mxu0 0.0
        %1781 = vmatpush1.msra.mxu0 %v1487
        %1782 = vmatprep.subr.mxu0 0.0
        %1783 = vmatpush1.msra.mxu0 %v1488
        %1784 = vmatprep.subr.mxu0 0.0
        %1785 = vmatpush1.msra.mxu0 %v1489
        %1786 = vmatprep.subr.mxu0 0.0
        %1787 = vmatpush1.msra.mxu0 %v1490
        %1788 = vmatprep.subr.mxu0 0.0
        %1789 = vmatpush1.msra.mxu0 %v1491
        %1790 = vmatprep.subr.mxu0 0.0
        %1791 = vmatpush1.msra.mxu0 %v1492
        %1792 = vmatprep.subr.mxu0 0.0
        %1793 = vmatpush1.msra.mxu0 %v1493
        %1794 = vmatprep.subr.mxu0 0.0
        %1795 = vmatpush1.msra.mxu0 %v1494
        %1796 = vmatprep.subr.mxu0 0.0
        %1797 = vmatpush1.msra.mxu0 %v1495
        %1798 = vmatprep.subr.mxu0 0.0
        %1799 = vmatpush1.msra.mxu0 %v1496
        %1800 = vmatprep.subr.mxu0 0.0
        %1801 = vmatpush1.msra.mxu0 %v1497
        %1802 = vmatprep.subr.mxu0 0.0
        %1803 = vmatpush1.msra.mxu0 %v1498
        %1804 = vmatprep.subr.mxu0 0.0
        %1805 = vmatpush1.msra.mxu0 %v1499
        %1806 = vmatprep.subr.mxu0 0.0
        %1807 = vmatpush1.msra.mxu0 0.0
        %1808 = vmatprep.subr.mxu0 0.0
        %1809 = vmatpush1.msra.mxu0 0.0
        %1810 = vmatprep.subr.mxu0 0.0
        %1811 = vmatpush1.msra.mxu0 0.0
        %1812 = vmatprep.subr.mxu0 0.0
        %1813 = vmatpush1.msra.mxu0 0.0
        %1814 = vmatprep.subr.mxu0 0.0
        %1815 = vmatpush1.msra.mxu0 0.0
        %1816 = vmatprep.subr.mxu0 0.0
        %1817 = vmatpush1.msra.mxu0 0.0
        %1818 = vmatprep.subr.mxu0 0.0
        %1819 = vmatpush1.msra.mxu0 0.0
        %1820 = vmatprep.subr.mxu0 0.0
        %1821 = vmatpush1.msra.mxu0 0.0
        %1822 = vmatprep.subr.mxu0 0.0
        %1823 = vmatpush1.msra.mxu0 0.0
        %1824 = vmatprep.subr.mxu0 0.0
        %1825 = vmatpush1.msra.mxu0 0.0
        %1826 = vmatprep.subr.mxu0 0.0
        %1827 = vmatpush1.msra.mxu0 0.0
        %1828 = vmatprep.subr.mxu0 0.0
        %1829 = vmatpush1.msra.mxu0 0.0
        %1830 = vmatprep.subr.mxu0 0.0
        %1831 = vmatpush1.msra.mxu0 0.0
        %1832 = vmatprep.subr.mxu0 0.0
        %1833 = vmatpush1.msra.mxu0 0.0
        %1834 = vmatprep.subr.mxu0 0.0
        %1835 = vmatpush1.msra.mxu0 0.0
        %1836 = vmatprep.subr.mxu0 0.0
        %1837 = vmatpush1.msra.mxu0 0.0
        %1838 = vmatprep.mubr.f32.mxu0 0.0
        %1839 = vmatmul.mubr.f32.gmra.mrb[0].mxu0 %v1452
        %v1840 = vpop.f32.mrb[0].mxu0
        %v1841 = vadd.f32 %v1616, %v1840
        %v1842 = vpop.f32.mrb[0].mxu0
        %1843 = vmatprep.mubr.f32.mxu0 0.0
        %1844 = vmatmul.mubr.f32.gmra.mrb[0].mxu0 %v1453
        %v1845 = vpop.f32.mrb[0].mxu0
        %v1846 = vadd.f32 %v1621, %v1845
        %v1847 = vpop.f32.mrb[0].mxu0
        %1848 = vmatprep.mubr.f32.mxu0 0.0
        %1849 = vmatmul.mubr.f32.gmra.mrb[0].mxu0 %v1454
        %v1850 = vpop.f32.mrb[0].mxu0
        %v1851 = vadd.f32 %v1626, %v1850
        %v1852 = vpop.f32.mrb[0].mxu0
        %1853 = vmatprep.mubr.f32.mxu0 0.0
        %1854 = vmatmul.mubr.f32.gmra.mrb[0].mxu0 %v1455
        %v1855 = vpop.f32.mrb[0].mxu0
        %v1856 = vadd.f32 %v1631, %v1855
        %v1857 = vpop.f32.mrb[0].mxu0
        %1858 = vmatprep.mubr.f32.mxu0 0.0
        %1859 = vmatmul.mubr.f32.gmra.mrb[0].mxu0 %v1456
        %v1860 = vpop.f32.mrb[0].mxu0
        %v1861 = vadd.f32 %v1636, %v1860
        %v1862 = vpop.f32.mrb[0].mxu0
        %1863 = vmatprep.mubr.f32.mxu0 0.0
        %1864 = vmatmul.mubr.f32.gmra.mrb[0].mxu0 %v1457
        %v1865 = vpop.f32.mrb[0].mxu0
        %v1866 = vadd.f32 %v1641, %v1865
        %v1867 = vpop.f32.mrb[0].mxu0
        %1868 = vmatprep.mubr.f32.mxu0 0.0
        %1869 = vmatmul.mubr.f32.gmra.mrb[0].mxu0 %v1458
        %v1870 = vpop.f32.mrb[0].mxu0
        %v1871 = vadd.f32 %v1646, %v1870
        %v1872 = vpop.f32.mrb[0].mxu0
        %1873 = vmatprep.mubr.f32.mxu0 0.0
        %1874 = vmatmul.mubr.f32.gmra.mrb[0].mxu0 %v1459
        %v1875 = vpop.f32.mrb[0].mxu0
        %v1876 = vadd.f32 %v1651, %v1875
        %v1877 = vpop.f32.mrb[0].mxu0
        %1878 = vmatprep.mubr.f32.mxu0 0.0
        %1879 = vmatmul.mubr.f32.gmra.mrb[0].mxu0 %v1460
        %v1880 = vpop.f32.mrb[0].mxu0
        %v1881 = vadd.f32 %v1656, %v1880
        %v1882 = vpop.f32.mrb[0].mxu0
        %1883 = vmatprep.mubr.f32.mxu0 0.0
        %1884 = vmatmul.mubr.f32.gmra.mrb[0].mxu0 %v1461
        %v1885 = vpop.f32.mrb[0].mxu0
        %v1886 = vadd.f32 %v1661, %v1885
        %v1887 = vpop.f32.mrb[0].mxu0
        %1888 = vmatprep.mubr.f32.mxu0 0.0
        %1889 = vmatmul.mubr.f32.gmra.mrb[0].mxu0 %v1462
        %v1890 = vpop.f32.mrb[0].mxu0
        %v1891 = vadd.f32 %v1666, %v1890
        %v1892 = vpop.f32.mrb[0].mxu0
        %1893 = vmatprep.mubr.f32.mxu0 0.0
        %1894 = vmatmul.mubr.f32.gmra.mrb[0].mxu0 %v1463
        %v1895 = vpop.f32.mrb[0].mxu0
        %v1896 = vadd.f32 %v1671, %v1895
        %v1897 = vpop.f32.mrb[0].mxu0
        %1898 = vmatprep.mubr.f32.mxu0 0.0
        %1899 = vmatmul.mubr.f32.gmra.mrb[0].mxu0 %v1464
        %v1900 = vpop.f32.mrb[0].mxu0
        %v1901 = vadd.f32 %v1676, %v1900
        %v1902 = vpop.f32.mrb[0].mxu0
        %1903 = vmatprep.mubr.f32.mxu0 0.0
        %1904 = vmatmul.mubr.f32.gmra.mrb[0].mxu0 %v1465
        %v1905 = vpop.f32.mrb[0].mxu0
        %v1906 = vadd.f32 %v1681, %v1905
        %v1907 = vpop.f32.mrb[0].mxu0
        %1908 = vmatprep.mubr.f32.mxu0 0.0
        %1909 = vmatmul.mubr.f32.gmra.mrb[0].mxu0 %v1466
        %v1910 = vpop.f32.mrb[0].mxu0
        %v1911 = vadd.f32 %v1686, %v1910
        %v1912 = vpop.f32.mrb[0].mxu0
        %1913 = vmatprep.mubr.f32.mxu0 0.0
        %1914 = vmatmul.mubr.f32.gmra.mrb[0].mxu0 %v1467
        %v1915 = vpop.f32.mrb[0].mxu0
        %v1916 = vadd.f32 %v1691, %v1915
        %v1917 = vpop.f32.mrb[0].mxu0
        %1918 = vmatprep.mubr.f32.mxu0 0.0
        %1919 = vmatmul.mubr.f32.gmra.mrb[0].mxu0 %v1468
        %v1920 = vpop.f32.mrb[0].mxu0
        %v1921 = vadd.f32 %v1696, %v1920
        %v1922 = vpop.f32.mrb[0].mxu0
        %1923 = vmatprep.mubr.f32.mxu0 0.0
        %1924 = vmatmul.mubr.f32.gmra.mrb[0].mxu0 %v1469
        %v1925 = vpop.f32.mrb[0].mxu0
        %v1926 = vadd.f32 %v1701, %v1925
        %v1927 = vpop.f32.mrb[0].mxu0
        %1928 = vmatprep.mubr.f32.mxu0 0.0
        %1929 = vmatmul.mubr.f32.gmra.mrb[0].mxu0 %v1470
        %v1930 = vpop.f32.mrb[0].mxu0
        %v1931 = vadd.f32 %v1706, %v1930
        %v1932 = vpop.f32.mrb[0].mxu0
        %1933 = vmatprep.mubr.f32.mxu0 0.0
        %1934 = vmatmul.mubr.f32.gmra.mrb[0].mxu0 %v1471
        %v1935 = vpop.f32.mrb[0].mxu0
        %v1936 = vadd.f32 %v1711, %v1935
        %v1937 = vpop.f32.mrb[0].mxu0
        %1938 = vmatprep.mubr.f32.mxu0 0.0
        %1939 = vmatmul.mubr.f32.gmra.mrb[0].mxu0 %v1472
        %v1940 = vpop.f32.mrb[0].mxu0
        %v1941 = vadd.f32 %v1716, %v1940
        %v1942 = vpop.f32.mrb[0].mxu0
        %1943 = vmatprep.mubr.f32.mxu0 0.0
        %1944 = vmatmul.mubr.f32.gmra.mrb[0].mxu0 %v1473
        %v1945 = vpop.f32.mrb[0].mxu0
        %v1946 = vadd.f32 %v1721, %v1945
        %v1947 = vpop.f32.mrb[0].mxu0
        %1948 = vmatprep.mubr.f32.mxu0 0.0
        %1949 = vmatmul.mubr.f32.gmra.mrb[0].mxu0 %v1474
        %v1950 = vpop.f32.mrb[0].mxu0
        %v1951 = vadd.f32 %v1726, %v1950
        %v1952 = vpop.f32.mrb[0].mxu0
        %1953 = vmatprep.mubr.f32.mxu0 0.0
        %1954 = vmatmul.mubr.f32.gmra.mrb[0].mxu0 %v1475
        %v1955 = vpop.f32.mrb[0].mxu0
        %v1956 = vadd.f32 %v1731, %v1955
        %v1957 = vpop.f32.mrb[0].mxu0
        %1958 = vmatprep.mubr.f32.mxu0 0.0
        %1959 = vmatmul.mubr.f32.gmra.mrb[0].mxu0 %v1476
        %v1960 = vpop.f32.mrb[0].mxu0
        %v1961 = vadd.f32 %v1736, %v1960
        %v1962 = vpop.f32.mrb[0].mxu0
        %1963 = vmatprep.mubr.f32.mxu0 0.0
        %1964 = vmatmul.mubr.f32.gmra.mrb[0].mxu0 %v1477
        %v1965 = vpop.f32.mrb[0].mxu0
        %v1966 = vadd.f32 %v1741, %v1965
        %v1967 = vpop.f32.mrb[0].mxu0
        %1968 = vmatprep.mubr.f32.mxu0 0.0
        %1969 = vmatmul.mubr.f32.gmra.mrb[0].mxu0 %v1478
        %v1970 = vpop.f32.mrb[0].mxu0
        %v1971 = vadd.f32 %v1746, %v1970
        %v1972 = vpop.f32.mrb[0].mxu0
        %1973 = vmatprep.mubr.f32.mxu0 0.0
        %1974 = vmatmul.mubr.f32.gmra.mrb[0].mxu0 %v1479
        %v1975 = vpop.f32.mrb[0].mxu0
        %v1976 = vadd.f32 %v1751, %v1975
        %v1977 = vpop.f32.mrb[0].mxu0
        %1978 = vmatprep.mubr.f32.mxu0 0.0
        %1979 = vmatmul.mubr.f32.gmra.mrb[0].mxu0 %v1480
        %v1980 = vpop.f32.mrb[0].mxu0
        %v1981 = vadd.f32 %v1756, %v1980
        %v1982 = vpop.f32.mrb[0].mxu0
        %1983 = vmatprep.mubr.f32.mxu0 0.0
        %1984 = vmatmul.mubr.f32.gmra.mrb[0].mxu0 %v1481
        %v1985 = vpop.f32.mrb[0].mxu0
        %v1986 = vadd.f32 %v1761, %v1985
        %v1987 = vpop.f32.mrb[0].mxu0
        %1988 = vmatprep.mubr.f32.mxu0 0.0
        %1989 = vmatmul.mubr.f32.gmra.mrb[0].mxu0 %v1482
        %v1990 = vpop.f32.mrb[0].mxu0
        %v1991 = vadd.f32 %v1766, %v1990
        %v1992 = vpop.f32.mrb[0].mxu0
        %1993 = vmatprep.mubr.f32.mxu0 0.0
        %1994 = vmatmul.mubr.f32.gmra.mrb[0].mxu0 %v1483
        %v1995 = vpop.f32.mrb[0].mxu0
        %v1996 = vadd.f32 %v1771, %v1995
        %v1997 = vpop.f32.mrb[0].mxu0
        %1998 = vdwg.mxu0
        %v1999 = vld [vmem:[%s1081] sm:$0xff]
        %v2000 = vld [vmem:[%s1081 + $0x8] sm:$0xff]
        %v2001 = vld [vmem:[%s1081 + $0x10] sm:$0xff]
        %v2002 = vld [vmem:[%s1081 + $0x18] sm:$0xff]
        %v2003 = vld [vmem:[%s1081 + $0x20] sm:$0xff]
        %v2004 = vld [vmem:[%s1081 + $0x28] sm:$0xff]
        %v2005 = vld [vmem:[%s1081 + $0x30] sm:$0xff]
        %v2006 = vld [vmem:[%s1081 + $0x38] sm:$0xff]
        %v2007 = vld [vmem:[%s1081 + $0x40] sm:$0xff]
        %v2008 = vld [vmem:[%s1081 + $0x48] sm:$0xff]
        %v2009 = vld [vmem:[%s1081 + $0x50] sm:$0xff]
        %v2010 = vld [vmem:[%s1081 + $0x58] sm:$0xff]
        %v2011 = vld [vmem:[%s1081 + $0x60] sm:$0xff]
        %v2012 = vld [vmem:[%s1081 + $0x68] sm:$0xff]
        %v2013 = vld [vmem:[%s1081 + $0x70] sm:$0xff]
        %v2014 = vld [vmem:[%s1081 + $0x78] sm:$0xff]
        %v2015 = vld [vmem:[%s1081 + $0x80] sm:$0xff]
        %v2016 = vld [vmem:[%s1081 + $0x88] sm:$0xff]
        %v2017 = vld [vmem:[%s1081 + $0x90] sm:$0xff]
        %v2018 = vld [vmem:[%s1081 + $0x98] sm:$0xff]
        %v2019 = vld [vmem:[%s1081 + $0xa0] sm:$0xff]
        %v2020 = vld [vmem:[%s1081 + $0xa8] sm:$0xff]
        %v2021 = vld [vmem:[%s1081 + $0xb0] sm:$0xff]
        %v2022 = vld [vmem:[%s1081 + $0xb8] sm:$0xff]
        %v2023 = vld [vmem:[%s1081 + $0xc0] sm:$0xff]
        %v2024 = vld [vmem:[%s1081 + $0xc8] sm:$0xff]
        %v2025 = vld [vmem:[%s1081 + $0xd0] sm:$0xff]
        %v2026 = vld [vmem:[%s1081 + $0xd8] sm:$0xff]
        %v2027 = vld [vmem:[%s1081 + $0xe0] sm:$0xff]
        %v2028 = vld [vmem:[%s1081 + $0xe8] sm:$0xff]
        %v2029 = vld [vmem:[%s1081 + $0xf0] sm:$0xff]
        %v2030 = vld [vmem:[%s1081 + $0xf8] sm:$0xff]
        %s2031 = scalar_lea.vmem [#allocation7], 768
        %v2032 = vld [vmem:[%s2031] sm:$0xff]
        %v2033 = vld [vmem:[%s2031 + $0x8] sm:$0xff]
        %v2034 = vld [vmem:[%s2031 + $0x10] sm:$0xff]
        %v2035 = vld [vmem:[%s2031 + $0x18] sm:$0xff]
        %v2036 = vld [vmem:[%s2031 + $0x20] sm:$0xff]
        %v2037 = vld [vmem:[%s2031 + $0x28] sm:$0xff]
        %v2038 = vld [vmem:[%s2031 + $0x30] sm:$0xff]
        %v2039 = vld [vmem:[%s2031 + $0x38] sm:$0xff]
        %v2040 = vld [vmem:[%s2031 + $0x40] sm:$0xff]
        %v2041 = vld [vmem:[%s2031 + $0x48] sm:$0xff]
        %v2042 = vld [vmem:[%s2031 + $0x50] sm:$0xff]
        %v2043 = vld [vmem:[%s2031 + $0x58] sm:$0xff]
        %v2044 = vld [vmem:[%s2031 + $0x60] sm:$0xff]
        %v2045 = vld [vmem:[%s2031 + $0x68] sm:$0xff]
        %v2046 = vld [vmem:[%s2031 + $0x70] sm:$0xff]
        %v2047 = vld [vmem:[%s2031 + $0x78] sm:$0xff]
        %2048 = vmatprep.subr.mxu0 0.0
        %2049 = vmatpush1.msra.mxu0 %v2032
        %2050 = vmatprep.subr.mxu0 0.0
        %2051 = vmatpush1.msra.mxu0 %v2033
        %2052 = vmatprep.subr.mxu0 0.0
        %2053 = vmatpush1.msra.mxu0 %v2034
        %2054 = vmatprep.subr.mxu0 0.0
        %2055 = vmatpush1.msra.mxu0 %v2035
        %2056 = vmatprep.subr.mxu0 0.0
        %2057 = vmatpush1.msra.mxu0 %v2036
        %2058 = vmatprep.subr.mxu0 0.0
        %2059 = vmatpush1.msra.mxu0 %v2037
        %2060 = vmatprep.subr.mxu0 0.0
        %2061 = vmatpush1.msra.mxu0 %v2038
        %2062 = vmatprep.subr.mxu0 0.0
        %2063 = vmatpush1.msra.mxu0 %v2039
        %2064 = vmatprep.subr.mxu0 0.0
        %2065 = vmatpush1.msra.mxu0 %v2040
        %2066 = vmatprep.subr.mxu0 0.0
        %2067 = vmatpush1.msra.mxu0 %v2041
        %2068 = vmatprep.subr.mxu0 0.0
        %2069 = vmatpush1.msra.mxu0 %v2042
        %2070 = vmatprep.subr.mxu0 0.0
        %2071 = vmatpush1.msra.mxu0 %v2043
        %2072 = vmatprep.subr.mxu0 0.0
        %2073 = vmatpush1.msra.mxu0 %v2044
        %2074 = vmatprep.subr.mxu0 0.0
        %2075 = vmatpush1.msra.mxu0 %v2045
        %2076 = vmatprep.subr.mxu0 0.0
        %2077 = vmatpush1.msra.mxu0 %v2046
        %2078 = vmatprep.subr.mxu0 0.0
        %2079 = vmatpush1.msra.mxu0 %v2047
        %2080 = vmatprep.subr.mxu0 0.0
        %2081 = vmatpush1.msra.mxu0 0.0
        %2082 = vmatprep.subr.mxu0 0.0
        %2083 = vmatpush1.msra.mxu0 0.0
        %2084 = vmatprep.subr.mxu0 0.0
        %2085 = vmatpush1.msra.mxu0 0.0
        %2086 = vmatprep.subr.mxu0 0.0
        %2087 = vmatpush1.msra.mxu0 0.0
        %2088 = vmatprep.subr.mxu0 0.0
        %2089 = vmatpush1.msra.mxu0 0.0
        %2090 = vmatprep.subr.mxu0 0.0
        %2091 = vmatpush1.msra.mxu0 0.0
        %2092 = vmatprep.subr.mxu0 0.0
        %2093 = vmatpush1.msra.mxu0 0.0
        %2094 = vmatprep.subr.mxu0 0.0
        %2095 = vmatpush1.msra.mxu0 0.0
        %2096 = vmatprep.subr.mxu0 0.0
        %2097 = vmatpush1.msra.mxu0 0.0
        %2098 = vmatprep.subr.mxu0 0.0
        %2099 = vmatpush1.msra.mxu0 0.0
        %2100 = vmatprep.subr.mxu0 0.0
        %2101 = vmatpush1.msra.mxu0 0.0
        %2102 = vmatprep.subr.mxu0 0.0
        %2103 = vmatpush1.msra.mxu0 0.0
        %2104 = vmatprep.subr.mxu0 0.0
        %2105 = vmatpush1.msra.mxu0 0.0
        %2106 = vmatprep.subr.mxu0 0.0
        %2107 = vmatpush1.msra.mxu0 0.0
        %2108 = vmatprep.subr.mxu0 0.0
        %2109 = vmatpush1.msra.mxu0 0.0
        %2110 = vmatprep.subr.mxu0 0.0
        %2111 = vmatpush1.msra.mxu0 0.0
        %2112 = vmatprep.mubr.f32.mxu0 0.0
        %2113 = vmatmul.mubr.f32.gmra.mrb[0].mxu0 %v1999
        %v2114 = vpop.f32.mrb[0].mxu0
        %v2115 = vadd.f32 0.0, %v2114
        %v2116 = vpop.f32.mrb[0].mxu0
        %2117 = vmatprep.mubr.f32.mxu0 0.0
        %2118 = vmatmul.mubr.f32.gmra.mrb[0].mxu0 %v2000
        %v2119 = vpop.f32.mrb[0].mxu0
        %v2120 = vadd.f32 0.0, %v2119
        %v2121 = vpop.f32.mrb[0].mxu0
        %2122 = vmatprep.mubr.f32.mxu0 0.0
        %2123 = vmatmul.mubr.f32.gmra.mrb[0].mxu0 %v2001
        %v2124 = vpop.f32.mrb[0].mxu0
        %v2125 = vadd.f32 0.0, %v2124
        %v2126 = vpop.f32.mrb[0].mxu0
        %2127 = vmatprep.mubr.f32.mxu0 0.0
        %2128 = vmatmul.mubr.f32.gmra.mrb[0].mxu0 %v2002
        %v2129 = vpop.f32.mrb[0].mxu0
        %v2130 = vadd.f32 0.0, %v2129
        %v2131 = vpop.f32.mrb[0].mxu0
        %2132 = vmatprep.mubr.f32.mxu0 0.0
        %2133 = vmatmul.mubr.f32.gmra.mrb[0].mxu0 %v2003
        %v2134 = vpop.f32.mrb[0].mxu0
        %v2135 = vadd.f32 0.0, %v2134
        %v2136 = vpop.f32.mrb[0].mxu0
        %2137 = vmatprep.mubr.f32.mxu0 0.0
        %2138 = vmatmul.mubr.f32.gmra.mrb[0].mxu0 %v2004
        %v2139 = vpop.f32.mrb[0].mxu0
        %v2140 = vadd.f32 0.0, %v2139
        %v2141 = vpop.f32.mrb[0].mxu0
        %2142 = vmatprep.mubr.f32.mxu0 0.0
        %2143 = vmatmul.mubr.f32.gmra.mrb[0].mxu0 %v2005
        %v2144 = vpop.f32.mrb[0].mxu0
        %v2145 = vadd.f32 0.0, %v2144
        %v2146 = vpop.f32.mrb[0].mxu0
        %2147 = vmatprep.mubr.f32.mxu0 0.0
        %2148 = vmatmul.mubr.f32.gmra.mrb[0].mxu0 %v2006
        %v2149 = vpop.f32.mrb[0].mxu0
        %v2150 = vadd.f32 0.0, %v2149
        %v2151 = vpop.f32.mrb[0].mxu0
        %2152 = vmatprep.mubr.f32.mxu0 0.0
        %2153 = vmatmul.mubr.f32.gmra.mrb[0].mxu0 %v2007
        %v2154 = vpop.f32.mrb[0].mxu0
        %v2155 = vadd.f32 0.0, %v2154
        %v2156 = vpop.f32.mrb[0].mxu0
        %2157 = vmatprep.mubr.f32.mxu0 0.0
        %2158 = vmatmul.mubr.f32.gmra.mrb[0].mxu0 %v2008
        %v2159 = vpop.f32.mrb[0].mxu0
        %v2160 = vadd.f32 0.0, %v2159
        %v2161 = vpop.f32.mrb[0].mxu0
        %2162 = vmatprep.mubr.f32.mxu0 0.0
        %2163 = vmatmul.mubr.f32.gmra.mrb[0].mxu0 %v2009
        %v2164 = vpop.f32.mrb[0].mxu0
        %v2165 = vadd.f32 0.0, %v2164
        %v2166 = vpop.f32.mrb[0].mxu0
        %2167 = vmatprep.mubr.f32.mxu0 0.0
        %2168 = vmatmul.mubr.f32.gmra.mrb[0].mxu0 %v2010
        %v2169 = vpop.f32.mrb[0].mxu0
        %v2170 = vadd.f32 0.0, %v2169
        %v2171 = vpop.f32.mrb[0].mxu0
        %2172 = vmatprep.mubr.f32.mxu0 0.0
        %2173 = vmatmul.mubr.f32.gmra.mrb[0].mxu0 %v2011
        %v2174 = vpop.f32.mrb[0].mxu0
        %v2175 = vadd.f32 0.0, %v2174
        %v2176 = vpop.f32.mrb[0].mxu0
        %2177 = vmatprep.mubr.f32.mxu0 0.0
        %2178 = vmatmul.mubr.f32.gmra.mrb[0].mxu0 %v2012
        %v2179 = vpop.f32.mrb[0].mxu0
        %v2180 = vadd.f32 0.0, %v2179
        %v2181 = vpop.f32.mrb[0].mxu0
        %2182 = vmatprep.mubr.f32.mxu0 0.0
        %2183 = vmatmul.mubr.f32.gmra.mrb[0].mxu0 %v2013
        %v2184 = vpop.f32.mrb[0].mxu0
        %v2185 = vadd.f32 0.0, %v2184
        %v2186 = vpop.f32.mrb[0].mxu0
        %2187 = vmatprep.mubr.f32.mxu0 0.0
        %2188 = vmatmul.mubr.f32.gmra.mrb[0].mxu0 %v2014
        %v2189 = vpop.f32.mrb[0].mxu0
        %v2190 = vadd.f32 0.0, %v2189
        %v2191 = vpop.f32.mrb[0].mxu0
        %2192 = vmatprep.mubr.f32.mxu0 0.0
        %2193 = vmatmul.mubr.f32.gmra.mrb[0].mxu0 %v2015
        %v2194 = vpop.f32.mrb[0].mxu0
        %v2195 = vadd.f32 0.0, %v2194
        %v2196 = vpop.f32.mrb[0].mxu0
        %2197 = vmatprep.mubr.f32.mxu0 0.0
        %2198 = vmatmul.mubr.f32.gmra.mrb[0].mxu0 %v2016
        %v2199 = vpop.f32.mrb[0].mxu0
        %v2200 = vadd.f32 0.0, %v2199
        %v2201 = vpop.f32.mrb[0].mxu0
        %2202 = vmatprep.mubr.f32.mxu0 0.0
        %2203 = vmatmul.mubr.f32.gmra.mrb[0].mxu0 %v2017
        %v2204 = vpop.f32.mrb[0].mxu0
        %v2205 = vadd.f32 0.0, %v2204
        %v2206 = vpop.f32.mrb[0].mxu0
        %2207 = vmatprep.mubr.f32.mxu0 0.0
        %2208 = vmatmul.mubr.f32.gmra.mrb[0].mxu0 %v2018
        %v2209 = vpop.f32.mrb[0].mxu0
        %v2210 = vadd.f32 0.0, %v2209
        %v2211 = vpop.f32.mrb[0].mxu0
        %2212 = vmatprep.mubr.f32.mxu0 0.0
        %2213 = vmatmul.mubr.f32.gmra.mrb[0].mxu0 %v2019
        %v2214 = vpop.f32.mrb[0].mxu0
        %v2215 = vadd.f32 0.0, %v2214
        %v2216 = vpop.f32.mrb[0].mxu0
        %2217 = vmatprep.mubr.f32.mxu0 0.0
        %2218 = vmatmul.mubr.f32.gmra.mrb[0].mxu0 %v2020
        %v2219 = vpop.f32.mrb[0].mxu0
        %v2220 = vadd.f32 0.0, %v2219
        %v2221 = vpop.f32.mrb[0].mxu0
        %2222 = vmatprep.mubr.f32.mxu0 0.0
        %2223 = vmatmul.mubr.f32.gmra.mrb[0].mxu0 %v2021
        %v2224 = vpop.f32.mrb[0].mxu0
        %v2225 = vadd.f32 0.0, %v2224
        %v2226 = vpop.f32.mrb[0].mxu0
        %2227 = vmatprep.mubr.f32.mxu0 0.0
        %2228 = vmatmul.mubr.f32.gmra.mrb[0].mxu0 %v2022
        %v2229 = vpop.f32.mrb[0].mxu0
        %v2230 = vadd.f32 0.0, %v2229
        %v2231 = vpop.f32.mrb[0].mxu0
        %2232 = vmatprep.mubr.f32.mxu0 0.0
        %2233 = vmatmul.mubr.f32.gmra.mrb[0].mxu0 %v2023
        %v2234 = vpop.f32.mrb[0].mxu0
        %v2235 = vadd.f32 0.0, %v2234
        %v2236 = vpop.f32.mrb[0].mxu0
        %2237 = vmatprep.mubr.f32.mxu0 0.0
        %2238 = vmatmul.mubr.f32.gmra.mrb[0].mxu0 %v2024
        %v2239 = vpop.f32.mrb[0].mxu0
        %v2240 = vadd.f32 0.0, %v2239
        %v2241 = vpop.f32.mrb[0].mxu0
        %2242 = vmatprep.mubr.f32.mxu0 0.0
        %2243 = vmatmul.mubr.f32.gmra.mrb[0].mxu0 %v2025
        %v2244 = vpop.f32.mrb[0].mxu0
        %v2245 = vadd.f32 0.0, %v2244
        %v2246 = vpop.f32.mrb[0].mxu0
        %2247 = vmatprep.mubr.f32.mxu0 0.0
        %2248 = vmatmul.mubr.f32.gmra.mrb[0].mxu0 %v2026
        %v2249 = vpop.f32.mrb[0].mxu0
        %v2250 = vadd.f32 0.0, %v2249
        %v2251 = vpop.f32.mrb[0].mxu0
        %2252 = vmatprep.mubr.f32.mxu0 0.0
        %2253 = vmatmul.mubr.f32.gmra.mrb[0].mxu0 %v2027
        %v2254 = vpop.f32.mrb[0].mxu0
        %v2255 = vadd.f32 0.0, %v2254
        %v2256 = vpop.f32.mrb[0].mxu0
        %2257 = vmatprep.mubr.f32.mxu0 0.0
        %2258 = vmatmul.mubr.f32.gmra.mrb[0].mxu0 %v2028
        %v2259 = vpop.f32.mrb[0].mxu0
        %v2260 = vadd.f32 0.0, %v2259
        %v2261 = vpop.f32.mrb[0].mxu0
        %2262 = vmatprep.mubr.f32.mxu0 0.0
        %2263 = vmatmul.mubr.f32.gmra.mrb[0].mxu0 %v2029
        %v2264 = vpop.f32.mrb[0].mxu0
        %v2265 = vadd.f32 0.0, %v2264
        %v2266 = vpop.f32.mrb[0].mxu0
        %2267 = vmatprep.mubr.f32.mxu0 0.0
        %2268 = vmatmul.mubr.f32.gmra.mrb[0].mxu0 %v2030
        %v2269 = vpop.f32.mrb[0].mxu0
        %v2270 = vadd.f32 0.0, %v2269
        %v2271 = vpop.f32.mrb[0].mxu0
        %2272 = vdwg.mxu0
        %v2273 = vadd.f32 %v1841, %v2115
        %v2274 = vadd.f32 %v1846, %v2120
        %v2275 = vadd.f32 %v1851, %v2125
        %v2276 = vadd.f32 %v1856, %v2130
        %v2277 = vadd.f32 %v1861, %v2135
        %v2278 = vadd.f32 %v1866, %v2140
        %v2279 = vadd.f32 %v1871, %v2145
        %v2280 = vadd.f32 %v1876, %v2150
        %v2281 = vadd.f32 %v1881, %v2155
        %v2282 = vadd.f32 %v1886, %v2160
        %v2283 = vadd.f32 %v1891, %v2165
        %v2284 = vadd.f32 %v1896, %v2170
        %v2285 = vadd.f32 %v1901, %v2175
        %v2286 = vadd.f32 %v1906, %v2180
        %v2287 = vadd.f32 %v1911, %v2185
        %v2288 = vadd.f32 %v1916, %v2190
        %v2289 = vadd.f32 %v1921, %v2195
        %v2290 = vadd.f32 %v1926, %v2200
        %v2291 = vadd.f32 %v1931, %v2205
        %v2292 = vadd.f32 %v1936, %v2210
        %v2293 = vadd.f32 %v1941, %v2215
        %v2294 = vadd.f32 %v1946, %v2220
        %v2295 = vadd.f32 %v1951, %v2225
        %v2296 = vadd.f32 %v1956, %v2230
        %v2297 = vadd.f32 %v1961, %v2235
        %v2298 = vadd.f32 %v1966, %v2240
        %v2299 = vadd.f32 %v1971, %v2245
        %v2300 = vadd.f32 %v1976, %v2250
        %v2301 = vadd.f32 %v1981, %v2255
        %v2302 = vadd.f32 %v1986, %v2260
        %v2303 = vadd.f32 %v1991, %v2265
        %v2304 = vadd.f32 %v1996, %v2270
        %v2305 = vadd.f32 %v1420, %v2273
        %v2306 = vadd.f32 %v1421, %v2274
        %v2307 = vadd.f32 %v1422, %v2275
        %v2308 = vadd.f32 %v1423, %v2276
        %v2309 = vadd.f32 %v1424, %v2277
        %v2310 = vadd.f32 %v1425, %v2278
        %v2311 = vadd.f32 %v1426, %v2279
        %v2312 = vadd.f32 %v1427, %v2280
        %v2313 = vadd.f32 %v1428, %v2281
        %v2314 = vadd.f32 %v1429, %v2282
        %v2315 = vadd.f32 %v1430, %v2283
        %v2316 = vadd.f32 %v1431, %v2284
        %v2317 = vadd.f32 %v1432, %v2285
        %v2318 = vadd.f32 %v1433, %v2286
        %v2319 = vadd.f32 %v1434, %v2287
        %v2320 = vadd.f32 %v1435, %v2288
        %v2321 = vadd.f32 %v1436, %v2289
        %v2322 = vadd.f32 %v1437, %v2290
        %v2323 = vadd.f32 %v1438, %v2291
        %v2324 = vadd.f32 %v1439, %v2292
        %v2325 = vadd.f32 %v1440, %v2293
        %v2326 = vadd.f32 %v1441, %v2294
        %v2327 = vadd.f32 %v1442, %v2295
        %v2328 = vadd.f32 %v1443, %v2296
        %v2329 = vadd.f32 %v1444, %v2297
        %v2330 = vadd.f32 %v1445, %v2298
        %v2331 = vadd.f32 %v1446, %v2299
        %v2332 = vadd.f32 %v1447, %v2300
        %v2333 = vadd.f32 %v1448, %v2301
        %v2334 = vadd.f32 %v1449, %v2302
        %v2335 = vadd.f32 %v1450, %v2303
        %v2336 = vadd.f32 %v1451, %v2304
        %2337 = vst [vmem:[#allocation3 + $0x2] sm:$0xff] %v2305
        %2338 = vst [vmem:[#allocation3 + $0xa] sm:$0xff] %v2306
        %2339 = vst [vmem:[#allocation3 + $0x1a] sm:$0xff] %v2307
        %2340 = vst [vmem:[#allocation3 + $0x22] sm:$0xff] %v2308
        %2341 = vst [vmem:[#allocation3 + $0x32] sm:$0xff] %v2309
        %2342 = vst [vmem:[#allocation3 + $0x3a] sm:$0xff] %v2310
        %2343 = vst [vmem:[#allocation3 + $0x4a] sm:$0xff] %v2311
        %2344 = vst [vmem:[#allocation3 + $0x52] sm:$0xff] %v2312
        %2345 = vst [vmem:[#allocation3 + $0x62] sm:$0xff] %v2313
        %2346 = vst [vmem:[#allocation3 + $0x6a] sm:$0xff] %v2314
        %2347 = vst [vmem:[#allocation3 + $0x7a] sm:$0xff] %v2315
        %2348 = vst [vmem:[#allocation3 + $0x82] sm:$0xff] %v2316
        %2349 = vst [vmem:[#allocation3 + $0x92] sm:$0xff] %v2317
        %2350 = vst [vmem:[#allocation3 + $0x9a] sm:$0xff] %v2318
        %2351 = vst [vmem:[#allocation3 + $0xaa] sm:$0xff] %v2319
        %2352 = vst [vmem:[#allocation3 + $0xb2] sm:$0xff] %v2320
        %2353 = vst [vmem:[#allocation3 + $0xc2] sm:$0xff] %v2321
        %2354 = vst [vmem:[#allocation3 + $0xca] sm:$0xff] %v2322
        %2355 = vst [vmem:[#allocation3 + $0xda] sm:$0xff] %v2323
        %2356 = vst [vmem:[#allocation3 + $0xe2] sm:$0xff] %v2324
        %2357 = vst [vmem:[#allocation3 + $0xf2] sm:$0xff] %v2325
        %2358 = vst [vmem:[#allocation3 + $0xfa] sm:$0xff] %v2326
        %2359 = vst [vmem:[#allocation3 + $0x10a] sm:$0xff] %v2327
        %2360 = vst [vmem:[#allocation3 + $0x112] sm:$0xff] %v2328
        %2361 = vst [vmem:[#allocation3 + $0x122] sm:$0xff] %v2329
        %2362 = vst [vmem:[#allocation3 + $0x12a] sm:$0xff] %v2330
        %2363 = vst [vmem:[#allocation3 + $0x13a] sm:$0xff] %v2331
        %2364 = vst [vmem:[#allocation3 + $0x142] sm:$0xff] %v2332
        %2365 = vst [vmem:[#allocation3 + $0x152] sm:$0xff] %v2333
        %2366 = vst [vmem:[#allocation3 + $0x15a] sm:$0xff] %v2334
        %2367 = vst [vmem:[#allocation3 + $0x16a] sm:$0xff] %v2335
        %2368 = vst [vmem:[#allocation3 + $0x172] sm:$0xff] %v2336
        %v2369 = vld [vmem:[#allocation3] sm:$0xff]
        %v2370 = vld [vmem:[#allocation3 + $0x8] sm:$0xff]
        %v2371 = vld [vmem:[#allocation3 + $0x18] sm:$0xff]
        %v2372 = vld [vmem:[#allocation3 + $0x20] sm:$0xff]
        %v2373 = vld [vmem:[#allocation3 + $0x30] sm:$0xff]
        %v2374 = vld [vmem:[#allocation3 + $0x38] sm:$0xff]
        %v2375 = vld [vmem:[#allocation3 + $0x48] sm:$0xff]
        %v2376 = vld [vmem:[#allocation3 + $0x50] sm:$0xff]
        %v2377 = vld [vmem:[#allocation3 + $0x60] sm:$0xff]
        %v2378 = vld [vmem:[#allocation3 + $0x68] sm:$0xff]
        %v2379 = vld [vmem:[#allocation3 + $0x78] sm:$0xff]
        %v2380 = vld [vmem:[#allocation3 + $0x80] sm:$0xff]
        %v2381 = vld [vmem:[#allocation3 + $0x90] sm:$0xff]
        %v2382 = vld [vmem:[#allocation3 + $0x98] sm:$0xff]
        %v2383 = vld [vmem:[#allocation3 + $0xa8] sm:$0xff]
        %v2384 = vld [vmem:[#allocation3 + $0xb0] sm:$0xff]
        %v2385 = vld [vmem:[#allocation3 + $0xc0] sm:$0xff]
        %v2386 = vld [vmem:[#allocation3 + $0xc8] sm:$0xff]
        %v2387 = vld [vmem:[#allocation3 + $0xd8] sm:$0xff]
        %v2388 = vld [vmem:[#allocation3 + $0xe0] sm:$0xff]
        %v2389 = vld [vmem:[#allocation3 + $0xf0] sm:$0xff]
        %v2390 = vld [vmem:[#allocation3 + $0xf8] sm:$0xff]
        %v2391 = vld [vmem:[#allocation3 + $0x108] sm:$0xff]
        %v2392 = vld [vmem:[#allocation3 + $0x110] sm:$0xff]
        %v2393 = vld [vmem:[#allocation3 + $0x120] sm:$0xff]
        %v2394 = vld [vmem:[#allocation3 + $0x128] sm:$0xff]
        %v2395 = vld [vmem:[#allocation3 + $0x138] sm:$0xff]
        %v2396 = vld [vmem:[#allocation3 + $0x140] sm:$0xff]
        %v2397 = vld [vmem:[#allocation3 + $0x150] sm:$0xff]
        %v2398 = vld [vmem:[#allocation3 + $0x158] sm:$0xff]
        %v2399 = vld [vmem:[#allocation3 + $0x168] sm:$0xff]
        %v2400 = vld [vmem:[#allocation3 + $0x170] sm:$0xff]
        %v2401 = vld [vmem:[#allocation2] sm:$0xff]
        %v2402 = vld [vmem:[#allocation2 + $0x8] sm:$0xff]
        %v2403 = vld [vmem:[#allocation2 + $0x10] sm:$0xff]
        %v2404 = vld [vmem:[#allocation2 + $0x18] sm:$0xff]
        %v2405 = vld [vmem:[#allocation2 + $0x20] sm:$0xff]
        %v2406 = vld [vmem:[#allocation2 + $0x28] sm:$0xff]
        %v2407 = vld [vmem:[#allocation2 + $0x30] sm:$0xff]
        %v2408 = vld [vmem:[#allocation2 + $0x38] sm:$0xff]
        %v2409 = vld [vmem:[#allocation2 + $0x40] sm:$0xff]
        %v2410 = vld [vmem:[#allocation2 + $0x48] sm:$0xff]
        %v2411 = vld [vmem:[#allocation2 + $0x50] sm:$0xff]
        %v2412 = vld [vmem:[#allocation2 + $0x58] sm:$0xff]
        %v2413 = vld [vmem:[#allocation2 + $0x60] sm:$0xff]
        %v2414 = vld [vmem:[#allocation2 + $0x68] sm:$0xff]
        %v2415 = vld [vmem:[#allocation2 + $0x70] sm:$0xff]
        %v2416 = vld [vmem:[#allocation2 + $0x78] sm:$0xff]
        %v2417 = vld [vmem:[#allocation2 + $0x80] sm:$0xff]
        %v2418 = vld [vmem:[#allocation2 + $0x88] sm:$0xff]
        %v2419 = vld [vmem:[#allocation2 + $0x90] sm:$0xff]
        %v2420 = vld [vmem:[#allocation2 + $0x98] sm:$0xff]
        %v2421 = vld [vmem:[#allocation2 + $0xa0] sm:$0xff]
        %v2422 = vld [vmem:[#allocation2 + $0xa8] sm:$0xff]
        %v2423 = vld [vmem:[#allocation2 + $0xb0] sm:$0xff]
        %v2424 = vld [vmem:[#allocation2 + $0xb8] sm:$0xff]
        %v2425 = vld [vmem:[#allocation2 + $0xc0] sm:$0xff]
        %v2426 = vld [vmem:[#allocation2 + $0xc8] sm:$0xff]
        %v2427 = vld [vmem:[#allocation2 + $0xd0] sm:$0xff]
        %v2428 = vld [vmem:[#allocation2 + $0xd8] sm:$0xff]
        %v2429 = vld [vmem:[#allocation2 + $0xe0] sm:$0xff]
        %v2430 = vld [vmem:[#allocation2 + $0xe8] sm:$0xff]
        %v2431 = vld [vmem:[#allocation2 + $0xf0] sm:$0xff]
        %v2432 = vld [vmem:[#allocation2 + $0xf8] sm:$0xff]
        %s2433 = scalar_lea.vmem [#allocation7], 256
        %v2434 = vld [vmem:[%s2433] sm:$0xff]
        %v2435 = vld [vmem:[%s2433 + $0x8] sm:$0xff]
        %v2436 = vld [vmem:[%s2433 + $0x10] sm:$0xff]
        %v2437 = vld [vmem:[%s2433 + $0x18] sm:$0xff]
        %v2438 = vld [vmem:[%s2433 + $0x20] sm:$0xff]
        %v2439 = vld [vmem:[%s2433 + $0x28] sm:$0xff]
        %v2440 = vld [vmem:[%s2433 + $0x30] sm:$0xff]
        %v2441 = vld [vmem:[%s2433 + $0x38] sm:$0xff]
        %v2442 = vld [vmem:[%s2433 + $0x40] sm:$0xff]
        %v2443 = vld [vmem:[%s2433 + $0x48] sm:$0xff]
        %v2444 = vld [vmem:[%s2433 + $0x50] sm:$0xff]
        %v2445 = vld [vmem:[%s2433 + $0x58] sm:$0xff]
        %v2446 = vld [vmem:[%s2433 + $0x60] sm:$0xff]
        %v2447 = vld [vmem:[%s2433 + $0x68] sm:$0xff]
        %v2448 = vld [vmem:[%s2433 + $0x70] sm:$0xff]
        %v2449 = vld [vmem:[%s2433 + $0x78] sm:$0xff]
        %v2450 = vld [vmem:[%s500] sm:$0xff]
        %v2451 = vld [vmem:[%s500 + $0x8] sm:$0xff]
        %v2452 = vld [vmem:[%s500 + $0x10] sm:$0xff]
        %v2453 = vld [vmem:[%s500 + $0x18] sm:$0xff]
        %v2454 = vld [vmem:[%s500 + $0x20] sm:$0xff]
        %v2455 = vld [vmem:[%s500 + $0x28] sm:$0xff]
        %v2456 = vld [vmem:[%s500 + $0x30] sm:$0xff]
        %v2457 = vld [vmem:[%s500 + $0x38] sm:$0xff]
        %v2458 = vld [vmem:[%s500 + $0x40] sm:$0xff]
        %v2459 = vld [vmem:[%s500 + $0x48] sm:$0xff]
        %v2460 = vld [vmem:[%s500 + $0x50] sm:$0xff]
        %v2461 = vld [vmem:[%s500 + $0x58] sm:$0xff]
        %v2462 = vld [vmem:[%s500 + $0x60] sm:$0xff]
        %v2463 = vld [vmem:[%s500 + $0x68] sm:$0xff]
        %v2464 = vld [vmem:[%s500 + $0x70] sm:$0xff]
        %v2465 = vld [vmem:[%s500 + $0x78] sm:$0xff]
        %v2466 = vld [vmem:[%s500 + $0x80] sm:$0xff]
        %v2467 = vld [vmem:[%s500 + $0x88] sm:$0xff]
        %v2468 = vld [vmem:[%s500 + $0x90] sm:$0xff]
        %v2469 = vld [vmem:[%s500 + $0x98] sm:$0xff]
        %v2470 = vld [vmem:[%s500 + $0xa0] sm:$0xff]
        %v2471 = vld [vmem:[%s500 + $0xa8] sm:$0xff]
        %v2472 = vld [vmem:[%s500 + $0xb0] sm:$0xff]
        %v2473 = vld [vmem:[%s500 + $0xb8] sm:$0xff]
        %v2474 = vld [vmem:[%s500 + $0xc0] sm:$0xff]
        %v2475 = vld [vmem:[%s500 + $0xc8] sm:$0xff]
        %v2476 = vld [vmem:[%s500 + $0xd0] sm:$0xff]
        %v2477 = vld [vmem:[%s500 + $0xd8] sm:$0xff]
        %v2478 = vld [vmem:[%s500 + $0xe0] sm:$0xff]
        %v2479 = vld [vmem:[%s500 + $0xe8] sm:$0xff]
        %v2480 = vld [vmem:[%s500 + $0xf0] sm:$0xff]
        %v2481 = vld [vmem:[%s500 + $0xf8] sm:$0xff]
        %s2482 = scalar_lea.vmem [#allocation7], 640
        %v2483 = vld [vmem:[%s2482] sm:$0xff]
        %v2484 = vld [vmem:[%s2482 + $0x8] sm:$0xff]
        %v2485 = vld [vmem:[%s2482 + $0x10] sm:$0xff]
        %v2486 = vld [vmem:[%s2482 + $0x18] sm:$0xff]
        %v2487 = vld [vmem:[%s2482 + $0x20] sm:$0xff]
        %v2488 = vld [vmem:[%s2482 + $0x28] sm:$0xff]
        %v2489 = vld [vmem:[%s2482 + $0x30] sm:$0xff]
        %v2490 = vld [vmem:[%s2482 + $0x38] sm:$0xff]
        %v2491 = vld [vmem:[%s2482 + $0x40] sm:$0xff]
        %v2492 = vld [vmem:[%s2482 + $0x48] sm:$0xff]
        %v2493 = vld [vmem:[%s2482 + $0x50] sm:$0xff]
        %v2494 = vld [vmem:[%s2482 + $0x58] sm:$0xff]
        %v2495 = vld [vmem:[%s2482 + $0x60] sm:$0xff]
        %v2496 = vld [vmem:[%s2482 + $0x68] sm:$0xff]
        %v2497 = vld [vmem:[%s2482 + $0x70] sm:$0xff]
        %v2498 = vld [vmem:[%s2482 + $0x78] sm:$0xff]
        %2499 = vmatprep.subr.mxu0 0.0
        %2500 = vmatpush1.msra.mxu0 %v2483
        %2501 = vmatprep.subr.mxu0 0.0
        %2502 = vmatpush1.msra.mxu0 %v2484
        %2503 = vmatprep.subr.mxu0 0.0
        %2504 = vmatpush1.msra.mxu0 %v2485
        %2505 = vmatprep.subr.mxu0 0.0
        %2506 = vmatpush1.msra.mxu0 %v2486
        %2507 = vmatprep.subr.mxu0 0.0
        %2508 = vmatpush1.msra.mxu0 %v2487
        %2509 = vmatprep.subr.mxu0 0.0
        %2510 = vmatpush1.msra.mxu0 %v2488
        %2511 = vmatprep.subr.mxu0 0.0
        %2512 = vmatpush1.msra.mxu0 %v2489
        %2513 = vmatprep.subr.mxu0 0.0
        %2514 = vmatpush1.msra.mxu0 %v2490
        %2515 = vmatprep.subr.mxu0 0.0
        %2516 = vmatpush1.msra.mxu0 %v2491
        %2517 = vmatprep.subr.mxu0 0.0
        %2518 = vmatpush1.msra.mxu0 %v2492
        %2519 = vmatprep.subr.mxu0 0.0
        %2520 = vmatpush1.msra.mxu0 %v2493
        %2521 = vmatprep.subr.mxu0 0.0
        %2522 = vmatpush1.msra.mxu0 %v2494
        %2523 = vmatprep.subr.mxu0 0.0
        %2524 = vmatpush1.msra.mxu0 %v2495
        %2525 = vmatprep.subr.mxu0 0.0
        %2526 = vmatpush1.msra.mxu0 %v2496
        %2527 = vmatprep.subr.mxu0 0.0
        %2528 = vmatpush1.msra.mxu0 %v2497
        %2529 = vmatprep.subr.mxu0 0.0
        %2530 = vmatpush1.msra.mxu0 %v2498
        %2531 = vmatprep.subr.mxu0 0.0
        %2532 = vmatpush1.msra.mxu0 0.0
        %2533 = vmatprep.subr.mxu0 0.0
        %2534 = vmatpush1.msra.mxu0 0.0
        %2535 = vmatprep.subr.mxu0 0.0
        %2536 = vmatpush1.msra.mxu0 0.0
        %2537 = vmatprep.subr.mxu0 0.0
        %2538 = vmatpush1.msra.mxu0 0.0
        %2539 = vmatprep.subr.mxu0 0.0
        %2540 = vmatpush1.msra.mxu0 0.0
        %2541 = vmatprep.subr.mxu0 0.0
        %2542 = vmatpush1.msra.mxu0 0.0
        %2543 = vmatprep.subr.mxu0 0.0
        %2544 = vmatpush1.msra.mxu0 0.0
        %2545 = vmatprep.subr.mxu0 0.0
        %2546 = vmatpush1.msra.mxu0 0.0
        %2547 = vmatprep.subr.mxu0 0.0
        %2548 = vmatpush1.msra.mxu0 0.0
        %2549 = vmatprep.subr.mxu0 0.0
        %2550 = vmatpush1.msra.mxu0 0.0
        %2551 = vmatprep.subr.mxu0 0.0
        %2552 = vmatpush1.msra.mxu0 0.0
        %2553 = vmatprep.subr.mxu0 0.0
        %2554 = vmatpush1.msra.mxu0 0.0
        %2555 = vmatprep.subr.mxu0 0.0
        %2556 = vmatpush1.msra.mxu0 0.0
        %2557 = vmatprep.subr.mxu0 0.0
        %2558 = vmatpush1.msra.mxu0 0.0
        %2559 = vmatprep.subr.mxu0 0.0
        %2560 = vmatpush1.msra.mxu0 0.0
        %2561 = vmatprep.subr.mxu0 0.0
        %2562 = vmatpush1.msra.mxu0 0.0
        %2563 = vmatprep.mubr.f32.mxu0 0.0
        %2564 = vmatmul.mubr.f32.gmra.mrb[0].mxu0 %v2450
        %v2565 = vpop.f32.mrb[0].mxu0
        %v2566 = vadd.f32 0.0, %v2565
        %v2567 = vpop.f32.mrb[0].mxu0
        %2568 = vmatprep.mubr.f32.mxu0 0.0
        %2569 = vmatmul.mubr.f32.gmra.mrb[0].mxu0 %v2451
        %v2570 = vpop.f32.mrb[0].mxu0
        %v2571 = vadd.f32 0.0, %v2570
        %v2572 = vpop.f32.mrb[0].mxu0
        %2573 = vmatprep.mubr.f32.mxu0 0.0
        %2574 = vmatmul.mubr.f32.gmra.mrb[0].mxu0 %v2452
        %v2575 = vpop.f32.mrb[0].mxu0
        %v2576 = vadd.f32 0.0, %v2575
        %v2577 = vpop.f32.mrb[0].mxu0
        %2578 = vmatprep.mubr.f32.mxu0 0.0
        %2579 = vmatmul.mubr.f32.gmra.mrb[0].mxu0 %v2453
        %v2580 = vpop.f32.mrb[0].mxu0
        %v2581 = vadd.f32 0.0, %v2580
        %v2582 = vpop.f32.mrb[0].mxu0
        %2583 = vmatprep.mubr.f32.mxu0 0.0
        %2584 = vmatmul.mubr.f32.gmra.mrb[0].mxu0 %v2454
        %v2585 = vpop.f32.mrb[0].mxu0
        %v2586 = vadd.f32 0.0, %v2585
        %v2587 = vpop.f32.mrb[0].mxu0
        %2588 = vmatprep.mubr.f32.mxu0 0.0
        %2589 = vmatmul.mubr.f32.gmra.mrb[0].mxu0 %v2455
        %v2590 = vpop.f32.mrb[0].mxu0
        %v2591 = vadd.f32 0.0, %v2590
        %v2592 = vpop.f32.mrb[0].mxu0
        %2593 = vmatprep.mubr.f32.mxu0 0.0
        %2594 = vmatmul.mubr.f32.gmra.mrb[0].mxu0 %v2456
        %v2595 = vpop.f32.mrb[0].mxu0
        %v2596 = vadd.f32 0.0, %v2595
        %v2597 = vpop.f32.mrb[0].mxu0
        %2598 = vmatprep.mubr.f32.mxu0 0.0
        %2599 = vmatmul.mubr.f32.gmra.mrb[0].mxu0 %v2457
        %v2600 = vpop.f32.mrb[0].mxu0
        %v2601 = vadd.f32 0.0, %v2600
        %v2602 = vpop.f32.mrb[0].mxu0
        %2603 = vmatprep.mubr.f32.mxu0 0.0
        %2604 = vmatmul.mubr.f32.gmra.mrb[0].mxu0 %v2458
        %v2605 = vpop.f32.mrb[0].mxu0
        %v2606 = vadd.f32 0.0, %v2605
        %v2607 = vpop.f32.mrb[0].mxu0
        %2608 = vmatprep.mubr.f32.mxu0 0.0
        %2609 = vmatmul.mubr.f32.gmra.mrb[0].mxu0 %v2459
        %v2610 = vpop.f32.mrb[0].mxu0
        %v2611 = vadd.f32 0.0, %v2610
        %v2612 = vpop.f32.mrb[0].mxu0
        %2613 = vmatprep.mubr.f32.mxu0 0.0
        %2614 = vmatmul.mubr.f32.gmra.mrb[0].mxu0 %v2460
        %v2615 = vpop.f32.mrb[0].mxu0
        %v2616 = vadd.f32 0.0, %v2615
        %v2617 = vpop.f32.mrb[0].mxu0
        %2618 = vmatprep.mubr.f32.mxu0 0.0
        %2619 = vmatmul.mubr.f32.gmra.mrb[0].mxu0 %v2461
        %v2620 = vpop.f32.mrb[0].mxu0
        %v2621 = vadd.f32 0.0, %v2620
        %v2622 = vpop.f32.mrb[0].mxu0
        %2623 = vmatprep.mubr.f32.mxu0 0.0
        %2624 = vmatmul.mubr.f32.gmra.mrb[0].mxu0 %v2462
        %v2625 = vpop.f32.mrb[0].mxu0
        %v2626 = vadd.f32 0.0, %v2625
        %v2627 = vpop.f32.mrb[0].mxu0
        %2628 = vmatprep.mubr.f32.mxu0 0.0
        %2629 = vmatmul.mubr.f32.gmra.mrb[0].mxu0 %v2463
        %v2630 = vpop.f32.mrb[0].mxu0
        %v2631 = vadd.f32 0.0, %v2630
        %v2632 = vpop.f32.mrb[0].mxu0
        %2633 = vmatprep.mubr.f32.mxu0 0.0
        %2634 = vmatmul.mubr.f32.gmra.mrb[0].mxu0 %v2464
        %v2635 = vpop.f32.mrb[0].mxu0
        %v2636 = vadd.f32 0.0, %v2635
        %v2637 = vpop.f32.mrb[0].mxu0
        %2638 = vmatprep.mubr.f32.mxu0 0.0
        %2639 = vmatmul.mubr.f32.gmra.mrb[0].mxu0 %v2465
        %v2640 = vpop.f32.mrb[0].mxu0
        %v2641 = vadd.f32 0.0, %v2640
        %v2642 = vpop.f32.mrb[0].mxu0
        %2643 = vmatprep.mubr.f32.mxu0 0.0
        %2644 = vmatmul.mubr.f32.gmra.mrb[0].mxu0 %v2466
        %v2645 = vpop.f32.mrb[0].mxu0
        %v2646 = vadd.f32 0.0, %v2645
        %v2647 = vpop.f32.mrb[0].mxu0
        %2648 = vmatprep.mubr.f32.mxu0 0.0
        %2649 = vmatmul.mubr.f32.gmra.mrb[0].mxu0 %v2467
        %v2650 = vpop.f32.mrb[0].mxu0
        %v2651 = vadd.f32 0.0, %v2650
        %v2652 = vpop.f32.mrb[0].mxu0
        %2653 = vmatprep.mubr.f32.mxu0 0.0
        %2654 = vmatmul.mubr.f32.gmra.mrb[0].mxu0 %v2468
        %v2655 = vpop.f32.mrb[0].mxu0
        %v2656 = vadd.f32 0.0, %v2655
        %v2657 = vpop.f32.mrb[0].mxu0
        %2658 = vmatprep.mubr.f32.mxu0 0.0
        %2659 = vmatmul.mubr.f32.gmra.mrb[0].mxu0 %v2469
        %v2660 = vpop.f32.mrb[0].mxu0
        %v2661 = vadd.f32 0.0, %v2660
        %v2662 = vpop.f32.mrb[0].mxu0
        %2663 = vmatprep.mubr.f32.mxu0 0.0
        %2664 = vmatmul.mubr.f32.gmra.mrb[0].mxu0 %v2470
        %v2665 = vpop.f32.mrb[0].mxu0
        %v2666 = vadd.f32 0.0, %v2665
        %v2667 = vpop.f32.mrb[0].mxu0
        %2668 = vmatprep.mubr.f32.mxu0 0.0
        %2669 = vmatmul.mubr.f32.gmra.mrb[0].mxu0 %v2471
        %v2670 = vpop.f32.mrb[0].mxu0
        %v2671 = vadd.f32 0.0, %v2670
        %v2672 = vpop.f32.mrb[0].mxu0
        %2673 = vmatprep.mubr.f32.mxu0 0.0
        %2674 = vmatmul.mubr.f32.gmra.mrb[0].mxu0 %v2472
        %v2675 = vpop.f32.mrb[0].mxu0
        %v2676 = vadd.f32 0.0, %v2675
        %v2677 = vpop.f32.mrb[0].mxu0
        %2678 = vmatprep.mubr.f32.mxu0 0.0
        %2679 = vmatmul.mubr.f32.gmra.mrb[0].mxu0 %v2473
        %v2680 = vpop.f32.mrb[0].mxu0
        %v2681 = vadd.f32 0.0, %v2680
        %v2682 = vpop.f32.mrb[0].mxu0
        %2683 = vmatprep.mubr.f32.mxu0 0.0
        %2684 = vmatmul.mubr.f32.gmra.mrb[0].mxu0 %v2474
        %v2685 = vpop.f32.mrb[0].mxu0
        %v2686 = vadd.f32 0.0, %v2685
        %v2687 = vpop.f32.mrb[0].mxu0
        %2688 = vmatprep.mubr.f32.mxu0 0.0
        %2689 = vmatmul.mubr.f32.gmra.mrb[0].mxu0 %v2475
        %v2690 = vpop.f32.mrb[0].mxu0
        %v2691 = vadd.f32 0.0, %v2690
        %v2692 = vpop.f32.mrb[0].mxu0
        %2693 = vmatprep.mubr.f32.mxu0 0.0
        %2694 = vmatmul.mubr.f32.gmra.mrb[0].mxu0 %v2476
        %v2695 = vpop.f32.mrb[0].mxu0
        %v2696 = vadd.f32 0.0, %v2695
        %v2697 = vpop.f32.mrb[0].mxu0
        %2698 = vmatprep.mubr.f32.mxu0 0.0
        %2699 = vmatmul.mubr.f32.gmra.mrb[0].mxu0 %v2477
        %v2700 = vpop.f32.mrb[0].mxu0
        %v2701 = vadd.f32 0.0, %v2700
        %v2702 = vpop.f32.mrb[0].mxu0
        %2703 = vmatprep.mubr.f32.mxu0 0.0
        %2704 = vmatmul.mubr.f32.gmra.mrb[0].mxu0 %v2478
        %v2705 = vpop.f32.mrb[0].mxu0
        %v2706 = vadd.f32 0.0, %v2705
        %v2707 = vpop.f32.mrb[0].mxu0
        %2708 = vmatprep.mubr.f32.mxu0 0.0
        %2709 = vmatmul.mubr.f32.gmra.mrb[0].mxu0 %v2479
        %v2710 = vpop.f32.mrb[0].mxu0
        %v2711 = vadd.f32 0.0, %v2710
        %v2712 = vpop.f32.mrb[0].mxu0
        %2713 = vmatprep.mubr.f32.mxu0 0.0
        %2714 = vmatmul.mubr.f32.gmra.mrb[0].mxu0 %v2480
        %v2715 = vpop.f32.mrb[0].mxu0
        %v2716 = vadd.f32 0.0, %v2715
        %v2717 = vpop.f32.mrb[0].mxu0
        %2718 = vmatprep.mubr.f32.mxu0 0.0
        %2719 = vmatmul.mubr.f32.gmra.mrb[0].mxu0 %v2481
        %v2720 = vpop.f32.mrb[0].mxu0
        %v2721 = vadd.f32 0.0, %v2720
        %v2722 = vpop.f32.mrb[0].mxu0
        %2723 = vdwg.mxu0
        %2724 = vmatprep.subr.mxu0 0.0
        %2725 = vmatpush1.msra.mxu0 %v2434
        %2726 = vmatprep.subr.mxu0 0.0
        %2727 = vmatpush1.msra.mxu0 %v2435
        %2728 = vmatprep.subr.mxu0 0.0
        %2729 = vmatpush1.msra.mxu0 %v2436
        %2730 = vmatprep.subr.mxu0 0.0
        %2731 = vmatpush1.msra.mxu0 %v2437
        %2732 = vmatprep.subr.mxu0 0.0
        %2733 = vmatpush1.msra.mxu0 %v2438
        %2734 = vmatprep.subr.mxu0 0.0
        %2735 = vmatpush1.msra.mxu0 %v2439
        %2736 = vmatprep.subr.mxu0 0.0
        %2737 = vmatpush1.msra.mxu0 %v2440
        %2738 = vmatprep.subr.mxu0 0.0
        %2739 = vmatpush1.msra.mxu0 %v2441
        %2740 = vmatprep.subr.mxu0 0.0
        %2741 = vmatpush1.msra.mxu0 %v2442
        %2742 = vmatprep.subr.mxu0 0.0
        %2743 = vmatpush1.msra.mxu0 %v2443
        %2744 = vmatprep.subr.mxu0 0.0
        %2745 = vmatpush1.msra.mxu0 %v2444
        %2746 = vmatprep.subr.mxu0 0.0
        %2747 = vmatpush1.msra.mxu0 %v2445
        %2748 = vmatprep.subr.mxu0 0.0
        %2749 = vmatpush1.msra.mxu0 %v2446
        %2750 = vmatprep.subr.mxu0 0.0
        %2751 = vmatpush1.msra.mxu0 %v2447
        %2752 = vmatprep.subr.mxu0 0.0
        %2753 = vmatpush1.msra.mxu0 %v2448
        %2754 = vmatprep.subr.mxu0 0.0
        %2755 = vmatpush1.msra.mxu0 %v2449
        %2756 = vmatprep.subr.mxu0 0.0
        %2757 = vmatpush1.msra.mxu0 0.0
        %2758 = vmatprep.subr.mxu0 0.0
        %2759 = vmatpush1.msra.mxu0 0.0
        %2760 = vmatprep.subr.mxu0 0.0
        %2761 = vmatpush1.msra.mxu0 0.0
        %2762 = vmatprep.subr.mxu0 0.0
        %2763 = vmatpush1.msra.mxu0 0.0
        %2764 = vmatprep.subr.mxu0 0.0
        %2765 = vmatpush1.msra.mxu0 0.0
        %2766 = vmatprep.subr.mxu0 0.0
        %2767 = vmatpush1.msra.mxu0 0.0
        %2768 = vmatprep.subr.mxu0 0.0
        %2769 = vmatpush1.msra.mxu0 0.0
        %2770 = vmatprep.subr.mxu0 0.0
        %2771 = vmatpush1.msra.mxu0 0.0
        %2772 = vmatprep.subr.mxu0 0.0
        %2773 = vmatpush1.msra.mxu0 0.0
        %2774 = vmatprep.subr.mxu0 0.0
        %2775 = vmatpush1.msra.mxu0 0.0
        %2776 = vmatprep.subr.mxu0 0.0
        %2777 = vmatpush1.msra.mxu0 0.0
        %2778 = vmatprep.subr.mxu0 0.0
        %2779 = vmatpush1.msra.mxu0 0.0
        %2780 = vmatprep.subr.mxu0 0.0
        %2781 = vmatpush1.msra.mxu0 0.0
        %2782 = vmatprep.subr.mxu0 0.0
        %2783 = vmatpush1.msra.mxu0 0.0
        %2784 = vmatprep.subr.mxu0 0.0
        %2785 = vmatpush1.msra.mxu0 0.0
        %2786 = vmatprep.subr.mxu0 0.0
        %2787 = vmatpush1.msra.mxu0 0.0
        %2788 = vmatprep.mubr.f32.mxu0 0.0
        %2789 = vmatmul.mubr.f32.gmra.mrb[0].mxu0 %v2401
        %v2790 = vpop.f32.mrb[0].mxu0
        %v2791 = vadd.f32 %v2566, %v2790
        %v2792 = vpop.f32.mrb[0].mxu0
        %2793 = vmatprep.mubr.f32.mxu0 0.0
        %2794 = vmatmul.mubr.f32.gmra.mrb[0].mxu0 %v2402
        %v2795 = vpop.f32.mrb[0].mxu0
        %v2796 = vadd.f32 %v2571, %v2795
        %v2797 = vpop.f32.mrb[0].mxu0
        %2798 = vmatprep.mubr.f32.mxu0 0.0
        %2799 = vmatmul.mubr.f32.gmra.mrb[0].mxu0 %v2403
        %v2800 = vpop.f32.mrb[0].mxu0
        %v2801 = vadd.f32 %v2576, %v2800
        %v2802 = vpop.f32.mrb[0].mxu0
        %2803 = vmatprep.mubr.f32.mxu0 0.0
        %2804 = vmatmul.mubr.f32.gmra.mrb[0].mxu0 %v2404
        %v2805 = vpop.f32.mrb[0].mxu0
        %v2806 = vadd.f32 %v2581, %v2805
        %v2807 = vpop.f32.mrb[0].mxu0
        %2808 = vmatprep.mubr.f32.mxu0 0.0
        %2809 = vmatmul.mubr.f32.gmra.mrb[0].mxu0 %v2405
        %v2810 = vpop.f32.mrb[0].mxu0
        %v2811 = vadd.f32 %v2586, %v2810
        %v2812 = vpop.f32.mrb[0].mxu0
        %2813 = vmatprep.mubr.f32.mxu0 0.0
        %2814 = vmatmul.mubr.f32.gmra.mrb[0].mxu0 %v2406
        %v2815 = vpop.f32.mrb[0].mxu0
        %v2816 = vadd.f32 %v2591, %v2815
        %v2817 = vpop.f32.mrb[0].mxu0
        %2818 = vmatprep.mubr.f32.mxu0 0.0
        %2819 = vmatmul.mubr.f32.gmra.mrb[0].mxu0 %v2407
        %v2820 = vpop.f32.mrb[0].mxu0
        %v2821 = vadd.f32 %v2596, %v2820
        %v2822 = vpop.f32.mrb[0].mxu0
        %2823 = vmatprep.mubr.f32.mxu0 0.0
        %2824 = vmatmul.mubr.f32.gmra.mrb[0].mxu0 %v2408
        %v2825 = vpop.f32.mrb[0].mxu0
        %v2826 = vadd.f32 %v2601, %v2825
        %v2827 = vpop.f32.mrb[0].mxu0
        %2828 = vmatprep.mubr.f32.mxu0 0.0
        %2829 = vmatmul.mubr.f32.gmra.mrb[0].mxu0 %v2409
        %v2830 = vpop.f32.mrb[0].mxu0
        %v2831 = vadd.f32 %v2606, %v2830
        %v2832 = vpop.f32.mrb[0].mxu0
        %2833 = vmatprep.mubr.f32.mxu0 0.0
        %2834 = vmatmul.mubr.f32.gmra.mrb[0].mxu0 %v2410
        %v2835 = vpop.f32.mrb[0].mxu0
        %v2836 = vadd.f32 %v2611, %v2835
        %v2837 = vpop.f32.mrb[0].mxu0
        %2838 = vmatprep.mubr.f32.mxu0 0.0
        %2839 = vmatmul.mubr.f32.gmra.mrb[0].mxu0 %v2411
        %v2840 = vpop.f32.mrb[0].mxu0
        %v2841 = vadd.f32 %v2616, %v2840
        %v2842 = vpop.f32.mrb[0].mxu0
        %2843 = vmatprep.mubr.f32.mxu0 0.0
        %2844 = vmatmul.mubr.f32.gmra.mrb[0].mxu0 %v2412
        %v2845 = vpop.f32.mrb[0].mxu0
        %v2846 = vadd.f32 %v2621, %v2845
        %v2847 = vpop.f32.mrb[0].mxu0
        %2848 = vmatprep.mubr.f32.mxu0 0.0
        %2849 = vmatmul.mubr.f32.gmra.mrb[0].mxu0 %v2413
        %v2850 = vpop.f32.mrb[0].mxu0
        %v2851 = vadd.f32 %v2626, %v2850
        %v2852 = vpop.f32.mrb[0].mxu0
        %2853 = vmatprep.mubr.f32.mxu0 0.0
        %2854 = vmatmul.mubr.f32.gmra.mrb[0].mxu0 %v2414
        %v2855 = vpop.f32.mrb[0].mxu0
        %v2856 = vadd.f32 %v2631, %v2855
        %v2857 = vpop.f32.mrb[0].mxu0
        %2858 = vmatprep.mubr.f32.mxu0 0.0
        %2859 = vmatmul.mubr.f32.gmra.mrb[0].mxu0 %v2415
        %v2860 = vpop.f32.mrb[0].mxu0
        %v2861 = vadd.f32 %v2636, %v2860
        %v2862 = vpop.f32.mrb[0].mxu0
        %2863 = vmatprep.mubr.f32.mxu0 0.0
        %2864 = vmatmul.mubr.f32.gmra.mrb[0].mxu0 %v2416
        %v2865 = vpop.f32.mrb[0].mxu0
        %v2866 = vadd.f32 %v2641, %v2865
        %v2867 = vpop.f32.mrb[0].mxu0
        %2868 = vmatprep.mubr.f32.mxu0 0.0
        %2869 = vmatmul.mubr.f32.gmra.mrb[0].mxu0 %v2417
        %v2870 = vpop.f32.mrb[0].mxu0
        %v2871 = vadd.f32 %v2646, %v2870
        %v2872 = vpop.f32.mrb[0].mxu0
        %2873 = vmatprep.mubr.f32.mxu0 0.0
        %2874 = vmatmul.mubr.f32.gmra.mrb[0].mxu0 %v2418
        %v2875 = vpop.f32.mrb[0].mxu0
        %v2876 = vadd.f32 %v2651, %v2875
        %v2877 = vpop.f32.mrb[0].mxu0
        %2878 = vmatprep.mubr.f32.mxu0 0.0
        %2879 = vmatmul.mubr.f32.gmra.mrb[0].mxu0 %v2419
        %v2880 = vpop.f32.mrb[0].mxu0
        %v2881 = vadd.f32 %v2656, %v2880
        %v2882 = vpop.f32.mrb[0].mxu0
        %2883 = vmatprep.mubr.f32.mxu0 0.0
        %2884 = vmatmul.mubr.f32.gmra.mrb[0].mxu0 %v2420
        %v2885 = vpop.f32.mrb[0].mxu0
        %v2886 = vadd.f32 %v2661, %v2885
        %v2887 = vpop.f32.mrb[0].mxu0
        %2888 = vmatprep.mubr.f32.mxu0 0.0
        %2889 = vmatmul.mubr.f32.gmra.mrb[0].mxu0 %v2421
        %v2890 = vpop.f32.mrb[0].mxu0
        %v2891 = vadd.f32 %v2666, %v2890
        %v2892 = vpop.f32.mrb[0].mxu0
        %2893 = vmatprep.mubr.f32.mxu0 0.0
        %2894 = vmatmul.mubr.f32.gmra.mrb[0].mxu0 %v2422
        %v2895 = vpop.f32.mrb[0].mxu0
        %v2896 = vadd.f32 %v2671, %v2895
        %v2897 = vpop.f32.mrb[0].mxu0
        %2898 = vmatprep.mubr.f32.mxu0 0.0
        %2899 = vmatmul.mubr.f32.gmra.mrb[0].mxu0 %v2423
        %v2900 = vpop.f32.mrb[0].mxu0
        %v2901 = vadd.f32 %v2676, %v2900
        %v2902 = vpop.f32.mrb[0].mxu0
        %2903 = vmatprep.mubr.f32.mxu0 0.0
        %2904 = vmatmul.mubr.f32.gmra.mrb[0].mxu0 %v2424
        %v2905 = vpop.f32.mrb[0].mxu0
        %v2906 = vadd.f32 %v2681, %v2905
        %v2907 = vpop.f32.mrb[0].mxu0
        %2908 = vmatprep.mubr.f32.mxu0 0.0
        %2909 = vmatmul.mubr.f32.gmra.mrb[0].mxu0 %v2425
        %v2910 = vpop.f32.mrb[0].mxu0
        %v2911 = vadd.f32 %v2686, %v2910
        %v2912 = vpop.f32.mrb[0].mxu0
        %2913 = vmatprep.mubr.f32.mxu0 0.0
        %2914 = vmatmul.mubr.f32.gmra.mrb[0].mxu0 %v2426
        %v2915 = vpop.f32.mrb[0].mxu0
        %v2916 = vadd.f32 %v2691, %v2915
        %v2917 = vpop.f32.mrb[0].mxu0
        %2918 = vmatprep.mubr.f32.mxu0 0.0
        %2919 = vmatmul.mubr.f32.gmra.mrb[0].mxu0 %v2427
        %v2920 = vpop.f32.mrb[0].mxu0
        %v2921 = vadd.f32 %v2696, %v2920
        %v2922 = vpop.f32.mrb[0].mxu0
        %2923 = vmatprep.mubr.f32.mxu0 0.0
        %2924 = vmatmul.mubr.f32.gmra.mrb[0].mxu0 %v2428
        %v2925 = vpop.f32.mrb[0].mxu0
        %v2926 = vadd.f32 %v2701, %v2925
        %v2927 = vpop.f32.mrb[0].mxu0
        %2928 = vmatprep.mubr.f32.mxu0 0.0
        %2929 = vmatmul.mubr.f32.gmra.mrb[0].mxu0 %v2429
        %v2930 = vpop.f32.mrb[0].mxu0
        %v2931 = vadd.f32 %v2706, %v2930
        %v2932 = vpop.f32.mrb[0].mxu0
        %2933 = vmatprep.mubr.f32.mxu0 0.0
        %2934 = vmatmul.mubr.f32.gmra.mrb[0].mxu0 %v2430
        %v2935 = vpop.f32.mrb[0].mxu0
        %v2936 = vadd.f32 %v2711, %v2935
        %v2937 = vpop.f32.mrb[0].mxu0
        %2938 = vmatprep.mubr.f32.mxu0 0.0
        %2939 = vmatmul.mubr.f32.gmra.mrb[0].mxu0 %v2431
        %v2940 = vpop.f32.mrb[0].mxu0
        %v2941 = vadd.f32 %v2716, %v2940
        %v2942 = vpop.f32.mrb[0].mxu0
        %2943 = vmatprep.mubr.f32.mxu0 0.0
        %2944 = vmatmul.mubr.f32.gmra.mrb[0].mxu0 %v2432
        %v2945 = vpop.f32.mrb[0].mxu0
        %v2946 = vadd.f32 %v2721, %v2945
        %v2947 = vpop.f32.mrb[0].mxu0
        %2948 = vdwg.mxu0
        %v2949 = vld [vmem:[%s1081] sm:$0xff]
        %v2950 = vld [vmem:[%s1081 + $0x8] sm:$0xff]
        %v2951 = vld [vmem:[%s1081 + $0x10] sm:$0xff]
        %v2952 = vld [vmem:[%s1081 + $0x18] sm:$0xff]
        %v2953 = vld [vmem:[%s1081 + $0x20] sm:$0xff]
        %v2954 = vld [vmem:[%s1081 + $0x28] sm:$0xff]
        %v2955 = vld [vmem:[%s1081 + $0x30] sm:$0xff]
        %v2956 = vld [vmem:[%s1081 + $0x38] sm:$0xff]
        %v2957 = vld [vmem:[%s1081 + $0x40] sm:$0xff]
        %v2958 = vld [vmem:[%s1081 + $0x48] sm:$0xff]
        %v2959 = vld [vmem:[%s1081 + $0x50] sm:$0xff]
        %v2960 = vld [vmem:[%s1081 + $0x58] sm:$0xff]
        %v2961 = vld [vmem:[%s1081 + $0x60] sm:$0xff]
        %v2962 = vld [vmem:[%s1081 + $0x68] sm:$0xff]
        %v2963 = vld [vmem:[%s1081 + $0x70] sm:$0xff]
        %v2964 = vld [vmem:[%s1081 + $0x78] sm:$0xff]
        %v2965 = vld [vmem:[%s1081 + $0x80] sm:$0xff]
        %v2966 = vld [vmem:[%s1081 + $0x88] sm:$0xff]
        %v2967 = vld [vmem:[%s1081 + $0x90] sm:$0xff]
        %v2968 = vld [vmem:[%s1081 + $0x98] sm:$0xff]
        %v2969 = vld [vmem:[%s1081 + $0xa0] sm:$0xff]
        %v2970 = vld [vmem:[%s1081 + $0xa8] sm:$0xff]
        %v2971 = vld [vmem:[%s1081 + $0xb0] sm:$0xff]
        %v2972 = vld [vmem:[%s1081 + $0xb8] sm:$0xff]
        %v2973 = vld [vmem:[%s1081 + $0xc0] sm:$0xff]
        %v2974 = vld [vmem:[%s1081 + $0xc8] sm:$0xff]
        %v2975 = vld [vmem:[%s1081 + $0xd0] sm:$0xff]
        %v2976 = vld [vmem:[%s1081 + $0xd8] sm:$0xff]
        %v2977 = vld [vmem:[%s1081 + $0xe0] sm:$0xff]
        %v2978 = vld [vmem:[%s1081 + $0xe8] sm:$0xff]
        %v2979 = vld [vmem:[%s1081 + $0xf0] sm:$0xff]
        %v2980 = vld [vmem:[%s1081 + $0xf8] sm:$0xff]
        %s2981 = scalar_lea.vmem [#allocation7], 1024
        %v2982 = vld [vmem:[%s2981] sm:$0xff]
        %v2983 = vld [vmem:[%s2981 + $0x8] sm:$0xff]
        %v2984 = vld [vmem:[%s2981 + $0x10] sm:$0xff]
        %v2985 = vld [vmem:[%s2981 + $0x18] sm:$0xff]
        %v2986 = vld [vmem:[%s2981 + $0x20] sm:$0xff]
        %v2987 = vld [vmem:[%s2981 + $0x28] sm:$0xff]
        %v2988 = vld [vmem:[%s2981 + $0x30] sm:$0xff]
        %v2989 = vld [vmem:[%s2981 + $0x38] sm:$0xff]
        %v2990 = vld [vmem:[%s2981 + $0x40] sm:$0xff]
        %v2991 = vld [vmem:[%s2981 + $0x48] sm:$0xff]
        %v2992 = vld [vmem:[%s2981 + $0x50] sm:$0xff]
        %v2993 = vld [vmem:[%s2981 + $0x58] sm:$0xff]
        %v2994 = vld [vmem:[%s2981 + $0x60] sm:$0xff]
        %v2995 = vld [vmem:[%s2981 + $0x68] sm:$0xff]
        %v2996 = vld [vmem:[%s2981 + $0x70] sm:$0xff]
        %v2997 = vld [vmem:[%s2981 + $0x78] sm:$0xff]
        %2998 = vmatprep.subr.mxu0 0.0
        %2999 = vmatpush1.msra.mxu0 %v2982
        %3000 = vmatprep.subr.mxu0 0.0
        %3001 = vmatpush1.msra.mxu0 %v2983
        %3002 = vmatprep.subr.mxu0 0.0
        %3003 = vmatpush1.msra.mxu0 %v2984
        %3004 = vmatprep.subr.mxu0 0.0
        %3005 = vmatpush1.msra.mxu0 %v2985
        %3006 = vmatprep.subr.mxu0 0.0
        %3007 = vmatpush1.msra.mxu0 %v2986
        %3008 = vmatprep.subr.mxu0 0.0
        %3009 = vmatpush1.msra.mxu0 %v2987
        %3010 = vmatprep.subr.mxu0 0.0
        %3011 = vmatpush1.msra.mxu0 %v2988
        %3012 = vmatprep.subr.mxu0 0.0
        %3013 = vmatpush1.msra.mxu0 %v2989
        %3014 = vmatprep.subr.mxu0 0.0
        %3015 = vmatpush1.msra.mxu0 %v2990
        %3016 = vmatprep.subr.mxu0 0.0
        %3017 = vmatpush1.msra.mxu0 %v2991
        %3018 = vmatprep.subr.mxu0 0.0
        %3019 = vmatpush1.msra.mxu0 %v2992
        %3020 = vmatprep.subr.mxu0 0.0
        %3021 = vmatpush1.msra.mxu0 %v2993
        %3022 = vmatprep.subr.mxu0 0.0
        %3023 = vmatpush1.msra.mxu0 %v2994
        %3024 = vmatprep.subr.mxu0 0.0
        %3025 = vmatpush1.msra.mxu0 %v2995
        %3026 = vmatprep.subr.mxu0 0.0
        %3027 = vmatpush1.msra.mxu0 %v2996
        %3028 = vmatprep.subr.mxu0 0.0
        %3029 = vmatpush1.msra.mxu0 %v2997
        %3030 = vmatprep.subr.mxu0 0.0
        %3031 = vmatpush1.msra.mxu0 0.0
        %3032 = vmatprep.subr.mxu0 0.0
        %3033 = vmatpush1.msra.mxu0 0.0
        %3034 = vmatprep.subr.mxu0 0.0
        %3035 = vmatpush1.msra.mxu0 0.0
        %3036 = vmatprep.subr.mxu0 0.0
        %3037 = vmatpush1.msra.mxu0 0.0
        %3038 = vmatprep.subr.mxu0 0.0
        %3039 = vmatpush1.msra.mxu0 0.0
        %3040 = vmatprep.subr.mxu0 0.0
        %3041 = vmatpush1.msra.mxu0 0.0
        %3042 = vmatprep.subr.mxu0 0.0
        %3043 = vmatpush1.msra.mxu0 0.0
        %3044 = vmatprep.subr.mxu0 0.0
        %3045 = vmatpush1.msra.mxu0 0.0
        %3046 = vmatprep.subr.mxu0 0.0
        %3047 = vmatpush1.msra.mxu0 0.0
        %3048 = vmatprep.subr.mxu0 0.0
        %3049 = vmatpush1.msra.mxu0 0.0
        %3050 = vmatprep.subr.mxu0 0.0
        %3051 = vmatpush1.msra.mxu0 0.0
        %3052 = vmatprep.subr.mxu0 0.0
        %3053 = vmatpush1.msra.mxu0 0.0
        %3054 = vmatprep.subr.mxu0 0.0
        %3055 = vmatpush1.msra.mxu0 0.0
        %3056 = vmatprep.subr.mxu0 0.0
        %3057 = vmatpush1.msra.mxu0 0.0
        %3058 = vmatprep.subr.mxu0 0.0
        %3059 = vmatpush1.msra.mxu0 0.0
        %3060 = vmatprep.subr.mxu0 0.0
        %3061 = vmatpush1.msra.mxu0 0.0
        %3062 = vmatprep.mubr.f32.mxu0 0.0
        %3063 = vmatmul.mubr.f32.gmra.mrb[0].mxu0 %v2949
        %v3064 = vpop.f32.mrb[0].mxu0
        %v3065 = vadd.f32 0.0, %v3064
        %v3066 = vpop.f32.mrb[0].mxu0
        %3067 = vmatprep.mubr.f32.mxu0 0.0
        %3068 = vmatmul.mubr.f32.gmra.mrb[0].mxu0 %v2950
        %v3069 = vpop.f32.mrb[0].mxu0
        %v3070 = vadd.f32 0.0, %v3069
        %v3071 = vpop.f32.mrb[0].mxu0
        %3072 = vmatprep.mubr.f32.mxu0 0.0
        %3073 = vmatmul.mubr.f32.gmra.mrb[0].mxu0 %v2951
        %v3074 = vpop.f32.mrb[0].mxu0
        %v3075 = vadd.f32 0.0, %v3074
        %v3076 = vpop.f32.mrb[0].mxu0
        %3077 = vmatprep.mubr.f32.mxu0 0.0
        %3078 = vmatmul.mubr.f32.gmra.mrb[0].mxu0 %v2952
        %v3079 = vpop.f32.mrb[0].mxu0
        %v3080 = vadd.f32 0.0, %v3079
        %v3081 = vpop.f32.mrb[0].mxu0
        %3082 = vmatprep.mubr.f32.mxu0 0.0
        %3083 = vmatmul.mubr.f32.gmra.mrb[0].mxu0 %v2953
        %v3084 = vpop.f32.mrb[0].mxu0
        %v3085 = vadd.f32 0.0, %v3084
        %v3086 = vpop.f32.mrb[0].mxu0
        %3087 = vmatprep.mubr.f32.mxu0 0.0
        %3088 = vmatmul.mubr.f32.gmra.mrb[0].mxu0 %v2954
        %v3089 = vpop.f32.mrb[0].mxu0
        %v3090 = vadd.f32 0.0, %v3089
        %v3091 = vpop.f32.mrb[0].mxu0
        %3092 = vmatprep.mubr.f32.mxu0 0.0
        %3093 = vmatmul.mubr.f32.gmra.mrb[0].mxu0 %v2955
        %v3094 = vpop.f32.mrb[0].mxu0
        %v3095 = vadd.f32 0.0, %v3094
        %v3096 = vpop.f32.mrb[0].mxu0
        %3097 = vmatprep.mubr.f32.mxu0 0.0
        %3098 = vmatmul.mubr.f32.gmra.mrb[0].mxu0 %v2956
        %v3099 = vpop.f32.mrb[0].mxu0
        %v3100 = vadd.f32 0.0, %v3099
        %v3101 = vpop.f32.mrb[0].mxu0
        %3102 = vmatprep.mubr.f32.mxu0 0.0
        %3103 = vmatmul.mubr.f32.gmra.mrb[0].mxu0 %v2957
        %v3104 = vpop.f32.mrb[0].mxu0
        %v3105 = vadd.f32 0.0, %v3104
        %v3106 = vpop.f32.mrb[0].mxu0
        %3107 = vmatprep.mubr.f32.mxu0 0.0
        %3108 = vmatmul.mubr.f32.gmra.mrb[0].mxu0 %v2958
        %v3109 = vpop.f32.mrb[0].mxu0
        %v3110 = vadd.f32 0.0, %v3109
        %v3111 = vpop.f32.mrb[0].mxu0
        %3112 = vmatprep.mubr.f32.mxu0 0.0
        %3113 = vmatmul.mubr.f32.gmra.mrb[0].mxu0 %v2959
        %v3114 = vpop.f32.mrb[0].mxu0
        %v3115 = vadd.f32 0.0, %v3114
        %v3116 = vpop.f32.mrb[0].mxu0
        %3117 = vmatprep.mubr.f32.mxu0 0.0
        %3118 = vmatmul.mubr.f32.gmra.mrb[0].mxu0 %v2960
        %v3119 = vpop.f32.mrb[0].mxu0
        %v3120 = vadd.f32 0.0, %v3119
        %v3121 = vpop.f32.mrb[0].mxu0
        %3122 = vmatprep.mubr.f32.mxu0 0.0
        %3123 = vmatmul.mubr.f32.gmra.mrb[0].mxu0 %v2961
        %v3124 = vpop.f32.mrb[0].mxu0
        %v3125 = vadd.f32 0.0, %v3124
        %v3126 = vpop.f32.mrb[0].mxu0
        %3127 = vmatprep.mubr.f32.mxu0 0.0
        %3128 = vmatmul.mubr.f32.gmra.mrb[0].mxu0 %v2962
        %v3129 = vpop.f32.mrb[0].mxu0
        %v3130 = vadd.f32 0.0, %v3129
        %v3131 = vpop.f32.mrb[0].mxu0
        %3132 = vmatprep.mubr.f32.mxu0 0.0
        %3133 = vmatmul.mubr.f32.gmra.mrb[0].mxu0 %v2963
        %v3134 = vpop.f32.mrb[0].mxu0
        %v3135 = vadd.f32 0.0, %v3134
        %v3136 = vpop.f32.mrb[0].mxu0
        %3137 = vmatprep.mubr.f32.mxu0 0.0
        %3138 = vmatmul.mubr.f32.gmra.mrb[0].mxu0 %v2964
        %v3139 = vpop.f32.mrb[0].mxu0
        %v3140 = vadd.f32 0.0, %v3139
        %v3141 = vpop.f32.mrb[0].mxu0
        %3142 = vmatprep.mubr.f32.mxu0 0.0
        %3143 = vmatmul.mubr.f32.gmra.mrb[0].mxu0 %v2965
        %v3144 = vpop.f32.mrb[0].mxu0
        %v3145 = vadd.f32 0.0, %v3144
        %v3146 = vpop.f32.mrb[0].mxu0
        %3147 = vmatprep.mubr.f32.mxu0 0.0
        %3148 = vmatmul.mubr.f32.gmra.mrb[0].mxu0 %v2966
        %v3149 = vpop.f32.mrb[0].mxu0
        %v3150 = vadd.f32 0.0, %v3149
        %v3151 = vpop.f32.mrb[0].mxu0
        %3152 = vmatprep.mubr.f32.mxu0 0.0
        %3153 = vmatmul.mubr.f32.gmra.mrb[0].mxu0 %v2967
        %v3154 = vpop.f32.mrb[0].mxu0
        %v3155 = vadd.f32 0.0, %v3154
        %v3156 = vpop.f32.mrb[0].mxu0
        %3157 = vmatprep.mubr.f32.mxu0 0.0
        %3158 = vmatmul.mubr.f32.gmra.mrb[0].mxu0 %v2968
        %v3159 = vpop.f32.mrb[0].mxu0
        %v3160 = vadd.f32 0.0, %v3159
        %v3161 = vpop.f32.mrb[0].mxu0
        %3162 = vmatprep.mubr.f32.mxu0 0.0
        %3163 = vmatmul.mubr.f32.gmra.mrb[0].mxu0 %v2969
        %v3164 = vpop.f32.mrb[0].mxu0
        %v3165 = vadd.f32 0.0, %v3164
        %v3166 = vpop.f32.mrb[0].mxu0
        %3167 = vmatprep.mubr.f32.mxu0 0.0
        %3168 = vmatmul.mubr.f32.gmra.mrb[0].mxu0 %v2970
        %v3169 = vpop.f32.mrb[0].mxu0
        %v3170 = vadd.f32 0.0, %v3169
        %v3171 = vpop.f32.mrb[0].mxu0
        %3172 = vmatprep.mubr.f32.mxu0 0.0
        %3173 = vmatmul.mubr.f32.gmra.mrb[0].mxu0 %v2971
        %v3174 = vpop.f32.mrb[0].mxu0
        %v3175 = vadd.f32 0.0, %v3174
        %v3176 = vpop.f32.mrb[0].mxu0
        %3177 = vmatprep.mubr.f32.mxu0 0.0
        %3178 = vmatmul.mubr.f32.gmra.mrb[0].mxu0 %v2972
        %v3179 = vpop.f32.mrb[0].mxu0
        %v3180 = vadd.f32 0.0, %v3179
        %v3181 = vpop.f32.mrb[0].mxu0
        %3182 = vmatprep.mubr.f32.mxu0 0.0
        %3183 = vmatmul.mubr.f32.gmra.mrb[0].mxu0 %v2973
        %v3184 = vpop.f32.mrb[0].mxu0
        %v3185 = vadd.f32 0.0, %v3184
        %v3186 = vpop.f32.mrb[0].mxu0
        %3187 = vmatprep.mubr.f32.mxu0 0.0
        %3188 = vmatmul.mubr.f32.gmra.mrb[0].mxu0 %v2974
        %v3189 = vpop.f32.mrb[0].mxu0
        %v3190 = vadd.f32 0.0, %v3189
        %v3191 = vpop.f32.mrb[0].mxu0
        %3192 = vmatprep.mubr.f32.mxu0 0.0
        %3193 = vmatmul.mubr.f32.gmra.mrb[0].mxu0 %v2975
        %v3194 = vpop.f32.mrb[0].mxu0
        %v3195 = vadd.f32 0.0, %v3194
        %v3196 = vpop.f32.mrb[0].mxu0
        %3197 = vmatprep.mubr.f32.mxu0 0.0
        %3198 = vmatmul.mubr.f32.gmra.mrb[0].mxu0 %v2976
        %v3199 = vpop.f32.mrb[0].mxu0
        %v3200 = vadd.f32 0.0, %v3199
        %v3201 = vpop.f32.mrb[0].mxu0
        %3202 = vmatprep.mubr.f32.mxu0 0.0
        %3203 = vmatmul.mubr.f32.gmra.mrb[0].mxu0 %v2977
        %v3204 = vpop.f32.mrb[0].mxu0
        %v3205 = vadd.f32 0.0, %v3204
        %v3206 = vpop.f32.mrb[0].mxu0
        %3207 = vmatprep.mubr.f32.mxu0 0.0
        %3208 = vmatmul.mubr.f32.gmra.mrb[0].mxu0 %v2978
        %v3209 = vpop.f32.mrb[0].mxu0
        %v3210 = vadd.f32 0.0, %v3209
        %v3211 = vpop.f32.mrb[0].mxu0
        %3212 = vmatprep.mubr.f32.mxu0 0.0
        %3213 = vmatmul.mubr.f32.gmra.mrb[0].mxu0 %v2979
        %v3214 = vpop.f32.mrb[0].mxu0
        %v3215 = vadd.f32 0.0, %v3214
        %v3216 = vpop.f32.mrb[0].mxu0
        %3217 = vmatprep.mubr.f32.mxu0 0.0
        %3218 = vmatmul.mubr.f32.gmra.mrb[0].mxu0 %v2980
        %v3219 = vpop.f32.mrb[0].mxu0
        %v3220 = vadd.f32 0.0, %v3219
        %v3221 = vpop.f32.mrb[0].mxu0
        %3222 = vdwg.mxu0
        %v3223 = vadd.f32 %v2791, %v3065
        %v3224 = vadd.f32 %v2796, %v3070
        %v3225 = vadd.f32 %v2801, %v3075
        %v3226 = vadd.f32 %v2806, %v3080
        %v3227 = vadd.f32 %v2811, %v3085
        %v3228 = vadd.f32 %v2816, %v3090
        %v3229 = vadd.f32 %v2821, %v3095
        %v3230 = vadd.f32 %v2826, %v3100
        %v3231 = vadd.f32 %v2831, %v3105
        %v3232 = vadd.f32 %v2836, %v3110
        %v3233 = vadd.f32 %v2841, %v3115
        %v3234 = vadd.f32 %v2846, %v3120
        %v3235 = vadd.f32 %v2851, %v3125
        %v3236 = vadd.f32 %v2856, %v3130
        %v3237 = vadd.f32 %v2861, %v3135
        %v3238 = vadd.f32 %v2866, %v3140
        %v3239 = vadd.f32 %v2871, %v3145
        %v3240 = vadd.f32 %v2876, %v3150
        %v3241 = vadd.f32 %v2881, %v3155
        %v3242 = vadd.f32 %v2886, %v3160
        %v3243 = vadd.f32 %v2891, %v3165
        %v3244 = vadd.f32 %v2896, %v3170
        %v3245 = vadd.f32 %v2901, %v3175
        %v3246 = vadd.f32 %v2906, %v3180
        %v3247 = vadd.f32 %v2911, %v3185
        %v3248 = vadd.f32 %v2916, %v3190
        %v3249 = vadd.f32 %v2921, %v3195
        %v3250 = vadd.f32 %v2926, %v3200
        %v3251 = vadd.f32 %v2931, %v3205
        %v3252 = vadd.f32 %v2936, %v3210
        %v3253 = vadd.f32 %v2941, %v3215
        %v3254 = vadd.f32 %v2946, %v3220
        %v3255 = vadd.f32 %v2369, %v3223
        %v3256 = vadd.f32 %v2370, %v3224
        %v3257 = vadd.f32 %v2371, %v3225
        %v3258 = vadd.f32 %v2372, %v3226
        %v3259 = vadd.f32 %v2373, %v3227
        %v3260 = vadd.f32 %v2374, %v3228
        %v3261 = vadd.f32 %v2375, %v3229
        %v3262 = vadd.f32 %v2376, %v3230
        %v3263 = vadd.f32 %v2377, %v3231
        %v3264 = vadd.f32 %v2378, %v3232
        %v3265 = vadd.f32 %v2379, %v3233
        %v3266 = vadd.f32 %v2380, %v3234
        %v3267 = vadd.f32 %v2381, %v3235
        %v3268 = vadd.f32 %v2382, %v3236
        %v3269 = vadd.f32 %v2383, %v3237
        %v3270 = vadd.f32 %v2384, %v3238
        %v3271 = vadd.f32 %v2385, %v3239
        %v3272 = vadd.f32 %v2386, %v3240
        %v3273 = vadd.f32 %v2387, %v3241
        %v3274 = vadd.f32 %v2388, %v3242
        %v3275 = vadd.f32 %v2389, %v3243
        %v3276 = vadd.f32 %v2390, %v3244
        %v3277 = vadd.f32 %v2391, %v3245
        %v3278 = vadd.f32 %v2392, %v3246
        %v3279 = vadd.f32 %v2393, %v3247
        %v3280 = vadd.f32 %v2394, %v3248
        %v3281 = vadd.f32 %v2395, %v3249
        %v3282 = vadd.f32 %v2396, %v3250
        %v3283 = vadd.f32 %v2397, %v3251
        %v3284 = vadd.f32 %v2398, %v3252
        %v3285 = vadd.f32 %v2399, %v3253
        %v3286 = vadd.f32 %v2400, %v3254
        %3287 = vst [vmem:[#allocation3] sm:$0xff] %v3255
        %3288 = vst [vmem:[#allocation3 + $0x8] sm:$0xff] %v3256
        %3289 = vst [vmem:[#allocation3 + $0x18] sm:$0xff] %v3257
        %3290 = vst [vmem:[#allocation3 + $0x20] sm:$0xff] %v3258
        %3291 = vst [vmem:[#allocation3 + $0x30] sm:$0xff] %v3259
        %3292 = vst [vmem:[#allocation3 + $0x38] sm:$0xff] %v3260
        %3293 = vst [vmem:[#allocation3 + $0x48] sm:$0xff] %v3261
        %3294 = vst [vmem:[#allocation3 + $0x50] sm:$0xff] %v3262
        %3295 = vst [vmem:[#allocation3 + $0x60] sm:$0xff] %v3263
        %3296 = vst [vmem:[#allocation3 + $0x68] sm:$0xff] %v3264
        %3297 = vst [vmem:[#allocation3 + $0x78] sm:$0xff] %v3265
        %3298 = vst [vmem:[#allocation3 + $0x80] sm:$0xff] %v3266
        %3299 = vst [vmem:[#allocation3 + $0x90] sm:$0xff] %v3267
        %3300 = vst [vmem:[#allocation3 + $0x98] sm:$0xff] %v3268
        %3301 = vst [vmem:[#allocation3 + $0xa8] sm:$0xff] %v3269
        %3302 = vst [vmem:[#allocation3 + $0xb0] sm:$0xff] %v3270
        %3303 = vst [vmem:[#allocation3 + $0xc0] sm:$0xff] %v3271
        %3304 = vst [vmem:[#allocation3 + $0xc8] sm:$0xff] %v3272
        %3305 = vst [vmem:[#allocation3 + $0xd8] sm:$0xff] %v3273
        %3306 = vst [vmem:[#allocation3 + $0xe0] sm:$0xff] %v3274
        %3307 = vst [vmem:[#allocation3 + $0xf0] sm:$0xff] %v3275
        %3308 = vst [vmem:[#allocation3 + $0xf8] sm:$0xff] %v3276
        %3309 = vst [vmem:[#allocation3 + $0x108] sm:$0xff] %v3277
        %3310 = vst [vmem:[#allocation3 + $0x110] sm:$0xff] %v3278
        %3311 = vst [vmem:[#allocation3 + $0x120] sm:$0xff] %v3279
        %3312 = vst [vmem:[#allocation3 + $0x128] sm:$0xff] %v3280
        %3313 = vst [vmem:[#allocation3 + $0x138] sm:$0xff] %v3281
        %3314 = vst [vmem:[#allocation3 + $0x140] sm:$0xff] %v3282
        %3315 = vst [vmem:[#allocation3 + $0x150] sm:$0xff] %v3283
        %3316 = vst [vmem:[#allocation3 + $0x158] sm:$0xff] %v3284
        %3317 = vst [vmem:[#allocation3 + $0x168] sm:$0xff] %v3285
        %3318 = vst [vmem:[#allocation3 + $0x170] sm:$0xff] %v3286
        %v3319 = vld [vmem:[#allocation3 + $0x1] sm:$0xff]
        %v3320 = vld [vmem:[#allocation3 + $0x9] sm:$0xff]
        %v3321 = vld [vmem:[#allocation3 + $0x19] sm:$0xff]
        %v3322 = vld [vmem:[#allocation3 + $0x21] sm:$0xff]
        %v3323 = vld [vmem:[#allocation3 + $0x31] sm:$0xff]
        %v3324 = vld [vmem:[#allocation3 + $0x39] sm:$0xff]
        %v3325 = vld [vmem:[#allocation3 + $0x49] sm:$0xff]
        %v3326 = vld [vmem:[#allocation3 + $0x51] sm:$0xff]
        %v3327 = vld [vmem:[#allocation3 + $0x61] sm:$0xff]
        %v3328 = vld [vmem:[#allocation3 + $0x69] sm:$0xff]
        %v3329 = vld [vmem:[#allocation3 + $0x79] sm:$0xff]
        %v3330 = vld [vmem:[#allocation3 + $0x81] sm:$0xff]
        %v3331 = vld [vmem:[#allocation3 + $0x91] sm:$0xff]
        %v3332 = vld [vmem:[#allocation3 + $0x99] sm:$0xff]
        %v3333 = vld [vmem:[#allocation3 + $0xa9] sm:$0xff]
        %v3334 = vld [vmem:[#allocation3 + $0xb1] sm:$0xff]
        %v3335 = vld [vmem:[#allocation3 + $0xc1] sm:$0xff]
        %v3336 = vld [vmem:[#allocation3 + $0xc9] sm:$0xff]
        %v3337 = vld [vmem:[#allocation3 + $0xd9] sm:$0xff]
        %v3338 = vld [vmem:[#allocation3 + $0xe1] sm:$0xff]
        %v3339 = vld [vmem:[#allocation3 + $0xf1] sm:$0xff]
        %v3340 = vld [vmem:[#allocation3 + $0xf9] sm:$0xff]
        %v3341 = vld [vmem:[#allocation3 + $0x109] sm:$0xff]
        %v3342 = vld [vmem:[#allocation3 + $0x111] sm:$0xff]
        %v3343 = vld [vmem:[#allocation3 + $0x121] sm:$0xff]
        %v3344 = vld [vmem:[#allocation3 + $0x129] sm:$0xff]
        %v3345 = vld [vmem:[#allocation3 + $0x139] sm:$0xff]
        %v3346 = vld [vmem:[#allocation3 + $0x141] sm:$0xff]
        %v3347 = vld [vmem:[#allocation3 + $0x151] sm:$0xff]
        %v3348 = vld [vmem:[#allocation3 + $0x159] sm:$0xff]
        %v3349 = vld [vmem:[#allocation3 + $0x169] sm:$0xff]
        %v3350 = vld [vmem:[#allocation3 + $0x171] sm:$0xff]
        %v3351 = vld [vmem:[%s4] sm:$0x1]
        %v3353 = vlaneseq
        %v3354 = vshrl.u32 %v3353, 7
        %v3355 = vsub.s32 0, %v3354
        %v3356 = vrot.slane %v3351, %v3355
        %v3358 = vmul.f32 %v3319, %v3356
        %v3359 = vmul.f32 %v3320, %v3356
        %v3360 = vmul.f32 %v3321, %v3356
        %v3361 = vmul.f32 %v3322, %v3356
        %v3362 = vmul.f32 %v3323, %v3356
        %v3363 = vmul.f32 %v3324, %v3356
        %v3364 = vmul.f32 %v3325, %v3356
        %v3365 = vmul.f32 %v3326, %v3356
        %v3366 = vmul.f32 %v3327, %v3356
        %v3367 = vmul.f32 %v3328, %v3356
        %v3368 = vmul.f32 %v3329, %v3356
        %v3369 = vmul.f32 %v3330, %v3356
        %v3370 = vmul.f32 %v3331, %v3356
        %v3371 = vmul.f32 %v3332, %v3356
        %v3372 = vmul.f32 %v3333, %v3356
        %v3373 = vmul.f32 %v3334, %v3356
        %v3374 = vmul.f32 %v3335, %v3356
        %v3375 = vmul.f32 %v3336, %v3356
        %v3376 = vmul.f32 %v3337, %v3356
        %v3377 = vmul.f32 %v3338, %v3356
        %v3378 = vmul.f32 %v3339, %v3356
        %v3379 = vmul.f32 %v3340, %v3356
        %v3380 = vmul.f32 %v3341, %v3356
        %v3381 = vmul.f32 %v3342, %v3356
        %v3382 = vmul.f32 %v3343, %v3356
        %v3383 = vmul.f32 %v3344, %v3356
        %v3384 = vmul.f32 %v3345, %v3356
        %v3385 = vmul.f32 %v3346, %v3356
        %v3386 = vmul.f32 %v3347, %v3356
        %v3387 = vmul.f32 %v3348, %v3356
        %v3388 = vmul.f32 %v3349, %v3356
        %v3389 = vmul.f32 %v3350, %v3356
        %v3390 = vld [vmem:[%s5] sm:$0x1]
        %v3392 = vlaneseq
        %v3393 = vshrl.u32 %v3392, 7
        %v3394 = vsub.s32 0, %v3393
        %v3395 = vrot.slane %v3390, %v3394
        %v3397 = vadd.f32 %v3358, %v3395
        %v3398 = vadd.f32 %v3359, %v3395
        %v3399 = vadd.f32 %v3360, %v3395
        %v3400 = vadd.f32 %v3361, %v3395
        %v3401 = vadd.f32 %v3362, %v3395
        %v3402 = vadd.f32 %v3363, %v3395
        %v3403 = vadd.f32 %v3364, %v3395
        %v3404 = vadd.f32 %v3365, %v3395
        %v3405 = vadd.f32 %v3366, %v3395
        %v3406 = vadd.f32 %v3367, %v3395
        %v3407 = vadd.f32 %v3368, %v3395
        %v3408 = vadd.f32 %v3369, %v3395
        %v3409 = vadd.f32 %v3370, %v3395
        %v3410 = vadd.f32 %v3371, %v3395
        %v3411 = vadd.f32 %v3372, %v3395
        %v3412 = vadd.f32 %v3373, %v3395
        %v3413 = vadd.f32 %v3374, %v3395
        %v3414 = vadd.f32 %v3375, %v3395
        %v3415 = vadd.f32 %v3376, %v3395
        %v3416 = vadd.f32 %v3377, %v3395
        %v3417 = vadd.f32 %v3378, %v3395
        %v3418 = vadd.f32 %v3379, %v3395
        %v3419 = vadd.f32 %v3380, %v3395
        %v3420 = vadd.f32 %v3381, %v3395
        %v3421 = vadd.f32 %v3382, %v3395
        %v3422 = vadd.f32 %v3383, %v3395
        %v3423 = vadd.f32 %v3384, %v3395
        %v3424 = vadd.f32 %v3385, %v3395
        %v3425 = vadd.f32 %v3386, %v3395
        %v3426 = vadd.f32 %v3387, %v3395
        %v3427 = vadd.f32 %v3388, %v3395
        %v3428 = vadd.f32 %v3389, %v3395
        %v3429 = vmax.f32 %v3397, 0.0
        %v3430 = vmax.f32 %v3398, 0.0
        %v3431 = vmax.f32 %v3399, 0.0
        %v3432 = vmax.f32 %v3400, 0.0
        %v3433 = vmax.f32 %v3401, 0.0
        %v3434 = vmax.f32 %v3402, 0.0
        %v3435 = vmax.f32 %v3403, 0.0
        %v3436 = vmax.f32 %v3404, 0.0
        %v3437 = vmax.f32 %v3405, 0.0
        %v3438 = vmax.f32 %v3406, 0.0
        %v3439 = vmax.f32 %v3407, 0.0
        %v3440 = vmax.f32 %v3408, 0.0
        %v3441 = vmax.f32 %v3409, 0.0
        %v3442 = vmax.f32 %v3410, 0.0
        %v3443 = vmax.f32 %v3411, 0.0
        %v3444 = vmax.f32 %v3412, 0.0
        %v3445 = vmax.f32 %v3413, 0.0
        %v3446 = vmax.f32 %v3414, 0.0
        %v3447 = vmax.f32 %v3415, 0.0
        %v3448 = vmax.f32 %v3416, 0.0
        %v3449 = vmax.f32 %v3417, 0.0
        %v3450 = vmax.f32 %v3418, 0.0
        %v3451 = vmax.f32 %v3419, 0.0
        %v3452 = vmax.f32 %v3420, 0.0
        %v3453 = vmax.f32 %v3421, 0.0
        %v3454 = vmax.f32 %v3422, 0.0
        %v3455 = vmax.f32 %v3423, 0.0
        %v3456 = vmax.f32 %v3424, 0.0
        %v3457 = vmax.f32 %v3425, 0.0
        %v3458 = vmax.f32 %v3426, 0.0
        %v3459 = vmax.f32 %v3427, 0.0
        %v3460 = vmax.f32 %v3428, 0.0
        %v3461 = vld [vmem:[#allocation9] sm:$0xff]
        %v3462 = vld [vmem:[#allocation9 + $0x8] sm:$0xff]
        %v3463 = vld [vmem:[#allocation9 + $0x10] sm:$0xff]
        %v3464 = vld [vmem:[#allocation9 + $0x18] sm:$0xff]
        %v3465 = vld [vmem:[#allocation9 + $0x20] sm:$0xff]
        %v3466 = vld [vmem:[#allocation9 + $0x28] sm:$0xff]
        %v3467 = vld [vmem:[#allocation9 + $0x30] sm:$0xff]
        %v3468 = vld [vmem:[#allocation9 + $0x38] sm:$0xff]
        %v3469 = vld [vmem:[#allocation9 + $0x40] sm:$0xff]
        %v3470 = vld [vmem:[#allocation9 + $0x48] sm:$0xff]
        %v3471 = vld [vmem:[#allocation9 + $0x50] sm:$0xff]
        %v3472 = vld [vmem:[#allocation9 + $0x58] sm:$0xff]
        %v3473 = vld [vmem:[#allocation9 + $0x60] sm:$0xff]
        %v3474 = vld [vmem:[#allocation9 + $0x68] sm:$0xff]
        %v3475 = vld [vmem:[#allocation9 + $0x70] sm:$0xff]
        %v3476 = vld [vmem:[#allocation9 + $0x78] sm:$0xff]
        %v3477 = vld [vmem:[%s7] sm:$0x1]
        %v3479 = vlaneseq
        %v3480 = vshrl.u32 %v3479, 7
        %v3481 = vsub.s32 0, %v3480
        %v3482 = vrot.slane %v3477, %v3481
        %3484 = vmatprep.subr.mxu0 0.0
        %3485 = vmatpush1.msra.mxu0 %v3461
        %3486 = vmatprep.subr.mxu0 0.0
        %3487 = vmatpush1.msra.mxu0 %v3462
        %3488 = vmatprep.subr.mxu0 0.0
        %3489 = vmatpush1.msra.mxu0 %v3463
        %3490 = vmatprep.subr.mxu0 0.0
        %3491 = vmatpush1.msra.mxu0 %v3464
        %3492 = vmatprep.subr.mxu0 0.0
        %3493 = vmatpush1.msra.mxu0 %v3465
        %3494 = vmatprep.subr.mxu0 0.0
        %3495 = vmatpush1.msra.mxu0 %v3466
        %3496 = vmatprep.subr.mxu0 0.0
        %3497 = vmatpush1.msra.mxu0 %v3467
        %3498 = vmatprep.subr.mxu0 0.0
        %3499 = vmatpush1.msra.mxu0 %v3468
        %3500 = vmatprep.subr.mxu0 0.0
        %3501 = vmatpush1.msra.mxu0 %v3469
        %3502 = vmatprep.subr.mxu0 0.0
        %3503 = vmatpush1.msra.mxu0 %v3470
        %3504 = vmatprep.subr.mxu0 0.0
        %3505 = vmatpush1.msra.mxu0 %v3471
        %3506 = vmatprep.subr.mxu0 0.0
        %3507 = vmatpush1.msra.mxu0 %v3472
        %3508 = vmatprep.subr.mxu0 0.0
        %3509 = vmatpush1.msra.mxu0 %v3473
        %3510 = vmatprep.subr.mxu0 0.0
        %3511 = vmatpush1.msra.mxu0 %v3474
        %3512 = vmatprep.subr.mxu0 0.0
        %3513 = vmatpush1.msra.mxu0 %v3475
        %3514 = vmatprep.subr.mxu0 0.0
        %3515 = vmatpush1.msra.mxu0 %v3476
        %3516 = vmatprep.subr.mxu0 0.0
        %3517 = vmatpush1.msra.mxu0 0.0
        %3518 = vmatprep.subr.mxu0 0.0
        %3519 = vmatpush1.msra.mxu0 0.0
        %3520 = vmatprep.subr.mxu0 0.0
        %3521 = vmatpush1.msra.mxu0 0.0
        %3522 = vmatprep.subr.mxu0 0.0
        %3523 = vmatpush1.msra.mxu0 0.0
        %3524 = vmatprep.subr.mxu0 0.0
        %3525 = vmatpush1.msra.mxu0 0.0
        %3526 = vmatprep.subr.mxu0 0.0
        %3527 = vmatpush1.msra.mxu0 0.0
        %3528 = vmatprep.subr.mxu0 0.0
        %3529 = vmatpush1.msra.mxu0 0.0
        %3530 = vmatprep.subr.mxu0 0.0
        %3531 = vmatpush1.msra.mxu0 0.0
        %3532 = vmatprep.subr.mxu0 0.0
        %3533 = vmatpush1.msra.mxu0 0.0
        %3534 = vmatprep.subr.mxu0 0.0
        %3535 = vmatpush1.msra.mxu0 0.0
        %3536 = vmatprep.subr.mxu0 0.0
        %3537 = vmatpush1.msra.mxu0 0.0
        %3538 = vmatprep.subr.mxu0 0.0
        %3539 = vmatpush1.msra.mxu0 0.0
        %3540 = vmatprep.subr.mxu0 0.0
        %3541 = vmatpush1.msra.mxu0 0.0
        %3542 = vmatprep.subr.mxu0 0.0
        %3543 = vmatpush1.msra.mxu0 0.0
        %3544 = vmatprep.subr.mxu0 0.0
        %3545 = vmatpush1.msra.mxu0 0.0
        %3546 = vmatprep.subr.mxu0 0.0
        %3547 = vmatpush1.msra.mxu0 0.0
        %3548 = vmatprep.mubr.f32.mxu0 0.0
        %3549 = vmatmul.mubr.f32.gmra.mrb[0].mxu0 %v3429
        %v3550 = vpop.f32.mrb[0].mxu0
        %v3551 = vadd.f32 %v3482, %v3550
        %v3552 = vpop.f32.mrb[0].mxu0
        %3553 = vmatprep.mubr.f32.mxu0 0.0
        %3554 = vmatmul.mubr.f32.gmra.mrb[0].mxu0 %v3430
        %v3555 = vpop.f32.mrb[0].mxu0
        %v3556 = vadd.f32 %v3482, %v3555
        %v3557 = vpop.f32.mrb[0].mxu0
        %3558 = vmatprep.mubr.f32.mxu0 0.0
        %3559 = vmatmul.mubr.f32.gmra.mrb[0].mxu0 %v3431
        %v3560 = vpop.f32.mrb[0].mxu0
        %v3561 = vadd.f32 %v3482, %v3560
        %v3562 = vpop.f32.mrb[0].mxu0
        %3563 = vmatprep.mubr.f32.mxu0 0.0
        %3564 = vmatmul.mubr.f32.gmra.mrb[0].mxu0 %v3432
        %v3565 = vpop.f32.mrb[0].mxu0
        %v3566 = vadd.f32 %v3482, %v3565
        %v3567 = vpop.f32.mrb[0].mxu0
        %3568 = vmatprep.mubr.f32.mxu0 0.0
        %3569 = vmatmul.mubr.f32.gmra.mrb[0].mxu0 %v3433
        %v3570 = vpop.f32.mrb[0].mxu0
        %v3571 = vadd.f32 %v3482, %v3570
        %v3572 = vpop.f32.mrb[0].mxu0
        %3573 = vmatprep.mubr.f32.mxu0 0.0
        %3574 = vmatmul.mubr.f32.gmra.mrb[0].mxu0 %v3434
        %v3575 = vpop.f32.mrb[0].mxu0
        %v3576 = vadd.f32 %v3482, %v3575
        %v3577 = vpop.f32.mrb[0].mxu0
        %3578 = vmatprep.mubr.f32.mxu0 0.0
        %3579 = vmatmul.mubr.f32.gmra.mrb[0].mxu0 %v3435
        %v3580 = vpop.f32.mrb[0].mxu0
        %v3581 = vadd.f32 %v3482, %v3580
        %v3582 = vpop.f32.mrb[0].mxu0
        %3583 = vmatprep.mubr.f32.mxu0 0.0
        %3584 = vmatmul.mubr.f32.gmra.mrb[0].mxu0 %v3436
        %v3585 = vpop.f32.mrb[0].mxu0
        %v3586 = vadd.f32 %v3482, %v3585
        %v3587 = vpop.f32.mrb[0].mxu0
        %3588 = vmatprep.mubr.f32.mxu0 0.0
        %3589 = vmatmul.mubr.f32.gmra.mrb[0].mxu0 %v3437
        %v3590 = vpop.f32.mrb[0].mxu0
        %v3591 = vadd.f32 %v3482, %v3590
        %v3592 = vpop.f32.mrb[0].mxu0
        %3593 = vmatprep.mubr.f32.mxu0 0.0
        %3594 = vmatmul.mubr.f32.gmra.mrb[0].mxu0 %v3438
        %v3595 = vpop.f32.mrb[0].mxu0
        %v3596 = vadd.f32 %v3482, %v3595
        %v3597 = vpop.f32.mrb[0].mxu0
        %3598 = vmatprep.mubr.f32.mxu0 0.0
        %3599 = vmatmul.mubr.f32.gmra.mrb[0].mxu0 %v3439
        %v3600 = vpop.f32.mrb[0].mxu0
        %v3601 = vadd.f32 %v3482, %v3600
        %v3602 = vpop.f32.mrb[0].mxu0
        %3603 = vmatprep.mubr.f32.mxu0 0.0
        %3604 = vmatmul.mubr.f32.gmra.mrb[0].mxu0 %v3440
        %v3605 = vpop.f32.mrb[0].mxu0
        %v3606 = vadd.f32 %v3482, %v3605
        %v3607 = vpop.f32.mrb[0].mxu0
        %3608 = vmatprep.mubr.f32.mxu0 0.0
        %3609 = vmatmul.mubr.f32.gmra.mrb[0].mxu0 %v3441
        %v3610 = vpop.f32.mrb[0].mxu0
        %v3611 = vadd.f32 %v3482, %v3610
        %v3612 = vpop.f32.mrb[0].mxu0
        %3613 = vmatprep.mubr.f32.mxu0 0.0
        %3614 = vmatmul.mubr.f32.gmra.mrb[0].mxu0 %v3442
        %v3615 = vpop.f32.mrb[0].mxu0
        %v3616 = vadd.f32 %v3482, %v3615
        %v3617 = vpop.f32.mrb[0].mxu0
        %3618 = vmatprep.mubr.f32.mxu0 0.0
        %3619 = vmatmul.mubr.f32.gmra.mrb[0].mxu0 %v3443
        %v3620 = vpop.f32.mrb[0].mxu0
        %v3621 = vadd.f32 %v3482, %v3620
        %v3622 = vpop.f32.mrb[0].mxu0
        %3623 = vmatprep.mubr.f32.mxu0 0.0
        %3624 = vmatmul.mubr.f32.gmra.mrb[0].mxu0 %v3444
        %v3625 = vpop.f32.mrb[0].mxu0
        %v3626 = vadd.f32 %v3482, %v3625
        %v3627 = vpop.f32.mrb[0].mxu0
        %3628 = vmatprep.mubr.f32.mxu0 0.0
        %3629 = vmatmul.mubr.f32.gmra.mrb[0].mxu0 %v3445
        %v3630 = vpop.f32.mrb[0].mxu0
        %v3631 = vadd.f32 %v3482, %v3630
        %v3632 = vpop.f32.mrb[0].mxu0
        %3633 = vmatprep.mubr.f32.mxu0 0.0
        %3634 = vmatmul.mubr.f32.gmra.mrb[0].mxu0 %v3446
        %v3635 = vpop.f32.mrb[0].mxu0
        %v3636 = vadd.f32 %v3482, %v3635
        %v3637 = vpop.f32.mrb[0].mxu0
        %3638 = vmatprep.mubr.f32.mxu0 0.0
        %3639 = vmatmul.mubr.f32.gmra.mrb[0].mxu0 %v3447
        %v3640 = vpop.f32.mrb[0].mxu0
        %v3641 = vadd.f32 %v3482, %v3640
        %v3642 = vpop.f32.mrb[0].mxu0
        %3643 = vmatprep.mubr.f32.mxu0 0.0
        %3644 = vmatmul.mubr.f32.gmra.mrb[0].mxu0 %v3448
        %v3645 = vpop.f32.mrb[0].mxu0
        %v3646 = vadd.f32 %v3482, %v3645
        %v3647 = vpop.f32.mrb[0].mxu0
        %3648 = vmatprep.mubr.f32.mxu0 0.0
        %3649 = vmatmul.mubr.f32.gmra.mrb[0].mxu0 %v3449
        %v3650 = vpop.f32.mrb[0].mxu0
        %v3651 = vadd.f32 %v3482, %v3650
        %v3652 = vpop.f32.mrb[0].mxu0
        %3653 = vmatprep.mubr.f32.mxu0 0.0
        %3654 = vmatmul.mubr.f32.gmra.mrb[0].mxu0 %v3450
        %v3655 = vpop.f32.mrb[0].mxu0
        %v3656 = vadd.f32 %v3482, %v3655
        %v3657 = vpop.f32.mrb[0].mxu0
        %3658 = vmatprep.mubr.f32.mxu0 0.0
        %3659 = vmatmul.mubr.f32.gmra.mrb[0].mxu0 %v3451
        %v3660 = vpop.f32.mrb[0].mxu0
        %v3661 = vadd.f32 %v3482, %v3660
        %v3662 = vpop.f32.mrb[0].mxu0
        %3663 = vmatprep.mubr.f32.mxu0 0.0
        %3664 = vmatmul.mubr.f32.gmra.mrb[0].mxu0 %v3452
        %v3665 = vpop.f32.mrb[0].mxu0
        %v3666 = vadd.f32 %v3482, %v3665
        %v3667 = vpop.f32.mrb[0].mxu0
        %3668 = vmatprep.mubr.f32.mxu0 0.0
        %3669 = vmatmul.mubr.f32.gmra.mrb[0].mxu0 %v3453
        %v3670 = vpop.f32.mrb[0].mxu0
        %v3671 = vadd.f32 %v3482, %v3670
        %v3672 = vpop.f32.mrb[0].mxu0
        %3673 = vmatprep.mubr.f32.mxu0 0.0
        %3674 = vmatmul.mubr.f32.gmra.mrb[0].mxu0 %v3454
        %v3675 = vpop.f32.mrb[0].mxu0
        %v3676 = vadd.f32 %v3482, %v3675
        %v3677 = vpop.f32.mrb[0].mxu0
        %3678 = vmatprep.mubr.f32.mxu0 0.0
        %3679 = vmatmul.mubr.f32.gmra.mrb[0].mxu0 %v3455
        %v3680 = vpop.f32.mrb[0].mxu0
        %v3681 = vadd.f32 %v3482, %v3680
        %v3682 = vpop.f32.mrb[0].mxu0
        %3683 = vmatprep.mubr.f32.mxu0 0.0
        %3684 = vmatmul.mubr.f32.gmra.mrb[0].mxu0 %v3456
        %v3685 = vpop.f32.mrb[0].mxu0
        %v3686 = vadd.f32 %v3482, %v3685
        %v3687 = vpop.f32.mrb[0].mxu0
        %3688 = vmatprep.mubr.f32.mxu0 0.0
        %3689 = vmatmul.mubr.f32.gmra.mrb[0].mxu0 %v3457
        %v3690 = vpop.f32.mrb[0].mxu0
        %v3691 = vadd.f32 %v3482, %v3690
        %v3692 = vpop.f32.mrb[0].mxu0
        %3693 = vmatprep.mubr.f32.mxu0 0.0
        %3694 = vmatmul.mubr.f32.gmra.mrb[0].mxu0 %v3458
        %v3695 = vpop.f32.mrb[0].mxu0
        %v3696 = vadd.f32 %v3482, %v3695
        %v3697 = vpop.f32.mrb[0].mxu0
        %3698 = vmatprep.mubr.f32.mxu0 0.0
        %3699 = vmatmul.mubr.f32.gmra.mrb[0].mxu0 %v3459
        %v3700 = vpop.f32.mrb[0].mxu0
        %v3701 = vadd.f32 %v3482, %v3700
        %v3702 = vpop.f32.mrb[0].mxu0
        %3703 = vmatprep.mubr.f32.mxu0 0.0
        %3704 = vmatmul.mubr.f32.gmra.mrb[0].mxu0 %v3460
        %v3705 = vpop.f32.mrb[0].mxu0
        %v3706 = vadd.f32 %v3482, %v3705
        %v3707 = vpop.f32.mrb[0].mxu0
        %3708 = vdwg.mxu0
        %v3709 = vadd.f32 %v3551, %v353
        %v3710 = vadd.f32 %v3556, %v354
        %v3711 = vadd.f32 %v3561, %v355
        %v3712 = vadd.f32 %v3566, %v356
        %v3713 = vadd.f32 %v3571, %v357
        %v3714 = vadd.f32 %v3576, %v358
        %v3715 = vadd.f32 %v3581, %v359
        %v3716 = vadd.f32 %v3586, %v360
        %v3717 = vadd.f32 %v3591, %v361
        %v3718 = vadd.f32 %v3596, %v362
        %v3719 = vadd.f32 %v3601, %v363
        %v3720 = vadd.f32 %v3606, %v364
        %v3721 = vadd.f32 %v3611, %v365
        %v3722 = vadd.f32 %v3616, %v366
        %v3723 = vadd.f32 %v3621, %v367
        %v3724 = vadd.f32 %v3626, %v368
        %v3725 = vadd.f32 %v3631, %v369
        %v3726 = vadd.f32 %v3636, %v370
        %v3727 = vadd.f32 %v3641, %v371
        %v3728 = vadd.f32 %v3646, %v372
        %v3729 = vadd.f32 %v3651, %v373
        %v3730 = vadd.f32 %v3656, %v374
        %v3731 = vadd.f32 %v3661, %v375
        %v3732 = vadd.f32 %v3666, %v376
        %v3733 = vadd.f32 %v3671, %v377
        %v3734 = vadd.f32 %v3676, %v378
        %v3735 = vadd.f32 %v3681, %v379
        %v3736 = vadd.f32 %v3686, %v380
        %v3737 = vadd.f32 %v3691, %v381
        %v3738 = vadd.f32 %v3696, %v382
        %v3739 = vadd.f32 %v3701, %v383
        %v3740 = vadd.f32 %v3706, %v384
        %3741 = vst [vmem:[%s352] sm:$0xff] %v3709
        %3742 = vst [vmem:[%s352 + $0x8] sm:$0xff] %v3710
        %3743 = vst [vmem:[%s352 + $0x10] sm:$0xff] %v3711
        %3744 = vst [vmem:[%s352 + $0x18] sm:$0xff] %v3712
        %3745 = vst [vmem:[%s352 + $0x20] sm:$0xff] %v3713
        %3746 = vst [vmem:[%s352 + $0x28] sm:$0xff] %v3714
        %3747 = vst [vmem:[%s352 + $0x30] sm:$0xff] %v3715
        %3748 = vst [vmem:[%s352 + $0x38] sm:$0xff] %v3716
        %3749 = vst [vmem:[%s352 + $0x40] sm:$0xff] %v3717
        %3750 = vst [vmem:[%s352 + $0x48] sm:$0xff] %v3718
        %3751 = vst [vmem:[%s352 + $0x50] sm:$0xff] %v3719
        %3752 = vst [vmem:[%s352 + $0x58] sm:$0xff] %v3720
        %3753 = vst [vmem:[%s352 + $0x60] sm:$0xff] %v3721
        %3754 = vst [vmem:[%s352 + $0x68] sm:$0xff] %v3722
        %3755 = vst [vmem:[%s352 + $0x70] sm:$0xff] %v3723
        %3756 = vst [vmem:[%s352 + $0x78] sm:$0xff] %v3724
        %3757 = vst [vmem:[%s352 + $0x80] sm:$0xff] %v3725
        %3758 = vst [vmem:[%s352 + $0x88] sm:$0xff] %v3726
        %3759 = vst [vmem:[%s352 + $0x90] sm:$0xff] %v3727
        %3760 = vst [vmem:[%s352 + $0x98] sm:$0xff] %v3728
        %3761 = vst [vmem:[%s352 + $0xa0] sm:$0xff] %v3729
        %3762 = vst [vmem:[%s352 + $0xa8] sm:$0xff] %v3730
        %3763 = vst [vmem:[%s352 + $0xb0] sm:$0xff] %v3731
        %3764 = vst [vmem:[%s352 + $0xb8] sm:$0xff] %v3732
        %3765 = vst [vmem:[%s352 + $0xc0] sm:$0xff] %v3733
        %3766 = vst [vmem:[%s352 + $0xc8] sm:$0xff] %v3734
        %3767 = vst [vmem:[%s352 + $0xd0] sm:$0xff] %v3735
        %3768 = vst [vmem:[%s352 + $0xd8] sm:$0xff] %v3736
        %3769 = vst [vmem:[%s352 + $0xe0] sm:$0xff] %v3737
        %3770 = vst [vmem:[%s352 + $0xe8] sm:$0xff] %v3738
        %3771 = vst [vmem:[%s352 + $0xf0] sm:$0xff] %v3739
        %3772 = vst [vmem:[%s352 + $0xf8] sm:$0xff] %v3740
        %s3773 = sand.u32 %s207, 1
        %s3774 = scalar_lea.sflag [#allocation6], %s3773
        %s3775 = sand.u32 %s207, 1
        %s3776 = smul.addr %s3775, 256
        %s3777 = scalar_lea.vmem [#allocation10], %s3776
        // Predicated region
        $region65: #{tpu_custom_call.1} parent=51 // pred_check
          %p3778 = pneg %p217
        $region66: #{tpu_custom_call.1} parent=51 // pred_check_branch
          %3780 = sbr.rel (%p3778) target = $region68
        $region67: #{tpu_custom_call.1} parent=51 // pred_region
          %s3782 = ssub.s32 4096, 4096
          %3783 = vsyncadd %s3774, %s3782
          %s3784 = smul.addr %s26, 32
          %s3785 = smul.addr %s3784, 128
          %s3786 = scalar_lea.hbm %s8, %s3785
          %s3787 = sshll.u32 %s3777, 4
          %s3788 = int_to_ptr.vmem [resolvable:$true] %s3787
          %3793 = dma.vmem_to_hbm [thread:$0]  %s3788, 4096, %s3786, %s3774, 128, 128, 8
        $region68: #{tpu_custom_call.1} parent=51 // pred_fallthru
          _
      $region52: #{tpu_custom_call.1} parent=5 // pred_fallthru
        _
      %p3794 = scmp.le.s32.totalorder 2, %s21
      // Predicated region
      $region69: #{tpu_custom_call.1} parent=5 // pred_check
        %p3795 = pneg %p3794
      $region70: #{tpu_custom_call.1} parent=5 // pred_check_branch
        %3797 = sbr.rel (%p3795) target = $region72
      $region71: #{tpu_custom_call.1} parent=5 // pred_region
        %s3798 = ssub.s32 %s21, 2
        // Predicated region
        $region73: #{tpu_custom_call.1} parent=71 // pred_check
          %p3799 = pneg %p223
        $region74: #{tpu_custom_call.1} parent=71 // pred_check_branch
          %3801 = sbr.rel (%p3799) target = $region76
        $region75: #{tpu_custom_call.1} parent=71 // pred_region
          %s3802 = sand.u32 %s208, 1
          %s3803 = scalar_lea.sflag [#allocation6], %s3802
          %s3804 = sand.u32 %s208, 1
          %s3805 = smul.addr %s3804, 256
          %s3806 = scalar_lea.vmem [#allocation10], %s3805
          %3807 = dma.done %s3803, 4096
        $region76: #{tpu_custom_call.1} parent=71 // pred_fallthru
          _
      $region72: #{tpu_custom_call.1} parent=5 // pred_fallthru
        _
    $region6: #{tpu_custom_call.1} parent=1 // loop_footer
      %s25 = sadd.s32 1, %s21
    $region7: #{tpu_custom_call.1} parent=1 // loop_footer_branch
      %20 = sbr.rel target = $region3
    $region8: #{tpu_custom_call.1} parent=1 // loop_exit
      _
    %3808 = vsyncpa [#allocation5], 1
    %s3809 = scalar_lea.sflag [#allocation5], 1
    %3810 = vsyncpa %s3809, 1
    %3811 = vsyncpa [#allocation8], 1
    %3812 = vsyncpa [#allocation6], 1
    %s3813 = scalar_lea.sflag [#allocation6], 1
    %3814 = vsyncpa %s3813, 1

</llo_original>
